<compile_context>
chip_gen: v6e
topology: v6e:2x2x1
jax: 0.10.0
libtpu: 0.0.40
codegen_flags: <defaults>
</compile_context>

<pallas_src>
import jax
import jax.numpy as jnp
from jax.experimental import pallas as pl
from jax.experimental.pallas import tpu as pltpu

NUM_CLASSES = 5
NUM_FEATURES = 1920          # densenet201 classifier.in_features
HID1, HID2 = 512, 256
CLS_PAD = 128                # pad class dim to a full lane width (dense stores)
BT = 32                      # samples per grid step (32 is VMEM-safe on v7x;
                             # 64 is also fine on v5e/v6e for large batches)
VMEM_LIMIT_BYTES = 48 * 1024 * 1024


def _make_head_kernel(bt: int, hw: int):
    inv_hw = 1.0 / float(hw)

    def head_kernel(s_ref, x_ref, w1_ref, b1_ref, w2_ref, b2_ref, w3_ref,
                    b3_ref, o_ref):
        # s_ref: (bt, bt*hw)   bf16 block-diagonal ones pooling matrix
        # x_ref: (bt*hw, C)    channels-last pre-pool feature rows (bf16/f32)
        # o_ref: (bt, CLS_PAD) f32 logits (class dim padded to a lane width)

        # Backbone tail: ReLU (native dtype) then global average pool on the
        # MXU (f32 accumulation) -- no per-sample loop, no scratch round-trip.
        # NOTE(v5e): ReLU stays in the input dtype; on v5e this costs a
        # convert per vreg but the kernel is HBM-bound there anyway.
        relu_x = jnp.maximum(x_ref[...], 0).astype(jnp.bfloat16)      # (bt*hw, C)
        pooled = jnp.dot(s_ref[...], relu_x,
                         preferred_element_type=jnp.float32)          # (bt, C) f32
        f = (pooled * inv_hw).astype(jnp.bfloat16)                    # (bt, C)

        # fc head (dropout == identity in eval mode); bf16 inputs, f32 accum.
        h = jnp.dot(f, w1_ref[...],
                    preferred_element_type=jnp.float32) + b1_ref[...]
        h = jnp.maximum(h, 0.0)
        h = jnp.dot(h.astype(jnp.bfloat16), w2_ref[...],
                    preferred_element_type=jnp.float32) + b2_ref[...]
        h = jnp.maximum(h, 0.0)
        o_ref[...] = jnp.dot(h.astype(jnp.bfloat16), w3_ref[...],
                             preferred_element_type=jnp.float32) + b3_ref[...]

    return head_kernel


def _pool_matrix(bt: int, hw: int):
    """Block-diagonal ones matrix S: S[b, k] = 1 iff k // hw == b."""
    rows = jnp.arange(bt, dtype=jnp.int32)[:, None]
    cols = jnp.arange(bt * hw, dtype=jnp.int32)[None, :]
    return (rows == (cols // hw)).astype(jnp.bfloat16)


def _head_call(x2d, params, *, bt: int, hw: int, grid_n: int):
    """Run the ReLU->pool->MLP head over `grid_n` tiles of `bt` samples.

    x2d is the (rows, 1920) channels-last feature slab; only the first
    grid_n * bt * hw rows are read.
    """
    w1, b1, w2, b2, w3, b3 = params
    pool_mat = _pool_matrix(bt, hw)
    C = NUM_FEATURES

    return pl.pallas_call(
        _make_head_kernel(bt, hw),
        out_shape=jax.ShapeDtypeStruct((grid_n * bt, CLS_PAD), jnp.float32),
        grid_spec=pltpu.PrefetchScalarGridSpec(
            num_scalar_prefetch=0,
            grid=(grid_n,),
            in_specs=[
                pl.BlockSpec((bt, bt * hw), lambda i: (0, 0)),    # pooling S
                pl.BlockSpec((bt * hw, C), lambda i: (i, 0)),     # feature rows
                pl.BlockSpec((C, HID1), lambda i: (0, 0)),
                pl.BlockSpec((1, HID1), lambda i: (0, 0)),
                pl.BlockSpec((HID1, HID2), lambda i: (0, 0)),
                pl.BlockSpec((1, HID2), lambda i: (0, 0)),
                pl.BlockSpec((HID2, CLS_PAD), lambda i: (0, 0)),
                pl.BlockSpec((1, CLS_PAD), lambda i: (0, 0)),
            ],
            out_specs=pl.BlockSpec((bt, CLS_PAD), lambda i: (i, 0)),
        ),
        compiler_params=pltpu.CompilerParams(
            dimension_semantics=("parallel",),
            vmem_limit_bytes=VMEM_LIMIT_BYTES,
        ),
    )(pool_mat, x2d, w1, b1, w2, b2, w3, b3)


def my_model_forward(feat_nhwc, params, *, bt: int = BT):
    """feat_nhwc: [B, H, W, 1920] channels-last pre-pool feature map (bf16/f32)."""
    B, H, W, C = feat_nhwc.shape
    assert C == NUM_FEATURES
    assert bt % 8 == 0
    hw = H * W

    # Free row-major reshape: (B, H, W, C) -> (B*H*W, C). No dtype cast here;
    # the backbone is assumed to hand over bf16 (f32 also works, cast in-kernel).
    x2d = feat_nhwc.reshape(B * hw, C)

    b_full = (B // bt) * bt
    rem = B - b_full

    outs = []
    if b_full > 0:
        # Main path: full BT-sample tiles, read straight out of x2d (no pad).
        outs.append(_head_call(x2d, params, bt=bt, hw=hw, grid_n=b_full // bt))
    if rem > 0:
        # Remainder path: only the last `rem` samples are sliced (tiny copy;
        # identity when b_full == 0), single-step call with a full-array block.
        x_rem = x2d if b_full == 0 else x2d[b_full * hw:]
        outs.append(_head_call(x_rem, params, bt=rem, hw=hw, grid_n=1))

    out = outs[0] if len(outs) == 1 else jnp.concatenate(outs, axis=0)
    return out[:, :NUM_CLASSES]


def init_params(key):
    """Deterministic init mimicking PyTorch nn.Linear default U[-1/sqrt(in), 1/sqrt(in)].

    Weights are stored in bf16 (MXU-native), biases in f32.
    """
    ks = jax.random.split(key, 6)

    def lin(kw, kb, fan_in, fan_out, out_pad=None):
        bound = 1.0 / jnp.sqrt(fan_in)
        w = jax.random.uniform(kw, (fan_in, fan_out), jnp.float32, -bound, bound)
        b = jax.random.uniform(kb, (1, fan_out), jnp.float32, -bound, bound)
        if out_pad is not None and out_pad > fan_out:
            w = jnp.pad(w, ((0, 0), (0, out_pad - fan_out)))
            b = jnp.pad(b, ((0, 0), (0, out_pad - fan_out)))
        return w.astype(jnp.bfloat16), b

    w1, b1 = lin(ks[0], ks[1], NUM_FEATURES, HID1)
    w2, b2 = lin(ks[2], ks[3], HID1, HID2)
    w3, b3 = lin(ks[4], ks[5], HID2, NUM_CLASSES, out_pad=CLS_PAD)
    return (w1, b1, w2, b2, w3, b3)


def reference_forward(feat_nhwc, params):
    """Plain-JAX reference mirroring the kernel's bf16 matmul / f32 accumulation."""
    w1, b1, w2, b2, w3, b3 = params
    x = feat_nhwc.astype(jnp.float32)
    f = jnp.mean(jnp.maximum(x, 0.0), axis=(1, 2))            # (B, C) f32 pool
    f = f.astype(jnp.bfloat16)
    h = jnp.maximum(
        jnp.dot(f, w1, preferred_element_type=jnp.float32) + b1, 0.0)
    h = jnp.maximum(
        jnp.dot(h.astype(jnp.bfloat16), w2, preferred_element_type=jnp.float32) + b2, 0.0)
    out = jnp.dot(h.astype(jnp.bfloat16), w3,
                  preferred_element_type=jnp.float32) + b3
    return out[:, :NUM_CLASSES]


if __name__ == "__main__":
    key = jax.random.PRNGKey(0)
    k1, k2, kp = jax.random.split(key, 3)
    params = init_params(kp)

    # Case 1: tiny batch (B < BT) -> remainder-only path.
    B1, H1, W1 = 2, 4, 4
    feat1 = jax.random.normal(
        k1, (B1, H1, W1, NUM_FEATURES), jnp.float32).astype(jnp.bfloat16)
    out1 = jax.block_until_ready(my_model_forward(feat1, params))
    ref1 = reference_forward(feat1, params)
    assert out1.shape == (B1, NUM_CLASSES)
    assert jnp.allclose(out1, ref1, atol=2e-3, rtol=2e-3), "mismatch (case 1)"

    # Case 2: exercises the BT-tiled main path (grid of 2) plus an 8-row remainder.
    B2, H2, W2 = 72, 2, 2
    feat2 = jax.random.normal(
        k2, (B2, H2, W2, NUM_FEATURES), jnp.float32).astype(jnp.bfloat16)
    out2 = jax.block_until_ready(my_model_forward(feat2, params))
    ref2 = reference_forward(feat2, params)
    assert out2.shape == (B2, NUM_CLASSES)
    assert jnp.allclose(out2, ref2, atol=2e-3, rtol=2e-3), "mismatch (case 2)"

    print("KERNEL_OK")
</pallas_src>

<mosaic_0001>
module attributes {stable_mosaic.version = 11 : i64} {
  func.func @head_kernel(%arg0: i32, %arg1: memref<2x32xbf16, #tpu.memory_space<vmem>>, %arg2: memref<32x1920xbf16, #tpu.memory_space<vmem>>, %arg3: memref<1920x512xbf16, #tpu.memory_space<vmem>>, %arg4: memref<1x512xf32, #tpu.memory_space<vmem>>, %arg5: memref<512x256xbf16, #tpu.memory_space<vmem>>, %arg6: memref<1x256xf32, #tpu.memory_space<vmem>>, %arg7: memref<256x128xbf16, #tpu.memory_space<vmem>>, %arg8: memref<1x128xf32, #tpu.memory_space<vmem>>, %arg9: memref<2x128xf32, #tpu.memory_space<vmem>>) attributes {dimension_semantics = [#tpu.dimension_semantics<parallel>], iteration_bounds = array<i64: 1>, scalar_prefetch = 0 : i64, scratch_operands = 0 : i64, tpu.core_type = #tpu.core_type<tc>, window_params = [{pipeline_mode = #tpu.pipeline_mode<synchronous>, transform_indices = @transform_0, window_bounds = array<i64: 2, 32>}, {transform_indices = @transform_1, window_bounds = array<i64: 32, 1920>}, {pipeline_mode = #tpu.pipeline_mode<synchronous>, transform_indices = @transform_2, window_bounds = array<i64: 1920, 512>}, {pipeline_mode = #tpu.pipeline_mode<synchronous>, transform_indices = @transform_3, window_bounds = array<i64: 1, 512>}, {pipeline_mode = #tpu.pipeline_mode<synchronous>, transform_indices = @transform_4, window_bounds = array<i64: 512, 256>}, {pipeline_mode = #tpu.pipeline_mode<synchronous>, transform_indices = @transform_5, window_bounds = array<i64: 1, 256>}, {pipeline_mode = #tpu.pipeline_mode<synchronous>, transform_indices = @transform_6, window_bounds = array<i64: 256, 128>}, {pipeline_mode = #tpu.pipeline_mode<synchronous>, transform_indices = @transform_7, window_bounds = array<i64: 1, 128>}, {transform_indices = @transform_8, window_bounds = array<i64: 2, 128>}]} {
    %c0 = arith.constant 0 : index
    %c0_0 = arith.constant 0 : index
    %0 = vector.load %arg2[%c0, %c0_0] : memref<32x1920xbf16, #tpu.memory_space<vmem>>, vector<32x1920xbf16>
    %cst = arith.constant 0.000000e+00 : bf16
    %1 = vector.broadcast %cst : bf16 to vector<32x1920xbf16>
    %2 = arith.maximumf %0, %1 : vector<32x1920xbf16>
    %c0_1 = arith.constant 0 : index
    %c0_2 = arith.constant 0 : index
    %3 = vector.load %arg1[%c0_1, %c0_2] : memref<2x32xbf16, #tpu.memory_space<vmem>>, vector<2x32xbf16>
    %cst_3 = arith.constant dense<0.000000e+00> : vector<2x1920xf32>
    %4 = tpu.matmul %3, %2, %cst_3 {dimension_numbers = #tpu.dot_dimension_numbers<[1], [0], [0], [1], [0, 0, 1, 1], [], []>} : vector<2x32xbf16>, vector<32x1920xbf16>, vector<2x1920xf32> -> vector<2x1920xf32>
    %cst_4 = arith.constant 6.250000e-02 : f32
    %5 = vector.broadcast %cst_4 : f32 to vector<2x1920xf32>
    %6 = arith.mulf %4, %5 : vector<2x1920xf32>
    %7 = arith.truncf %6 : vector<2x1920xf32> to vector<2x1920xbf16>
    %c0_5 = arith.constant 0 : index
    %c0_6 = arith.constant 0 : index
    %8 = vector.load %arg3[%c0_5, %c0_6] : memref<1920x512xbf16, #tpu.memory_space<vmem>>, vector<1920x512xbf16>
    %cst_7 = arith.constant dense<0.000000e+00> : vector<2x512xf32>
    %9 = tpu.matmul %7, %8, %cst_7 {dimension_numbers = #tpu.dot_dimension_numbers<[1], [0], [0], [1], [0, 0, 1, 1], [], []>} : vector<2x1920xbf16>, vector<1920x512xbf16>, vector<2x512xf32> -> vector<2x512xf32>
    %c0_8 = arith.constant 0 : index
    %c0_9 = arith.constant 0 : index
    %10 = vector.load %arg4[%c0_8, %c0_9] : memref<1x512xf32, #tpu.memory_space<vmem>>, vector<1x512xf32>
    %11 = vector.broadcast %10 : vector<1x512xf32> to vector<2x512xf32>
    %12 = arith.addf %9, %11 : vector<2x512xf32>
    %cst_10 = arith.constant 0.000000e+00 : f32
    %13 = vector.broadcast %cst_10 : f32 to vector<2x512xf32>
    %14 = arith.maximumf %12, %13 : vector<2x512xf32>
    %15 = arith.truncf %14 : vector<2x512xf32> to vector<2x512xbf16>
    %c0_11 = arith.constant 0 : index
    %c0_12 = arith.constant 0 : index
    %16 = vector.load %arg5[%c0_11, %c0_12] : memref<512x256xbf16, #tpu.memory_space<vmem>>, vector<512x256xbf16>
    %cst_13 = arith.constant dense<0.000000e+00> : vector<2x256xf32>
    %17 = tpu.matmul %15, %16, %cst_13 {dimension_numbers = #tpu.dot_dimension_numbers<[1], [0], [0], [1], [0, 0, 1, 1], [], []>} : vector<2x512xbf16>, vector<512x256xbf16>, vector<2x256xf32> -> vector<2x256xf32>
    %c0_14 = arith.constant 0 : index
    %c0_15 = arith.constant 0 : index
    %18 = vector.load %arg6[%c0_14, %c0_15] : memref<1x256xf32, #tpu.memory_space<vmem>>, vector<1x256xf32>
    %19 = vector.broadcast %18 : vector<1x256xf32> to vector<2x256xf32>
    %20 = arith.addf %17, %19 : vector<2x256xf32>
    %cst_16 = arith.constant 0.000000e+00 : f32
    %21 = vector.broadcast %cst_16 : f32 to vector<2x256xf32>
    %22 = arith.maximumf %20, %21 : vector<2x256xf32>
    %23 = arith.truncf %22 : vector<2x256xf32> to vector<2x256xbf16>
    %c0_17 = arith.constant 0 : index
    %c0_18 = arith.constant 0 : index
    %24 = vector.load %arg7[%c0_17, %c0_18] : memref<256x128xbf16, #tpu.memory_space<vmem>>, vector<256x128xbf16>
    %cst_19 = arith.constant dense<0.000000e+00> : vector<2x128xf32>
    %25 = tpu.matmul %23, %24, %cst_19 {dimension_numbers = #tpu.dot_dimension_numbers<[1], [0], [0], [1], [0, 0, 1, 1], [], []>} : vector<2x256xbf16>, vector<256x128xbf16>, vector<2x128xf32> -> vector<2x128xf32>
    %c0_20 = arith.constant 0 : index
    %c0_21 = arith.constant 0 : index
    %26 = vector.load %arg8[%c0_20, %c0_21] : memref<1x128xf32, #tpu.memory_space<vmem>>, vector<1x128xf32>
    %27 = vector.broadcast %26 : vector<1x128xf32> to vector<2x128xf32>
    %28 = arith.addf %25, %27 : vector<2x128xf32>
    %c0_22 = arith.constant 0 : index
    %c0_23 = arith.constant 0 : index
    %29 = vector.load %arg9[%c0_22, %c0_23] : memref<2x128xf32, #tpu.memory_space<vmem>>, vector<2x128xf32>
    tpu.vector_store %arg9[%c0_22, %c0_23], %28 {strides = array<i32>} : memref<2x128xf32, #tpu.memory_space<vmem>>, vector<2x128xf32>,
    return
  }
  func.func @transform_0(%arg0: i32) -> (i32, i32) {
    %c0_i32 = arith.constant 0 : i32
    %c0_i32_0 = arith.constant 0 : i32
    %c0_i32_1 = arith.constant 0 : i32
    return %c0_i32, %c0_i32_0 : i32, i32
  }
  func.func @transform_1(%arg0: i32) -> (i32, i32) {
    %c0_i32 = arith.constant 0 : i32
    %c0_i32_0 = arith.constant 0 : i32
    return %arg0, %c0_i32 : i32, i32
  }
  func.func @transform_2(%arg0: i32) -> (i32, i32) {
    %c0_i32 = arith.constant 0 : i32
    %c0_i32_0 = arith.constant 0 : i32
    %c0_i32_1 = arith.constant 0 : i32
    return %c0_i32, %c0_i32_0 : i32, i32
  }
  func.func @transform_3(%arg0: i32) -> (i32, i32) {
    %c0_i32 = arith.constant 0 : i32
    %c0_i32_0 = arith.constant 0 : i32
    %c0_i32_1 = arith.constant 0 : i32
    return %c0_i32, %c0_i32_0 : i32, i32
  }
  func.func @transform_4(%arg0: i32) -> (i32, i32) {
    %c0_i32 = arith.constant 0 : i32
    %c0_i32_0 = arith.constant 0 : i32
    %c0_i32_1 = arith.constant 0 : i32
    return %c0_i32, %c0_i32_0 : i32, i32
  }
  func.func @transform_5(%arg0: i32) -> (i32, i32) {
    %c0_i32 = arith.constant 0 : i32
    %c0_i32_0 = arith.constant 0 : i32
    %c0_i32_1 = arith.constant 0 : i32
    return %c0_i32, %c0_i32_0 : i32, i32
  }
  func.func @transform_6(%arg0: i32) -> (i32, i32) {
    %c0_i32 = arith.constant 0 : i32
    %c0_i32_0 = arith.constant 0 : i32
    %c0_i32_1 = arith.constant 0 : i32
    return %c0_i32, %c0_i32_0 : i32, i32
  }
  func.func @transform_7(%arg0: i32) -> (i32, i32) {
    %c0_i32 = arith.constant 0 : i32
    %c0_i32_0 = arith.constant 0 : i32
    %c0_i32_1 = arith.constant 0 : i32
    return %c0_i32, %c0_i32_0 : i32, i32
  }
  func.func @transform_8(%arg0: i32) -> (i32, i32) {
    %c0_i32 = arith.constant 0 : i32
    %c0_i32_0 = arith.constant 0 : i32
    return %arg0, %c0_i32 : i32, i32
  }
}

</mosaic_0001>

<llo_original>
// kernel: tpu_custom_call.1
$region0: #{tpu_custom_call.1}
  #allocation0 [shape = 'u32[]', space=smem, size = 0x4, offset = 0x4, fixed_abs, tag = 'smem constant byte address 0x4 - core index']
  #allocation1 [shape = 'u32[144,128]{1,0:T(1,128)}', space=vmem, size = 0x12000, scoped, tag = 'internal scratch']
  %s0 = inlined_call_operand.hbm [shape: bf16[2,32], index: 0, kind: input, shape index: {}]
  %s1 = inlined_call_operand.hbm [shape: bf16[32,1920], index: 1, kind: input, shape index: {}]
  %s2 = inlined_call_operand.hbm [shape: bf16[1920,512], index: 2, kind: input, shape index: {}]
  %s3 = inlined_call_operand.hbm [shape: f32[1,512], index: 3, kind: input, shape index: {}]
  %s4 = inlined_call_operand.hbm [shape: bf16[512,256], index: 4, kind: input, shape index: {}]
  %s5 = inlined_call_operand.hbm [shape: f32[1,256], index: 5, kind: input, shape index: {}]
  %s6 = inlined_call_operand.hbm [shape: bf16[256,128], index: 6, kind: input, shape index: {}]
  %s7 = inlined_call_operand.hbm [shape: f32[1,128], index: 7, kind: input, shape index: {}]
  %s8 = inlined_call_operand.hbm [shape: f32[2,128], index: 8, kind: output, shape index: {}]
  %s9 = sld [smem:[#allocation0]]
  $region74: #{tpu_custom_call.1} parent=0
    _
  %s11 = ssub.s32 1, %s9
  %s12 = scalar_select 0, %s11, %s9
  $region1: #{tpu_custom_call.1} parent=0
    #allocation2 [shape = 'u8[512]{0}', space=vmem, size = 0x400, scoped, tag = 'input window, operand 0, single buffered']
    #allocation3 [shape = 's32[1]{0}', space=sflag, size = 0x4, scoped, tag = 'scoped memory for tpu_custom_call.1']
    #allocation4 [shape = 's32[1]{0}', space=sflag, size = 0x4, scoped, tag = 'scoped memory for tpu_custom_call.1']
    #allocation5 [shape = 'u8[122880]{0}', space=vmem, size = 0x1e000, scoped, tag = 'input window, operand 1, single buffered']
    #allocation6 [shape = 's32[1]{0}', space=sflag, size = 0x4, scoped, tag = 'scoped memory for tpu_custom_call.1']
    #allocation7 [shape = 'u8[1966080]{0}', space=vmem, size = 0x1e0000, scoped, tag = 'input window, operand 2, single buffered']
    #allocation8 [shape = 'u8[2048]{0}', space=vmem, size = 0x800, scoped, tag = 'input window, operand 3, single buffered']
    #allocation9 [shape = 's32[1]{0}', space=sflag, size = 0x4, scoped, tag = 'scoped memory for tpu_custom_call.1']
    #allocation10 [shape = 'u8[262144]{0}', space=vmem, size = 0x40000, scoped, tag = 'input window, operand 4, single buffered']
    #allocation11 [shape = 'u8[1024]{0}', space=vmem, size = 0x400, scoped, tag = 'input window, operand 5, single buffered']
    #allocation12 [shape = 's32[1]{0}', space=sflag, size = 0x4, scoped, tag = 'scoped memory for tpu_custom_call.1']
    #allocation13 [shape = 'u8[65536]{0}', space=vmem, size = 0x10000, scoped, tag = 'input window, operand 6, single buffered']
    #allocation14 [shape = 'u8[512]{0}', space=vmem, size = 0x400, scoped, tag = 'input window, operand 7, single buffered']
    #allocation15 [shape = 's32[1]{0}', space=sflag, size = 0x4, scoped, tag = 'scoped memory for tpu_custom_call.1']
    #allocation16 [shape = 'u8[1024]{0}', space=vmem, size = 0x400, scoped, tag = 'output window, operand 0, single buffered']
    %13 = vsyncpa [#allocation3], 0
    %14 = vsyncpa [#allocation6], 0
    %15 = vsyncpa [#allocation9], 0
    %16 = vsyncpa [#allocation12], 0
    %17 = vsyncpa [#allocation15], 0
    %18 = vsyncpa [#allocation4], 0
    // Predicated region
    $region2: #{tpu_custom_call.1} parent=1 // pred_check
      _
    $region3: #{tpu_custom_call.1} parent=1 // pred_check_branch
      %20 = sbr.rel (0) target = $region5
    $region4: #{tpu_custom_call.1} parent=1 // pred_region
      %s22 = ssub.s32 16, 16
      %23 = vsyncadd [#allocation3], %s22
      %s25 = sshll.u32 [#allocation2], 4
      %s26 = int_to_ptr.vmem [resolvable:$true] %s25
      %28 = dma.hbm_to_vmem [thread:$0]  %s0, 16, %s26, [#allocation3]
    $region5: #{tpu_custom_call.1} parent=1 // pred_fallthru
      _
    // Predicated region
    $region6: #{tpu_custom_call.1} parent=1 // pred_check
      _
    $region7: #{tpu_custom_call.1} parent=1 // pred_check_branch
      %30 = sbr.rel (0) target = $region9
    $region8: #{tpu_custom_call.1} parent=1 // pred_region
      %s32 = ssub.s32 3840, 3840
      %33 = vsyncadd [#allocation6], %s32
      %s34 = sshll.u32 [#allocation5], 4
      %s35 = int_to_ptr.vmem [resolvable:$true] %s34
      %40 = dma.hbm_to_vmem [thread:$0]  %s1, 3840, %s35, [#allocation6], 960, 960, 60
    $region9: #{tpu_custom_call.1} parent=1 // pred_fallthru
      _
    // Predicated region
    $region10: #{tpu_custom_call.1} parent=1 // pred_check
      _
    $region11: #{tpu_custom_call.1} parent=1 // pred_check_branch
      %42 = sbr.rel (0) target = $region13
    $region12: #{tpu_custom_call.1} parent=1 // pred_region
      %s44 = ssub.s32 61440, 61440
      %45 = vsyncadd [#allocation6], %s44
      %s46 = sshll.u32 [#allocation7], 4
      %s47 = int_to_ptr.vmem [resolvable:$true] %s46
      %52 = dma.hbm_to_vmem [thread:$0]  %s2, 61440, %s47, [#allocation6], 256, 256, 16
    $region13: #{tpu_custom_call.1} parent=1 // pred_fallthru
      _
    // Predicated region
    $region14: #{tpu_custom_call.1} parent=1 // pred_check
      _
    $region15: #{tpu_custom_call.1} parent=1 // pred_check_branch
      %54 = sbr.rel (0) target = $region17
    $region16: #{tpu_custom_call.1} parent=1 // pred_region
      %s56 = ssub.s32 64, 64
      %57 = vsyncadd [#allocation9], %s56
      %s59 = sshll.u32 [#allocation8], 4
      %s60 = int_to_ptr.vmem [resolvable:$true] %s59
      %62 = dma.hbm_to_vmem [thread:$0]  %s3, 64, %s60, [#allocation9]
    $region17: #{tpu_custom_call.1} parent=1 // pred_fallthru
      _
    // Predicated region
    $region18: #{tpu_custom_call.1} parent=1 // pred_check
      _
    $region19: #{tpu_custom_call.1} parent=1 // pred_check_branch
      %64 = sbr.rel (0) target = $region21
    $region20: #{tpu_custom_call.1} parent=1 // pred_region
      %s66 = ssub.s32 8192, 8192
      %67 = vsyncadd [#allocation9], %s66
      %s68 = sshll.u32 [#allocation10], 4
      %s69 = int_to_ptr.vmem [resolvable:$true] %s68
      %74 = dma.hbm_to_vmem [thread:$0]  %s4, 8192, %s69, [#allocation9], 128, 128, 8
    $region21: #{tpu_custom_call.1} parent=1 // pred_fallthru
      _
    // Predicated region
    $region22: #{tpu_custom_call.1} parent=1 // pred_check
      _
    $region23: #{tpu_custom_call.1} parent=1 // pred_check_branch
      %76 = sbr.rel (0) target = $region25
    $region24: #{tpu_custom_call.1} parent=1 // pred_region
      %s78 = ssub.s32 32, 32
      %79 = vsyncadd [#allocation12], %s78
      %s81 = sshll.u32 [#allocation11], 4
      %s82 = int_to_ptr.vmem [resolvable:$true] %s81
      %84 = dma.hbm_to_vmem [thread:$0]  %s5, 32, %s82, [#allocation12]
    $region25: #{tpu_custom_call.1} parent=1 // pred_fallthru
      _
    // Predicated region
    $region26: #{tpu_custom_call.1} parent=1 // pred_check
      _
    $region27: #{tpu_custom_call.1} parent=1 // pred_check_branch
      %86 = sbr.rel (0) target = $region29
    $region28: #{tpu_custom_call.1} parent=1 // pred_region
      %s88 = ssub.s32 2048, 2048
      %89 = vsyncadd [#allocation12], %s88
      %s90 = sshll.u32 [#allocation13], 4
      %s91 = int_to_ptr.vmem [resolvable:$true] %s90
      %96 = dma.hbm_to_vmem [thread:$0]  %s6, 2048, %s91, [#allocation12], 64, 64, 4
    $region29: #{tpu_custom_call.1} parent=1 // pred_fallthru
      _
    // Predicated region
    $region30: #{tpu_custom_call.1} parent=1 // pred_check
      _
    $region31: #{tpu_custom_call.1} parent=1 // pred_check_branch
      %98 = sbr.rel (0) target = $region33
    $region32: #{tpu_custom_call.1} parent=1 // pred_region
      %s100 = ssub.s32 16, 16
      %101 = vsyncadd [#allocation15], %s100
      %s103 = sshll.u32 [#allocation14], 4
      %s104 = int_to_ptr.vmem [resolvable:$true] %s103
      %106 = dma.hbm_to_vmem [thread:$0]  %s7, 16, %s104, [#allocation15]
    $region33: #{tpu_custom_call.1} parent=1 // pred_fallthru
      _
    // Predicated region
    $region34: #{tpu_custom_call.1} parent=1 // pred_check
      _
    $region35: #{tpu_custom_call.1} parent=1 // pred_check_branch
      %108 = sbr.rel (0) target = $region37
    $region36: #{tpu_custom_call.1} parent=1 // pred_region
      %109 = dma.done [#allocation3], 16
    $region37: #{tpu_custom_call.1} parent=1 // pred_fallthru
      _
    // Predicated region
    $region38: #{tpu_custom_call.1} parent=1 // pred_check
      _
    $region39: #{tpu_custom_call.1} parent=1 // pred_check_branch
      %111 = sbr.rel (0) target = $region41
    $region40: #{tpu_custom_call.1} parent=1 // pred_region
      %112 = dma.done [#allocation6], 3840
    $region41: #{tpu_custom_call.1} parent=1 // pred_fallthru
      _
    // Predicated region
    $region42: #{tpu_custom_call.1} parent=1 // pred_check
      _
    $region43: #{tpu_custom_call.1} parent=1 // pred_check_branch
      %114 = sbr.rel (0) target = $region45
    $region44: #{tpu_custom_call.1} parent=1 // pred_region
      %115 = dma.done [#allocation6], 61440
    $region45: #{tpu_custom_call.1} parent=1 // pred_fallthru
      _
    // Predicated region
    $region46: #{tpu_custom_call.1} parent=1 // pred_check
      _
    $region47: #{tpu_custom_call.1} parent=1 // pred_check_branch
      %117 = sbr.rel (0) target = $region49
    $region48: #{tpu_custom_call.1} parent=1 // pred_region
      %118 = dma.done [#allocation9], 64
    $region49: #{tpu_custom_call.1} parent=1 // pred_fallthru
      _
    // Predicated region
    $region50: #{tpu_custom_call.1} parent=1 // pred_check
      _
    $region51: #{tpu_custom_call.1} parent=1 // pred_check_branch
      %120 = sbr.rel (0) target = $region53
    $region52: #{tpu_custom_call.1} parent=1 // pred_region
      %121 = dma.done [#allocation9], 8192
    $region53: #{tpu_custom_call.1} parent=1 // pred_fallthru
      _
    // Predicated region
    $region54: #{tpu_custom_call.1} parent=1 // pred_check
      _
    $region55: #{tpu_custom_call.1} parent=1 // pred_check_branch
      %123 = sbr.rel (0) target = $region57
    $region56: #{tpu_custom_call.1} parent=1 // pred_region
      %124 = dma.done [#allocation12], 32
    $region57: #{tpu_custom_call.1} parent=1 // pred_fallthru
      _
    // Predicated region
    $region58: #{tpu_custom_call.1} parent=1 // pred_check
      _
    $region59: #{tpu_custom_call.1} parent=1 // pred_check_branch
      %126 = sbr.rel (0) target = $region61
    $region60: #{tpu_custom_call.1} parent=1 // pred_region
      %127 = dma.done [#allocation12], 2048
    $region61: #{tpu_custom_call.1} parent=1 // pred_fallthru
      _
    // Predicated region
    $region62: #{tpu_custom_call.1} parent=1 // pred_check
      _
    $region63: #{tpu_custom_call.1} parent=1 // pred_check_branch
      %129 = sbr.rel (0) target = $region65
    $region64: #{tpu_custom_call.1} parent=1 // pred_region
      %130 = dma.done [#allocation15], 16
    $region65: #{tpu_custom_call.1} parent=1 // pred_fallthru
      _
    %v132 = vld [vmem:[#allocation5] sm:$0xff]
    %v133 = vld [vmem:[#allocation5 + $0x8] sm:$0xff]
    %v134 = vld [vmem:[#allocation5 + $0x10] sm:$0xff]
    %v135 = vld [vmem:[#allocation5 + $0x18] sm:$0xff]
    %v136 = vld [vmem:[#allocation5 + $0x20] sm:$0xff]
    %v137 = vld [vmem:[#allocation5 + $0x28] sm:$0xff]
    %v138 = vld [vmem:[#allocation5 + $0x30] sm:$0xff]
    %v139 = vld [vmem:[#allocation5 + $0x38] sm:$0xf]
    %v140 = vld [vmem:[#allocation5 + $0x3c] sm:$0xff]
    %v141 = vld [vmem:[#allocation5 + $0x44] sm:$0xff]
    %v142 = vld [vmem:[#allocation5 + $0x4c] sm:$0xff]
    %v143 = vld [vmem:[#allocation5 + $0x54] sm:$0xff]
    %v144 = vld [vmem:[#allocation5 + $0x5c] sm:$0xff]
    %v145 = vld [vmem:[#allocation5 + $0x64] sm:$0xff]
    %v146 = vld [vmem:[#allocation5 + $0x6c] sm:$0xff]
    %v147 = vld [vmem:[#allocation5 + $0x74] sm:$0xf]
    %v148 = vld [vmem:[#allocation5 + $0x78] sm:$0xff]
    %v149 = vld [vmem:[#allocation5 + $0x80] sm:$0xff]
    %v150 = vld [vmem:[#allocation5 + $0x88] sm:$0xff]
    %v151 = vld [vmem:[#allocation5 + $0x90] sm:$0xff]
    %v152 = vld [vmem:[#allocation5 + $0x98] sm:$0xff]
    %v153 = vld [vmem:[#allocation5 + $0xa0] sm:$0xff]
    %v154 = vld [vmem:[#allocation5 + $0xa8] sm:$0xff]
    %v155 = vld [vmem:[#allocation5 + $0xb0] sm:$0xf]
    %v156 = vld [vmem:[#allocation5 + $0xb4] sm:$0xff]
    %v157 = vld [vmem:[#allocation5 + $0xbc] sm:$0xff]
    %v158 = vld [vmem:[#allocation5 + $0xc4] sm:$0xff]
    %v159 = vld [vmem:[#allocation5 + $0xcc] sm:$0xff]
    %v160 = vld [vmem:[#allocation5 + $0xd4] sm:$0xff]
    %v161 = vld [vmem:[#allocation5 + $0xdc] sm:$0xff]
    %v162 = vld [vmem:[#allocation5 + $0xe4] sm:$0xff]
    %v163 = vld [vmem:[#allocation5 + $0xec] sm:$0xf]
    %v164 = vmax.bf16 %v132, 0
    %v165 = vmax.bf16 %v133, 0
    %v166 = vmax.bf16 %v134, 0
    %v167 = vmax.bf16 %v135, 0
    %v168 = vmax.bf16 %v136, 0
    %v169 = vmax.bf16 %v137, 0
    %v170 = vmax.bf16 %v138, 0
    %v171 = vmax.bf16 %v139, 0
    %v172 = vmax.bf16 %v140, 0
    %v173 = vmax.bf16 %v141, 0
    %v174 = vmax.bf16 %v142, 0
    %v175 = vmax.bf16 %v143, 0
    %v176 = vmax.bf16 %v144, 0
    %v177 = vmax.bf16 %v145, 0
    %v178 = vmax.bf16 %v146, 0
    %v179 = vmax.bf16 %v147, 0
    %v180 = vmax.bf16 %v148, 0
    %v181 = vmax.bf16 %v149, 0
    %v182 = vmax.bf16 %v150, 0
    %v183 = vmax.bf16 %v151, 0
    %v184 = vmax.bf16 %v152, 0
    %v185 = vmax.bf16 %v153, 0
    %v186 = vmax.bf16 %v154, 0
    %v187 = vmax.bf16 %v155, 0
    %v188 = vmax.bf16 %v156, 0
    %v189 = vmax.bf16 %v157, 0
    %v190 = vmax.bf16 %v158, 0
    %v191 = vmax.bf16 %v159, 0
    %v192 = vmax.bf16 %v160, 0
    %v193 = vmax.bf16 %v161, 0
    %v194 = vmax.bf16 %v162, 0
    %v195 = vmax.bf16 %v163, 0
    %v196 = vld [vmem:[#allocation2] sm:$0x1]
    %v229 = vunpack.c.l.b16 %v164
    %v230 = vunpack.c.h.b16 %v164
    %v231 = vunpack.c.l.b16 %v165
    %v232 = vunpack.c.h.b16 %v165
    %v233 = vunpack.c.l.b16 %v166
    %v234 = vunpack.c.h.b16 %v166
    %v235 = vunpack.c.l.b16 %v167
    %v236 = vunpack.c.h.b16 %v167
    %v237 = vunpack.c.l.b16 %v168
    %v238 = vunpack.c.h.b16 %v168
    %v239 = vunpack.c.l.b16 %v169
    %v240 = vunpack.c.h.b16 %v169
    %v241 = vunpack.c.l.b16 %v170
    %v242 = vunpack.c.h.b16 %v170
    %v243 = vunpack.c.l.b16 %v171
    %v244 = vunpack.c.l.b16 %v172
    %v245 = vunpack.c.h.b16 %v172
    %v246 = vunpack.c.l.b16 %v173
    %v247 = vunpack.c.h.b16 %v173
    %v248 = vunpack.c.l.b16 %v174
    %v249 = vunpack.c.h.b16 %v174
    %v250 = vunpack.c.l.b16 %v175
    %v251 = vunpack.c.h.b16 %v175
    %v252 = vunpack.c.l.b16 %v176
    %v253 = vunpack.c.h.b16 %v176
    %v254 = vunpack.c.l.b16 %v177
    %v255 = vunpack.c.h.b16 %v177
    %v256 = vunpack.c.l.b16 %v178
    %v257 = vunpack.c.h.b16 %v178
    %v258 = vunpack.c.l.b16 %v179
    %v259 = vunpack.c.l.b16 %v180
    %v260 = vunpack.c.h.b16 %v180
    %v261 = vunpack.c.l.b16 %v181
    %v262 = vunpack.c.h.b16 %v181
    %v263 = vunpack.c.l.b16 %v182
    %v264 = vunpack.c.h.b16 %v182
    %v265 = vunpack.c.l.b16 %v183
    %v266 = vunpack.c.h.b16 %v183
    %v267 = vunpack.c.l.b16 %v184
    %v268 = vunpack.c.h.b16 %v184
    %v269 = vunpack.c.l.b16 %v185
    %v270 = vunpack.c.h.b16 %v185
    %v271 = vunpack.c.l.b16 %v186
    %v272 = vunpack.c.h.b16 %v186
    %v273 = vunpack.c.l.b16 %v187
    %v274 = vunpack.c.l.b16 %v188
    %v275 = vunpack.c.h.b16 %v188
    %v276 = vunpack.c.l.b16 %v189
    %v277 = vunpack.c.h.b16 %v189
    %v278 = vunpack.c.l.b16 %v190
    %v279 = vunpack.c.h.b16 %v190
    %v280 = vunpack.c.l.b16 %v191
    %v281 = vunpack.c.h.b16 %v191
    %v282 = vunpack.c.l.b16 %v192
    %v283 = vunpack.c.h.b16 %v192
    %v284 = vunpack.c.l.b16 %v193
    %v285 = vunpack.c.h.b16 %v193
    %v286 = vunpack.c.l.b16 %v194
    %v287 = vunpack.c.h.b16 %v194
    %v288 = vunpack.c.l.b16 %v195
    %v289 = vpack.c.b16 %v244, %v229
    %v290 = vpack.c.b16 %v245, %v230
    %v291 = vpack.c.b16 %v246, %v231
    %v292 = vpack.c.b16 %v247, %v232
    %v293 = vpack.c.b16 %v248, %v233
    %v294 = vpack.c.b16 %v249, %v234
    %v295 = vpack.c.b16 %v250, %v235
    %v296 = vpack.c.b16 %v251, %v236
    %v297 = vpack.c.b16 %v252, %v237
    %v298 = vpack.c.b16 %v253, %v238
    %v299 = vpack.c.b16 %v254, %v239
    %v300 = vpack.c.b16 %v255, %v240
    %v301 = vpack.c.b16 %v256, %v241
    %v302 = vpack.c.b16 %v257, %v242
    %v303 = vpack.c.b16 %v258, %v243
    %v304 = vpack.c.b16 %v274, %v259
    %v305 = vpack.c.b16 %v275, %v260
    %v306 = vpack.c.b16 %v276, %v261
    %v307 = vpack.c.b16 %v277, %v262
    %v308 = vpack.c.b16 %v278, %v263
    %v309 = vpack.c.b16 %v279, %v264
    %v310 = vpack.c.b16 %v280, %v265
    %v311 = vpack.c.b16 %v281, %v266
    %v312 = vpack.c.b16 %v282, %v267
    %v313 = vpack.c.b16 %v283, %v268
    %v314 = vpack.c.b16 %v284, %v269
    %v315 = vpack.c.b16 %v285, %v270
    %v316 = vpack.c.b16 %v286, %v271
    %v317 = vpack.c.b16 %v287, %v272
    %v318 = vpack.c.b16 %v288, %v273
    %vm349 = vcmask 261120
    %v351 = vsel %vm349, %v196, 0
    %353 = vmatprep.subr.bf16.mxu0 0
    %354 = vmatpush1.bf16.msra.mxu0 0
    %355 = vmatprep.subr.bf16.mxu0 0
    %356 = vmatpush1.bf16.msra.mxu0 0
    %357 = vmatprep.subr.bf16.mxu0 0
    %358 = vmatpush1.bf16.msra.mxu0 0
    %359 = vmatprep.subr.bf16.mxu0 0
    %360 = vmatpush1.bf16.msra.mxu0 0
    %361 = vmatprep.subr.bf16.mxu0 0
    %362 = vmatpush1.bf16.msra.mxu0 0
    %363 = vmatprep.subr.bf16.mxu0 0
    %364 = vmatpush1.bf16.msra.mxu0 0
    %365 = vmatprep.subr.bf16.mxu0 %v305
    %366 = vmatpush1.bf16.msra.mxu0 %v304
    %367 = vmatprep.subr.bf16.mxu0 %v290
    %368 = vmatpush1.bf16.msra.mxu0 %v289
    %369 = vmatprep.subr.bf16.mxu0 0
    %370 = vmatpush2.bf16.msra.mxu0 0
    %371 = vmatprep.subr.bf16.mxu0 0
    %372 = vmatpush2.bf16.msra.mxu0 0
    %373 = vmatprep.subr.bf16.mxu0 0
    %374 = vmatpush2.bf16.msra.mxu0 0
    %375 = vmatprep.subr.bf16.mxu0 0
    %376 = vmatpush2.bf16.msra.mxu0 0
    %377 = vmatprep.subr.bf16.mxu0 0
    %378 = vmatpush2.bf16.msra.mxu0 0
    %379 = vmatprep.subr.bf16.mxu0 0
    %380 = vmatpush2.bf16.msra.mxu0 0
    %381 = vmatprep.subr.bf16.mxu0 0
    %382 = vmatpush2.bf16.msra.mxu0 0
    %383 = vmatprep.subr.bf16.mxu0 0
    %384 = vmatpush2.bf16.msra.mxu0 0
    %385 = vmatprep.mubr.bf16.mxu0 0
    %386 = vmatmul.mubr.bf16.gmra.mxu0 %v351
    %v387 = vpop.f32.mrf.mxu0
    %v388 = vadd.f32 0.0, %v387
    %v389 = vpop.f32.mrf.mxu0
    %v390 = vadd.f32 0.0, %v389
    %v391 = vpop.f32.mrf.mxu0
    %v392 = vpop.f32.mrf.mxu0
    %393 = vdwg.mxu0
    %394 = vmatprep.subr.bf16.mxu0 0
    %395 = vmatpush1.bf16.msra.mxu0 0
    %396 = vmatprep.subr.bf16.mxu0 0
    %397 = vmatpush1.bf16.msra.mxu0 0
    %398 = vmatprep.subr.bf16.mxu0 0
    %399 = vmatpush1.bf16.msra.mxu0 0
    %400 = vmatprep.subr.bf16.mxu0 0
    %401 = vmatpush1.bf16.msra.mxu0 0
    %402 = vmatprep.subr.bf16.mxu0 0
    %403 = vmatpush1.bf16.msra.mxu0 0
    %404 = vmatprep.subr.bf16.mxu0 0
    %405 = vmatpush1.bf16.msra.mxu0 0
    %406 = vmatprep.subr.bf16.mxu0 %v307
    %407 = vmatpush1.bf16.msra.mxu0 %v306
    %408 = vmatprep.subr.bf16.mxu0 %v292
    %409 = vmatpush1.bf16.msra.mxu0 %v291
    %410 = vmatprep.subr.bf16.mxu0 0
    %411 = vmatpush2.bf16.msra.mxu0 0
    %412 = vmatprep.subr.bf16.mxu0 0
    %413 = vmatpush2.bf16.msra.mxu0 0
    %414 = vmatprep.subr.bf16.mxu0 0
    %415 = vmatpush2.bf16.msra.mxu0 0
    %416 = vmatprep.subr.bf16.mxu0 0
    %417 = vmatpush2.bf16.msra.mxu0 0
    %418 = vmatprep.subr.bf16.mxu0 0
    %419 = vmatpush2.bf16.msra.mxu0 0
    %420 = vmatprep.subr.bf16.mxu0 0
    %421 = vmatpush2.bf16.msra.mxu0 0
    %422 = vmatprep.subr.bf16.mxu0 0
    %423 = vmatpush2.bf16.msra.mxu0 0
    %424 = vmatprep.subr.bf16.mxu0 0
    %425 = vmatpush2.bf16.msra.mxu0 0
    %426 = vmatprep.mubr.bf16.mxu0 0
    %427 = vmatmul.mubr.bf16.gmra.mxu0 %v351
    %v428 = vpop.f32.mrf.mxu0
    %v429 = vadd.f32 0.0, %v428
    %v430 = vpop.f32.mrf.mxu0
    %v431 = vadd.f32 0.0, %v430
    %v432 = vpop.f32.mrf.mxu0
    %v433 = vpop.f32.mrf.mxu0
    %434 = vdwg.mxu0
    %435 = vmatprep.subr.bf16.mxu0 0
    %436 = vmatpush1.bf16.msra.mxu0 0
    %437 = vmatprep.subr.bf16.mxu0 0
    %438 = vmatpush1.bf16.msra.mxu0 0
    %439 = vmatprep.subr.bf16.mxu0 0
    %440 = vmatpush1.bf16.msra.mxu0 0
    %441 = vmatprep.subr.bf16.mxu0 0
    %442 = vmatpush1.bf16.msra.mxu0 0
    %443 = vmatprep.subr.bf16.mxu0 0
    %444 = vmatpush1.bf16.msra.mxu0 0
    %445 = vmatprep.subr.bf16.mxu0 0
    %446 = vmatpush1.bf16.msra.mxu0 0
    %447 = vmatprep.subr.bf16.mxu0 %v309
    %448 = vmatpush1.bf16.msra.mxu0 %v308
    %449 = vmatprep.subr.bf16.mxu0 %v294
    %450 = vmatpush1.bf16.msra.mxu0 %v293
    %451 = vmatprep.subr.bf16.mxu0 0
    %452 = vmatpush2.bf16.msra.mxu0 0
    %453 = vmatprep.subr.bf16.mxu0 0
    %454 = vmatpush2.bf16.msra.mxu0 0
    %455 = vmatprep.subr.bf16.mxu0 0
    %456 = vmatpush2.bf16.msra.mxu0 0
    %457 = vmatprep.subr.bf16.mxu0 0
    %458 = vmatpush2.bf16.msra.mxu0 0
    %459 = vmatprep.subr.bf16.mxu0 0
    %460 = vmatpush2.bf16.msra.mxu0 0
    %461 = vmatprep.subr.bf16.mxu0 0
    %462 = vmatpush2.bf16.msra.mxu0 0
    %463 = vmatprep.subr.bf16.mxu0 0
    %464 = vmatpush2.bf16.msra.mxu0 0
    %465 = vmatprep.subr.bf16.mxu0 0
    %466 = vmatpush2.bf16.msra.mxu0 0
    %467 = vmatprep.mubr.bf16.mxu0 0
    %468 = vmatmul.mubr.bf16.gmra.mxu0 %v351
    %v469 = vpop.f32.mrf.mxu0
    %v470 = vadd.f32 0.0, %v469
    %v471 = vpop.f32.mrf.mxu0
    %v472 = vadd.f32 0.0, %v471
    %v473 = vpop.f32.mrf.mxu0
    %v474 = vpop.f32.mrf.mxu0
    %475 = vdwg.mxu0
    %476 = vmatprep.subr.bf16.mxu0 0
    %477 = vmatpush1.bf16.msra.mxu0 0
    %478 = vmatprep.subr.bf16.mxu0 0
    %479 = vmatpush1.bf16.msra.mxu0 0
    %480 = vmatprep.subr.bf16.mxu0 0
    %481 = vmatpush1.bf16.msra.mxu0 0
    %482 = vmatprep.subr.bf16.mxu0 0
    %483 = vmatpush1.bf16.msra.mxu0 0
    %484 = vmatprep.subr.bf16.mxu0 0
    %485 = vmatpush1.bf16.msra.mxu0 0
    %486 = vmatprep.subr.bf16.mxu0 0
    %487 = vmatpush1.bf16.msra.mxu0 0
    %488 = vmatprep.subr.bf16.mxu0 %v311
    %489 = vmatpush1.bf16.msra.mxu0 %v310
    %490 = vmatprep.subr.bf16.mxu0 %v296
    %491 = vmatpush1.bf16.msra.mxu0 %v295
    %492 = vmatprep.subr.bf16.mxu0 0
    %493 = vmatpush2.bf16.msra.mxu0 0
    %494 = vmatprep.subr.bf16.mxu0 0
    %495 = vmatpush2.bf16.msra.mxu0 0
    %496 = vmatprep.subr.bf16.mxu0 0
    %497 = vmatpush2.bf16.msra.mxu0 0
    %498 = vmatprep.subr.bf16.mxu0 0
    %499 = vmatpush2.bf16.msra.mxu0 0
    %500 = vmatprep.subr.bf16.mxu0 0
    %501 = vmatpush2.bf16.msra.mxu0 0
    %502 = vmatprep.subr.bf16.mxu0 0
    %503 = vmatpush2.bf16.msra.mxu0 0
    %504 = vmatprep.subr.bf16.mxu0 0
    %505 = vmatpush2.bf16.msra.mxu0 0
    %506 = vmatprep.subr.bf16.mxu0 0
    %507 = vmatpush2.bf16.msra.mxu0 0
    %508 = vmatprep.mubr.bf16.mxu0 0
    %509 = vmatmul.mubr.bf16.gmra.mxu0 %v351
    %v510 = vpop.f32.mrf.mxu0
    %v511 = vadd.f32 0.0, %v510
    %v512 = vpop.f32.mrf.mxu0
    %v513 = vadd.f32 0.0, %v512
    %v514 = vpop.f32.mrf.mxu0
    %v515 = vpop.f32.mrf.mxu0
    %516 = vdwg.mxu0
    %517 = vmatprep.subr.bf16.mxu0 0
    %518 = vmatpush1.bf16.msra.mxu0 0
    %519 = vmatprep.subr.bf16.mxu0 0
    %520 = vmatpush1.bf16.msra.mxu0 0
    %521 = vmatprep.subr.bf16.mxu0 0
    %522 = vmatpush1.bf16.msra.mxu0 0
    %523 = vmatprep.subr.bf16.mxu0 0
    %524 = vmatpush1.bf16.msra.mxu0 0
    %525 = vmatprep.subr.bf16.mxu0 0
    %526 = vmatpush1.bf16.msra.mxu0 0
    %527 = vmatprep.subr.bf16.mxu0 0
    %528 = vmatpush1.bf16.msra.mxu0 0
    %529 = vmatprep.subr.bf16.mxu0 %v313
    %530 = vmatpush1.bf16.msra.mxu0 %v312
    %531 = vmatprep.subr.bf16.mxu0 %v298
    %532 = vmatpush1.bf16.msra.mxu0 %v297
    %533 = vmatprep.subr.bf16.mxu0 0
    %534 = vmatpush2.bf16.msra.mxu0 0
    %535 = vmatprep.subr.bf16.mxu0 0
    %536 = vmatpush2.bf16.msra.mxu0 0
    %537 = vmatprep.subr.bf16.mxu0 0
    %538 = vmatpush2.bf16.msra.mxu0 0
    %539 = vmatprep.subr.bf16.mxu0 0
    %540 = vmatpush2.bf16.msra.mxu0 0
    %541 = vmatprep.subr.bf16.mxu0 0
    %542 = vmatpush2.bf16.msra.mxu0 0
    %543 = vmatprep.subr.bf16.mxu0 0
    %544 = vmatpush2.bf16.msra.mxu0 0
    %545 = vmatprep.subr.bf16.mxu0 0
    %546 = vmatpush2.bf16.msra.mxu0 0
    %547 = vmatprep.subr.bf16.mxu0 0
    %548 = vmatpush2.bf16.msra.mxu0 0
    %549 = vmatprep.mubr.bf16.mxu0 0
    %550 = vmatmul.mubr.bf16.gmra.mxu0 %v351
    %v551 = vpop.f32.mrf.mxu0
    %v552 = vadd.f32 0.0, %v551
    %v553 = vpop.f32.mrf.mxu0
    %v554 = vadd.f32 0.0, %v553
    %v555 = vpop.f32.mrf.mxu0
    %v556 = vpop.f32.mrf.mxu0
    %557 = vdwg.mxu0
    %558 = vmatprep.subr.bf16.mxu0 0
    %559 = vmatpush1.bf16.msra.mxu0 0
    %560 = vmatprep.subr.bf16.mxu0 0
    %561 = vmatpush1.bf16.msra.mxu0 0
    %562 = vmatprep.subr.bf16.mxu0 0
    %563 = vmatpush1.bf16.msra.mxu0 0
    %564 = vmatprep.subr.bf16.mxu0 0
    %565 = vmatpush1.bf16.msra.mxu0 0
    %566 = vmatprep.subr.bf16.mxu0 0
    %567 = vmatpush1.bf16.msra.mxu0 0
    %568 = vmatprep.subr.bf16.mxu0 0
    %569 = vmatpush1.bf16.msra.mxu0 0
    %570 = vmatprep.subr.bf16.mxu0 %v315
    %571 = vmatpush1.bf16.msra.mxu0 %v314
    %572 = vmatprep.subr.bf16.mxu0 %v300
    %573 = vmatpush1.bf16.msra.mxu0 %v299
    %574 = vmatprep.subr.bf16.mxu0 0
    %575 = vmatpush2.bf16.msra.mxu0 0
    %576 = vmatprep.subr.bf16.mxu0 0
    %577 = vmatpush2.bf16.msra.mxu0 0
    %578 = vmatprep.subr.bf16.mxu0 0
    %579 = vmatpush2.bf16.msra.mxu0 0
    %580 = vmatprep.subr.bf16.mxu0 0
    %581 = vmatpush2.bf16.msra.mxu0 0
    %582 = vmatprep.subr.bf16.mxu0 0
    %583 = vmatpush2.bf16.msra.mxu0 0
    %584 = vmatprep.subr.bf16.mxu0 0
    %585 = vmatpush2.bf16.msra.mxu0 0
    %586 = vmatprep.subr.bf16.mxu0 0
    %587 = vmatpush2.bf16.msra.mxu0 0
    %588 = vmatprep.subr.bf16.mxu0 0
    %589 = vmatpush2.bf16.msra.mxu0 0
    %590 = vmatprep.mubr.bf16.mxu0 0
    %591 = vmatmul.mubr.bf16.gmra.mxu0 %v351
    %v592 = vpop.f32.mrf.mxu0
    %v593 = vadd.f32 0.0, %v592
    %v594 = vpop.f32.mrf.mxu0
    %v595 = vadd.f32 0.0, %v594
    %v596 = vpop.f32.mrf.mxu0
    %v597 = vpop.f32.mrf.mxu0
    %598 = vdwg.mxu0
    %599 = vmatprep.subr.bf16.mxu0 0
    %600 = vmatpush1.bf16.msra.mxu0 0
    %601 = vmatprep.subr.bf16.mxu0 0
    %602 = vmatpush1.bf16.msra.mxu0 0
    %603 = vmatprep.subr.bf16.mxu0 0
    %604 = vmatpush1.bf16.msra.mxu0 0
    %605 = vmatprep.subr.bf16.mxu0 0
    %606 = vmatpush1.bf16.msra.mxu0 0
    %607 = vmatprep.subr.bf16.mxu0 0
    %608 = vmatpush1.bf16.msra.mxu0 0
    %609 = vmatprep.subr.bf16.mxu0 0
    %610 = vmatpush1.bf16.msra.mxu0 0
    %611 = vmatprep.subr.bf16.mxu0 %v317
    %612 = vmatpush1.bf16.msra.mxu0 %v316
    %613 = vmatprep.subr.bf16.mxu0 %v302
    %614 = vmatpush1.bf16.msra.mxu0 %v301
    %615 = vmatprep.subr.bf16.mxu0 0
    %616 = vmatpush2.bf16.msra.mxu0 0
    %617 = vmatprep.subr.bf16.mxu0 0
    %618 = vmatpush2.bf16.msra.mxu0 0
    %619 = vmatprep.subr.bf16.mxu0 0
    %620 = vmatpush2.bf16.msra.mxu0 0
    %621 = vmatprep.subr.bf16.mxu0 0
    %622 = vmatpush2.bf16.msra.mxu0 0
    %623 = vmatprep.subr.bf16.mxu0 0
    %624 = vmatpush2.bf16.msra.mxu0 0
    %625 = vmatprep.subr.bf16.mxu0 0
    %626 = vmatpush2.bf16.msra.mxu0 0
    %627 = vmatprep.subr.bf16.mxu0 0
    %628 = vmatpush2.bf16.msra.mxu0 0
    %629 = vmatprep.subr.bf16.mxu0 0
    %630 = vmatpush2.bf16.msra.mxu0 0
    %631 = vmatprep.mubr.bf16.mxu0 0
    %632 = vmatmul.mubr.bf16.gmra.mxu0 %v351
    %v633 = vpop.f32.mrf.mxu0
    %v634 = vadd.f32 0.0, %v633
    %v635 = vpop.f32.mrf.mxu0
    %v636 = vadd.f32 0.0, %v635
    %v637 = vpop.f32.mrf.mxu0
    %v638 = vpop.f32.mrf.mxu0
    %639 = vdwg.mxu0
    %640 = vmatprep.subr.bf16.mxu0 0
    %641 = vmatpush1.bf16.msra.mxu0 0
    %642 = vmatprep.subr.bf16.mxu0 0
    %643 = vmatpush1.bf16.msra.mxu0 0
    %644 = vmatprep.subr.bf16.mxu0 0
    %645 = vmatpush1.bf16.msra.mxu0 0
    %646 = vmatprep.subr.bf16.mxu0 0
    %647 = vmatpush1.bf16.msra.mxu0 0
    %648 = vmatprep.subr.bf16.mxu0 0
    %649 = vmatpush1.bf16.msra.mxu0 0
    %650 = vmatprep.subr.bf16.mxu0 0
    %651 = vmatpush1.bf16.msra.mxu0 0
    %652 = vmatprep.subr.bf16.mxu0 0
    %653 = vmatpush1.bf16.msra.mxu0 %v318
    %654 = vmatprep.subr.bf16.mxu0 0
    %655 = vmatpush1.bf16.msra.mxu0 %v303
    %656 = vmatprep.subr.bf16.mxu0 0
    %657 = vmatpush2.bf16.msra.mxu0 0
    %658 = vmatprep.subr.bf16.mxu0 0
    %659 = vmatpush2.bf16.msra.mxu0 0
    %660 = vmatprep.subr.bf16.mxu0 0
    %661 = vmatpush2.bf16.msra.mxu0 0
    %662 = vmatprep.subr.bf16.mxu0 0
    %663 = vmatpush2.bf16.msra.mxu0 0
    %664 = vmatprep.subr.bf16.mxu0 0
    %665 = vmatpush2.bf16.msra.mxu0 0
    %666 = vmatprep.subr.bf16.mxu0 0
    %667 = vmatpush2.bf16.msra.mxu0 0
    %668 = vmatprep.subr.bf16.mxu0 0
    %669 = vmatpush2.bf16.msra.mxu0 0
    %670 = vmatprep.subr.bf16.mxu0 0
    %671 = vmatpush2.bf16.msra.mxu0 0
    %672 = vmatprep.mubr.bf16.mxu0 0
    %673 = vmatmul.mubr.bf16.gmra.mxu0 %v351
    %v674 = vpop.f32.mrf.mxu0
    %v675 = vadd.f32 0.0, %v674
    %v676 = vpop.f32.mrf.mxu0
    %v677 = vpop.f32.mrf.mxu0
    %v678 = vpop.f32.mrf.mxu0
    %679 = vdwg.mxu0
    %v680 = vmul.f32 %v388, 0.0625
    %v681 = vmul.f32 %v390, 0.0625
    %v682 = vmul.f32 %v429, 0.0625
    %v683 = vmul.f32 %v431, 0.0625
    %v684 = vmul.f32 %v470, 0.0625
    %v685 = vmul.f32 %v472, 0.0625
    %v686 = vmul.f32 %v511, 0.0625
    %v687 = vmul.f32 %v513, 0.0625
    %v688 = vmul.f32 %v552, 0.0625
    %v689 = vmul.f32 %v554, 0.0625
    %v690 = vmul.f32 %v593, 0.0625
    %v691 = vmul.f32 %v595, 0.0625
    %v692 = vmul.f32 %v634, 0.0625
    %v693 = vmul.f32 %v636, 0.0625
    %v694 = vmul.f32 %v675, 0.0625
    %v695 = vpack.c.bf16 %v680, %v680
    %v696 = vpack.c.bf16 %v681, %v681
    %v697 = vpack.c.bf16 %v682, %v682
    %v698 = vpack.c.bf16 %v683, %v683
    %v699 = vpack.c.bf16 %v684, %v684
    %v700 = vpack.c.bf16 %v685, %v685
    %v701 = vpack.c.bf16 %v686, %v686
    %v702 = vpack.c.bf16 %v687, %v687
    %v703 = vpack.c.bf16 %v688, %v688
    %v704 = vpack.c.bf16 %v689, %v689
    %v705 = vpack.c.bf16 %v690, %v690
    %v706 = vpack.c.bf16 %v691, %v691
    %v707 = vpack.c.bf16 %v692, %v692
    %v708 = vpack.c.bf16 %v693, %v693
    %v709 = vpack.c.bf16 %v694, %v694
    %v710 = vld [vmem:[#allocation7] sm:$0xff]
    %v711 = vld [vmem:[#allocation7 + $0x8] sm:$0xff]
    %v712 = vld [vmem:[#allocation7 + $0x10] sm:$0xff]
    %v713 = vld [vmem:[#allocation7 + $0x18] sm:$0xff]
    %v714 = vld [vmem:[#allocation7 + $0x20] sm:$0xff]
    %v715 = vld [vmem:[#allocation7 + $0x28] sm:$0xff]
    %v716 = vld [vmem:[#allocation7 + $0x30] sm:$0xff]
    %v717 = vld [vmem:[#allocation7 + $0x38] sm:$0xff]
    %v718 = vld [vmem:[#allocation7 + $0x40] sm:$0xff]
    %v719 = vld [vmem:[#allocation7 + $0x48] sm:$0xff]
    %v720 = vld [vmem:[#allocation7 + $0x50] sm:$0xff]
    %v721 = vld [vmem:[#allocation7 + $0x58] sm:$0xff]
    %v722 = vld [vmem:[#allocation7 + $0x60] sm:$0xff]
    %v723 = vld [vmem:[#allocation7 + $0x68] sm:$0xff]
    %v724 = vld [vmem:[#allocation7 + $0x70] sm:$0xff]
    %v725 = vld [vmem:[#allocation7 + $0x78] sm:$0xff]
    %v726 = vld [vmem:[#allocation7 + $0x80] sm:$0xff]
    %v727 = vld [vmem:[#allocation7 + $0x88] sm:$0xff]
    %v728 = vld [vmem:[#allocation7 + $0x90] sm:$0xff]
    %v729 = vld [vmem:[#allocation7 + $0x98] sm:$0xff]
    %v730 = vld [vmem:[#allocation7 + $0xa0] sm:$0xff]
    %v731 = vld [vmem:[#allocation7 + $0xa8] sm:$0xff]
    %v732 = vld [vmem:[#allocation7 + $0xb0] sm:$0xff]
    %v733 = vld [vmem:[#allocation7 + $0xb8] sm:$0xff]
    %v734 = vld [vmem:[#allocation7 + $0xc0] sm:$0xff]
    %v735 = vld [vmem:[#allocation7 + $0xc8] sm:$0xff]
    %v736 = vld [vmem:[#allocation7 + $0xd0] sm:$0xff]
    %v737 = vld [vmem:[#allocation7 + $0xd8] sm:$0xff]
    %v738 = vld [vmem:[#allocation7 + $0xe0] sm:$0xff]
    %v739 = vld [vmem:[#allocation7 + $0xe8] sm:$0xff]
    %v740 = vld [vmem:[#allocation7 + $0xf0] sm:$0xff]
    %v741 = vld [vmem:[#allocation7 + $0xf8] sm:$0xff]
    %v742 = vld [vmem:[#allocation7 + $0x100] sm:$0xff]
    %v743 = vld [vmem:[#allocation7 + $0x108] sm:$0xff]
    %v744 = vld [vmem:[#allocation7 + $0x110] sm:$0xff]
    %v745 = vld [vmem:[#allocation7 + $0x118] sm:$0xff]
    %v746 = vld [vmem:[#allocation7 + $0x120] sm:$0xff]
    %v747 = vld [vmem:[#allocation7 + $0x128] sm:$0xff]
    %v748 = vld [vmem:[#allocation7 + $0x130] sm:$0xff]
    %v749 = vld [vmem:[#allocation7 + $0x138] sm:$0xff]
    %v750 = vld [vmem:[#allocation7 + $0x140] sm:$0xff]
    %v751 = vld [vmem:[#allocation7 + $0x148] sm:$0xff]
    %v752 = vld [vmem:[#allocation7 + $0x150] sm:$0xff]
    %v753 = vld [vmem:[#allocation7 + $0x158] sm:$0xff]
    %v754 = vld [vmem:[#allocation7 + $0x160] sm:$0xff]
    %v755 = vld [vmem:[#allocation7 + $0x168] sm:$0xff]
    %v756 = vld [vmem:[#allocation7 + $0x170] sm:$0xff]
    %v757 = vld [vmem:[#allocation7 + $0x178] sm:$0xff]
    %v758 = vld [vmem:[#allocation7 + $0x180] sm:$0xff]
    %v759 = vld [vmem:[#allocation7 + $0x188] sm:$0xff]
    %v760 = vld [vmem:[#allocation7 + $0x190] sm:$0xff]
    %v761 = vld [vmem:[#allocation7 + $0x198] sm:$0xff]
    %v762 = vld [vmem:[#allocation7 + $0x1a0] sm:$0xff]
    %v763 = vld [vmem:[#allocation7 + $0x1a8] sm:$0xff]
    %v764 = vld [vmem:[#allocation7 + $0x1b0] sm:$0xff]
    %v765 = vld [vmem:[#allocation7 + $0x1b8] sm:$0xff]
    %v766 = vld [vmem:[#allocation7 + $0x1c0] sm:$0xff]
    %v767 = vld [vmem:[#allocation7 + $0x1c8] sm:$0xff]
    %v768 = vld [vmem:[#allocation7 + $0x1d0] sm:$0xff]
    %v769 = vld [vmem:[#allocation7 + $0x1d8] sm:$0xff]
    %v770 = vld [vmem:[#allocation7 + $0x1e0] sm:$0xff]
    %v771 = vld [vmem:[#allocation7 + $0x1e8] sm:$0xff]
    %v772 = vld [vmem:[#allocation7 + $0x1f0] sm:$0xff]
    %v773 = vld [vmem:[#allocation7 + $0x1f8] sm:$0xff]
    %v774 = vld [vmem:[#allocation7 + $0x200] sm:$0xff]
    %v775 = vld [vmem:[#allocation7 + $0x208] sm:$0xff]
    %v776 = vld [vmem:[#allocation7 + $0x210] sm:$0xff]
    %v777 = vld [vmem:[#allocation7 + $0x218] sm:$0xff]
    %v778 = vld [vmem:[#allocation7 + $0x220] sm:$0xff]
    %v779 = vld [vmem:[#allocation7 + $0x228] sm:$0xff]
    %v780 = vld [vmem:[#allocation7 + $0x230] sm:$0xff]
    %v781 = vld [vmem:[#allocation7 + $0x238] sm:$0xff]
    %v782 = vld [vmem:[#allocation7 + $0x240] sm:$0xff]
    %v783 = vld [vmem:[#allocation7 + $0x248] sm:$0xff]
    %v784 = vld [vmem:[#allocation7 + $0x250] sm:$0xff]
    %v785 = vld [vmem:[#allocation7 + $0x258] sm:$0xff]
    %v786 = vld [vmem:[#allocation7 + $0x260] sm:$0xff]
    %v787 = vld [vmem:[#allocation7 + $0x268] sm:$0xff]
    %v788 = vld [vmem:[#allocation7 + $0x270] sm:$0xff]
    %v789 = vld [vmem:[#allocation7 + $0x278] sm:$0xff]
    %v790 = vld [vmem:[#allocation7 + $0x280] sm:$0xff]
    %v791 = vld [vmem:[#allocation7 + $0x288] sm:$0xff]
    %v792 = vld [vmem:[#allocation7 + $0x290] sm:$0xff]
    %v793 = vld [vmem:[#allocation7 + $0x298] sm:$0xff]
    %v794 = vld [vmem:[#allocation7 + $0x2a0] sm:$0xff]
    %v795 = vld [vmem:[#allocation7 + $0x2a8] sm:$0xff]
    %v796 = vld [vmem:[#allocation7 + $0x2b0] sm:$0xff]
    %v797 = vld [vmem:[#allocation7 + $0x2b8] sm:$0xff]
    %v798 = vld [vmem:[#allocation7 + $0x2c0] sm:$0xff]
    %v799 = vld [vmem:[#allocation7 + $0x2c8] sm:$0xff]
    %v800 = vld [vmem:[#allocation7 + $0x2d0] sm:$0xff]
    %v801 = vld [vmem:[#allocation7 + $0x2d8] sm:$0xff]
    %v802 = vld [vmem:[#allocation7 + $0x2e0] sm:$0xff]
    %v803 = vld [vmem:[#allocation7 + $0x2e8] sm:$0xff]
    %v804 = vld [vmem:[#allocation7 + $0x2f0] sm:$0xff]
    %v805 = vld [vmem:[#allocation7 + $0x2f8] sm:$0xff]
    %v806 = vld [vmem:[#allocation7 + $0x300] sm:$0xff]
    %v807 = vld [vmem:[#allocation7 + $0x308] sm:$0xff]
    %v808 = vld [vmem:[#allocation7 + $0x310] sm:$0xff]
    %v809 = vld [vmem:[#allocation7 + $0x318] sm:$0xff]
    %v810 = vld [vmem:[#allocation7 + $0x320] sm:$0xff]
    %v811 = vld [vmem:[#allocation7 + $0x328] sm:$0xff]
    %v812 = vld [vmem:[#allocation7 + $0x330] sm:$0xff]
    %v813 = vld [vmem:[#allocation7 + $0x338] sm:$0xff]
    %v814 = vld [vmem:[#allocation7 + $0x340] sm:$0xff]
    %v815 = vld [vmem:[#allocation7 + $0x348] sm:$0xff]
    %v816 = vld [vmem:[#allocation7 + $0x350] sm:$0xff]
    %v817 = vld [vmem:[#allocation7 + $0x358] sm:$0xff]
    %v818 = vld [vmem:[#allocation7 + $0x360] sm:$0xff]
    %v819 = vld [vmem:[#allocation7 + $0x368] sm:$0xff]
    %v820 = vld [vmem:[#allocation7 + $0x370] sm:$0xff]
    %v821 = vld [vmem:[#allocation7 + $0x378] sm:$0xff]
    %v822 = vld [vmem:[#allocation7 + $0x380] sm:$0xff]
    %v823 = vld [vmem:[#allocation7 + $0x388] sm:$0xff]
    %v824 = vld [vmem:[#allocation7 + $0x390] sm:$0xff]
    %v825 = vld [vmem:[#allocation7 + $0x398] sm:$0xff]
    %v826 = vld [vmem:[#allocation7 + $0x3a0] sm:$0xff]
    %v827 = vld [vmem:[#allocation7 + $0x3a8] sm:$0xff]
    %v828 = vld [vmem:[#allocation7 + $0x3b0] sm:$0xff]
    %v829 = vld [vmem:[#allocation7 + $0x3b8] sm:$0xff]
    %v830 = vld [vmem:[#allocation7 + $0x3c0] sm:$0xff]
    %v831 = vld [vmem:[#allocation7 + $0x3c8] sm:$0xff]
    %v832 = vld [vmem:[#allocation7 + $0x3d0] sm:$0xff]
    %v833 = vld [vmem:[#allocation7 + $0x3d8] sm:$0xff]
    %v834 = vld [vmem:[#allocation7 + $0x3e0] sm:$0xff]
    %v835 = vld [vmem:[#allocation7 + $0x3e8] sm:$0xff]
    %v836 = vld [vmem:[#allocation7 + $0x3f0] sm:$0xff]
    %v837 = vld [vmem:[#allocation7 + $0x3f8] sm:$0xff]
    %v838 = vld [vmem:[#allocation7 + $0x400] sm:$0xff]
    %v839 = vld [vmem:[#allocation7 + $0x408] sm:$0xff]
    %v840 = vld [vmem:[#allocation7 + $0x410] sm:$0xff]
    %v841 = vld [vmem:[#allocation7 + $0x418] sm:$0xff]
    %v842 = vld [vmem:[#allocation7 + $0x420] sm:$0xff]
    %v843 = vld [vmem:[#allocation7 + $0x428] sm:$0xff]
    %v844 = vld [vmem:[#allocation7 + $0x430] sm:$0xff]
    %v845 = vld [vmem:[#allocation7 + $0x438] sm:$0xff]
    %v846 = vld [vmem:[#allocation7 + $0x440] sm:$0xff]
    %v847 = vld [vmem:[#allocation7 + $0x448] sm:$0xff]
    %v848 = vld [vmem:[#allocation7 + $0x450] sm:$0xff]
    %v849 = vld [vmem:[#allocation7 + $0x458] sm:$0xff]
    %v850 = vld [vmem:[#allocation7 + $0x460] sm:$0xff]
    %v851 = vld [vmem:[#allocation7 + $0x468] sm:$0xff]
    %v852 = vld [vmem:[#allocation7 + $0x470] sm:$0xff]
    %v853 = vld [vmem:[#allocation7 + $0x478] sm:$0xff]
    %v854 = vld [vmem:[#allocation7 + $0x480] sm:$0xff]
    %v855 = vld [vmem:[#allocation7 + $0x488] sm:$0xff]
    %v856 = vld [vmem:[#allocation7 + $0x490] sm:$0xff]
    %v857 = vld [vmem:[#allocation7 + $0x498] sm:$0xff]
    %v858 = vld [vmem:[#allocation7 + $0x4a0] sm:$0xff]
    %v859 = vld [vmem:[#allocation7 + $0x4a8] sm:$0xff]
    %v860 = vld [vmem:[#allocation7 + $0x4b0] sm:$0xff]
    %v861 = vld [vmem:[#allocation7 + $0x4b8] sm:$0xff]
    %v862 = vld [vmem:[#allocation7 + $0x4c0] sm:$0xff]
    %v863 = vld [vmem:[#allocation7 + $0x4c8] sm:$0xff]
    %v864 = vld [vmem:[#allocation7 + $0x4d0] sm:$0xff]
    %v865 = vld [vmem:[#allocation7 + $0x4d8] sm:$0xff]
    %v866 = vld [vmem:[#allocation7 + $0x4e0] sm:$0xff]
    %v867 = vld [vmem:[#allocation7 + $0x4e8] sm:$0xff]
    %v868 = vld [vmem:[#allocation7 + $0x4f0] sm:$0xff]
    %v869 = vld [vmem:[#allocation7 + $0x4f8] sm:$0xff]
    %v870 = vld [vmem:[#allocation7 + $0x500] sm:$0xff]
    %v871 = vld [vmem:[#allocation7 + $0x508] sm:$0xff]
    %v872 = vld [vmem:[#allocation7 + $0x510] sm:$0xff]
    %v873 = vld [vmem:[#allocation7 + $0x518] sm:$0xff]
    %v874 = vld [vmem:[#allocation7 + $0x520] sm:$0xff]
    %v875 = vld [vmem:[#allocation7 + $0x528] sm:$0xff]
    %v876 = vld [vmem:[#allocation7 + $0x530] sm:$0xff]
    %v877 = vld [vmem:[#allocation7 + $0x538] sm:$0xff]
    %v878 = vld [vmem:[#allocation7 + $0x540] sm:$0xff]
    %v879 = vld [vmem:[#allocation7 + $0x548] sm:$0xff]
    %v880 = vld [vmem:[#allocation7 + $0x550] sm:$0xff]
    %v881 = vld [vmem:[#allocation7 + $0x558] sm:$0xff]
    %v882 = vld [vmem:[#allocation7 + $0x560] sm:$0xff]
    %v883 = vld [vmem:[#allocation7 + $0x568] sm:$0xff]
    %v884 = vld [vmem:[#allocation7 + $0x570] sm:$0xff]
    %v885 = vld [vmem:[#allocation7 + $0x578] sm:$0xff]
    %v886 = vld [vmem:[#allocation7 + $0x580] sm:$0xff]
    %v887 = vld [vmem:[#allocation7 + $0x588] sm:$0xff]
    %v888 = vld [vmem:[#allocation7 + $0x590] sm:$0xff]
    %v889 = vld [vmem:[#allocation7 + $0x598] sm:$0xff]
    %v890 = vld [vmem:[#allocation7 + $0x5a0] sm:$0xff]
    %v891 = vld [vmem:[#allocation7 + $0x5a8] sm:$0xff]
    %v892 = vld [vmem:[#allocation7 + $0x5b0] sm:$0xff]
    %v893 = vld [vmem:[#allocation7 + $0x5b8] sm:$0xff]
    %v894 = vld [vmem:[#allocation7 + $0x5c0] sm:$0xff]
    %v895 = vld [vmem:[#allocation7 + $0x5c8] sm:$0xff]
    %v896 = vld [vmem:[#allocation7 + $0x5d0] sm:$0xff]
    %v897 = vld [vmem:[#allocation7 + $0x5d8] sm:$0xff]
    %v898 = vld [vmem:[#allocation7 + $0x5e0] sm:$0xff]
    %v899 = vld [vmem:[#allocation7 + $0x5e8] sm:$0xff]
    %v900 = vld [vmem:[#allocation7 + $0x5f0] sm:$0xff]
    %v901 = vld [vmem:[#allocation7 + $0x5f8] sm:$0xff]
    %v902 = vld [vmem:[#allocation7 + $0x600] sm:$0xff]
    %v903 = vld [vmem:[#allocation7 + $0x608] sm:$0xff]
    %v904 = vld [vmem:[#allocation7 + $0x610] sm:$0xff]
    %v905 = vld [vmem:[#allocation7 + $0x618] sm:$0xff]
    %v906 = vld [vmem:[#allocation7 + $0x620] sm:$0xff]
    %v907 = vld [vmem:[#allocation7 + $0x628] sm:$0xff]
    %v908 = vld [vmem:[#allocation7 + $0x630] sm:$0xff]
    %v909 = vld [vmem:[#allocation7 + $0x638] sm:$0xff]
    %v910 = vld [vmem:[#allocation7 + $0x640] sm:$0xff]
    %v911 = vld [vmem:[#allocation7 + $0x648] sm:$0xff]
    %v912 = vld [vmem:[#allocation7 + $0x650] sm:$0xff]
    %v913 = vld [vmem:[#allocation7 + $0x658] sm:$0xff]
    %v914 = vld [vmem:[#allocation7 + $0x660] sm:$0xff]
    %v915 = vld [vmem:[#allocation7 + $0x668] sm:$0xff]
    %v916 = vld [vmem:[#allocation7 + $0x670] sm:$0xff]
    %v917 = vld [vmem:[#allocation7 + $0x678] sm:$0xff]
    %v918 = vld [vmem:[#allocation7 + $0x680] sm:$0xff]
    %v919 = vld [vmem:[#allocation7 + $0x688] sm:$0xff]
    %v920 = vld [vmem:[#allocation7 + $0x690] sm:$0xff]
    %v921 = vld [vmem:[#allocation7 + $0x698] sm:$0xff]
    %v922 = vld [vmem:[#allocation7 + $0x6a0] sm:$0xff]
    %v923 = vld [vmem:[#allocation7 + $0x6a8] sm:$0xff]
    %v924 = vld [vmem:[#allocation7 + $0x6b0] sm:$0xff]
    %v925 = vld [vmem:[#allocation7 + $0x6b8] sm:$0xff]
    %v926 = vld [vmem:[#allocation7 + $0x6c0] sm:$0xff]
    %v927 = vld [vmem:[#allocation7 + $0x6c8] sm:$0xff]
    %v928 = vld [vmem:[#allocation7 + $0x6d0] sm:$0xff]
    %v929 = vld [vmem:[#allocation7 + $0x6d8] sm:$0xff]
    %v930 = vld [vmem:[#allocation7 + $0x6e0] sm:$0xff]
    %v931 = vld [vmem:[#allocation7 + $0x6e8] sm:$0xff]
    %v932 = vld [vmem:[#allocation7 + $0x6f0] sm:$0xff]
    %v933 = vld [vmem:[#allocation7 + $0x6f8] sm:$0xff]
    %v934 = vld [vmem:[#allocation7 + $0x700] sm:$0xff]
    %v935 = vld [vmem:[#allocation7 + $0x708] sm:$0xff]
    %v936 = vld [vmem:[#allocation7 + $0x710] sm:$0xff]
    %v937 = vld [vmem:[#allocation7 + $0x718] sm:$0xff]
    %v938 = vld [vmem:[#allocation7 + $0x720] sm:$0xff]
    %v939 = vld [vmem:[#allocation7 + $0x728] sm:$0xff]
    %v940 = vld [vmem:[#allocation7 + $0x730] sm:$0xff]
    %v941 = vld [vmem:[#allocation7 + $0x738] sm:$0xff]
    %v942 = vld [vmem:[#allocation7 + $0x740] sm:$0xff]
    %v943 = vld [vmem:[#allocation7 + $0x748] sm:$0xff]
    %v944 = vld [vmem:[#allocation7 + $0x750] sm:$0xff]
    %v945 = vld [vmem:[#allocation7 + $0x758] sm:$0xff]
    %v946 = vld [vmem:[#allocation7 + $0x760] sm:$0xff]
    %v947 = vld [vmem:[#allocation7 + $0x768] sm:$0xff]
    %v948 = vld [vmem:[#allocation7 + $0x770] sm:$0xff]
    %v949 = vld [vmem:[#allocation7 + $0x778] sm:$0xff]
    %v950 = vld [vmem:[#allocation7 + $0x780] sm:$0xff]
    %v951 = vld [vmem:[#allocation7 + $0x788] sm:$0xff]
    %v952 = vld [vmem:[#allocation7 + $0x790] sm:$0xff]
    %v953 = vld [vmem:[#allocation7 + $0x798] sm:$0xff]
    %v954 = vld [vmem:[#allocation7 + $0x7a0] sm:$0xff]
    %v955 = vld [vmem:[#allocation7 + $0x7a8] sm:$0xff]
    %v956 = vld [vmem:[#allocation7 + $0x7b0] sm:$0xff]
    %v957 = vld [vmem:[#allocation7 + $0x7b8] sm:$0xff]
    %v958 = vld [vmem:[#allocation7 + $0x7c0] sm:$0xff]
    %v959 = vld [vmem:[#allocation7 + $0x7c8] sm:$0xff]
    %v960 = vld [vmem:[#allocation7 + $0x7d0] sm:$0xff]
    %v961 = vld [vmem:[#allocation7 + $0x7d8] sm:$0xff]
    %v962 = vld [vmem:[#allocation7 + $0x7e0] sm:$0xff]
    %v963 = vld [vmem:[#allocation7 + $0x7e8] sm:$0xff]
    %v964 = vld [vmem:[#allocation7 + $0x7f0] sm:$0xff]
    %v965 = vld [vmem:[#allocation7 + $0x7f8] sm:$0xff]
    %v966 = vld [vmem:[#allocation7 + $0x800] sm:$0xff]
    %v967 = vld [vmem:[#allocation7 + $0x808] sm:$0xff]
    %v968 = vld [vmem:[#allocation7 + $0x810] sm:$0xff]
    %v969 = vld [vmem:[#allocation7 + $0x818] sm:$0xff]
    %v970 = vld [vmem:[#allocation7 + $0x820] sm:$0xff]
    %v971 = vld [vmem:[#allocation7 + $0x828] sm:$0xff]
    %v972 = vld [vmem:[#allocation7 + $0x830] sm:$0xff]
    %v973 = vld [vmem:[#allocation7 + $0x838] sm:$0xff]
    %v974 = vld [vmem:[#allocation7 + $0x840] sm:$0xff]
    %v975 = vld [vmem:[#allocation7 + $0x848] sm:$0xff]
    %v976 = vld [vmem:[#allocation7 + $0x850] sm:$0xff]
    %v977 = vld [vmem:[#allocation7 + $0x858] sm:$0xff]
    %v978 = vld [vmem:[#allocation7 + $0x860] sm:$0xff]
    %v979 = vld [vmem:[#allocation7 + $0x868] sm:$0xff]
    %v980 = vld [vmem:[#allocation7 + $0x870] sm:$0xff]
    %v981 = vld [vmem:[#allocation7 + $0x878] sm:$0xff]
    %v982 = vld [vmem:[#allocation7 + $0x880] sm:$0xff]
    %v983 = vld [vmem:[#allocation7 + $0x888] sm:$0xff]
    %v984 = vld [vmem:[#allocation7 + $0x890] sm:$0xff]
    %v985 = vld [vmem:[#allocation7 + $0x898] sm:$0xff]
    %v986 = vld [vmem:[#allocation7 + $0x8a0] sm:$0xff]
    %v987 = vld [vmem:[#allocation7 + $0x8a8] sm:$0xff]
    %v988 = vld [vmem:[#allocation7 + $0x8b0] sm:$0xff]
    %v989 = vld [vmem:[#allocation7 + $0x8b8] sm:$0xff]
    %v990 = vld [vmem:[#allocation7 + $0x8c0] sm:$0xff]
    %v991 = vld [vmem:[#allocation7 + $0x8c8] sm:$0xff]
    %v992 = vld [vmem:[#allocation7 + $0x8d0] sm:$0xff]
    %v993 = vld [vmem:[#allocation7 + $0x8d8] sm:$0xff]
    %v994 = vld [vmem:[#allocation7 + $0x8e0] sm:$0xff]
    %v995 = vld [vmem:[#allocation7 + $0x8e8] sm:$0xff]
    %v996 = vld [vmem:[#allocation7 + $0x8f0] sm:$0xff]
    %v997 = vld [vmem:[#allocation7 + $0x8f8] sm:$0xff]
    %v998 = vld [vmem:[#allocation7 + $0x900] sm:$0xff]
    %v999 = vld [vmem:[#allocation7 + $0x908] sm:$0xff]
    %v1000 = vld [vmem:[#allocation7 + $0x910] sm:$0xff]
    %v1001 = vld [vmem:[#allocation7 + $0x918] sm:$0xff]
    %v1002 = vld [vmem:[#allocation7 + $0x920] sm:$0xff]
    %v1003 = vld [vmem:[#allocation7 + $0x928] sm:$0xff]
    %v1004 = vld [vmem:[#allocation7 + $0x930] sm:$0xff]
    %v1005 = vld [vmem:[#allocation7 + $0x938] sm:$0xff]
    %v1006 = vld [vmem:[#allocation7 + $0x940] sm:$0xff]
    %v1007 = vld [vmem:[#allocation7 + $0x948] sm:$0xff]
    %v1008 = vld [vmem:[#allocation7 + $0x950] sm:$0xff]
    %v1009 = vld [vmem:[#allocation7 + $0x958] sm:$0xff]
    %v1010 = vld [vmem:[#allocation7 + $0x960] sm:$0xff]
    %v1011 = vld [vmem:[#allocation7 + $0x968] sm:$0xff]
    %v1012 = vld [vmem:[#allocation7 + $0x970] sm:$0xff]
    %v1013 = vld [vmem:[#allocation7 + $0x978] sm:$0xff]
    %v1014 = vld [vmem:[#allocation7 + $0x980] sm:$0xff]
    %v1015 = vld [vmem:[#allocation7 + $0x988] sm:$0xff]
    %v1016 = vld [vmem:[#allocation7 + $0x990] sm:$0xff]
    %v1017 = vld [vmem:[#allocation7 + $0x998] sm:$0xff]
    %v1018 = vld [vmem:[#allocation7 + $0x9a0] sm:$0xff]
    %v1019 = vld [vmem:[#allocation7 + $0x9a8] sm:$0xff]
    %v1020 = vld [vmem:[#allocation7 + $0x9b0] sm:$0xff]
    %v1021 = vld [vmem:[#allocation7 + $0x9b8] sm:$0xff]
    %v1022 = vld [vmem:[#allocation7 + $0x9c0] sm:$0xff]
    %v1023 = vld [vmem:[#allocation7 + $0x9c8] sm:$0xff]
    %v1024 = vld [vmem:[#allocation7 + $0x9d0] sm:$0xff]
    %v1025 = vld [vmem:[#allocation7 + $0x9d8] sm:$0xff]
    %v1026 = vld [vmem:[#allocation7 + $0x9e0] sm:$0xff]
    %v1027 = vld [vmem:[#allocation7 + $0x9e8] sm:$0xff]
    %v1028 = vld [vmem:[#allocation7 + $0x9f0] sm:$0xff]
    %v1029 = vld [vmem:[#allocation7 + $0x9f8] sm:$0xff]
    %v1030 = vld [vmem:[#allocation7 + $0xa00] sm:$0xff]
    %v1031 = vld [vmem:[#allocation7 + $0xa08] sm:$0xff]
    %v1032 = vld [vmem:[#allocation7 + $0xa10] sm:$0xff]
    %v1033 = vld [vmem:[#allocation7 + $0xa18] sm:$0xff]
    %v1034 = vld [vmem:[#allocation7 + $0xa20] sm:$0xff]
    %v1035 = vld [vmem:[#allocation7 + $0xa28] sm:$0xff]
    %v1036 = vld [vmem:[#allocation7 + $0xa30] sm:$0xff]
    %v1037 = vld [vmem:[#allocation7 + $0xa38] sm:$0xff]
    %v1038 = vld [vmem:[#allocation7 + $0xa40] sm:$0xff]
    %v1039 = vld [vmem:[#allocation7 + $0xa48] sm:$0xff]
    %v1040 = vld [vmem:[#allocation7 + $0xa50] sm:$0xff]
    %v1041 = vld [vmem:[#allocation7 + $0xa58] sm:$0xff]
    %v1042 = vld [vmem:[#allocation7 + $0xa60] sm:$0xff]
    %v1043 = vld [vmem:[#allocation7 + $0xa68] sm:$0xff]
    %v1044 = vld [vmem:[#allocation7 + $0xa70] sm:$0xff]
    %v1045 = vld [vmem:[#allocation7 + $0xa78] sm:$0xff]
    %v1046 = vld [vmem:[#allocation7 + $0xa80] sm:$0xff]
    %v1047 = vld [vmem:[#allocation7 + $0xa88] sm:$0xff]
    %v1048 = vld [vmem:[#allocation7 + $0xa90] sm:$0xff]
    %v1049 = vld [vmem:[#allocation7 + $0xa98] sm:$0xff]
    %v1050 = vld [vmem:[#allocation7 + $0xaa0] sm:$0xff]
    %v1051 = vld [vmem:[#allocation7 + $0xaa8] sm:$0xff]
    %v1052 = vld [vmem:[#allocation7 + $0xab0] sm:$0xff]
    %v1053 = vld [vmem:[#allocation7 + $0xab8] sm:$0xff]
    %v1054 = vld [vmem:[#allocation7 + $0xac0] sm:$0xff]
    %v1055 = vld [vmem:[#allocation7 + $0xac8] sm:$0xff]
    %v1056 = vld [vmem:[#allocation7 + $0xad0] sm:$0xff]
    %v1057 = vld [vmem:[#allocation7 + $0xad8] sm:$0xff]
    %v1058 = vld [vmem:[#allocation7 + $0xae0] sm:$0xff]
    %v1059 = vld [vmem:[#allocation7 + $0xae8] sm:$0xff]
    %v1060 = vld [vmem:[#allocation7 + $0xaf0] sm:$0xff]
    %v1061 = vld [vmem:[#allocation7 + $0xaf8] sm:$0xff]
    %v1062 = vld [vmem:[#allocation7 + $0xb00] sm:$0xff]
    %v1063 = vld [vmem:[#allocation7 + $0xb08] sm:$0xff]
    %v1064 = vld [vmem:[#allocation7 + $0xb10] sm:$0xff]
    %v1065 = vld [vmem:[#allocation7 + $0xb18] sm:$0xff]
    %v1066 = vld [vmem:[#allocation7 + $0xb20] sm:$0xff]
    %v1067 = vld [vmem:[#allocation7 + $0xb28] sm:$0xff]
    %v1068 = vld [vmem:[#allocation7 + $0xb30] sm:$0xff]
    %v1069 = vld [vmem:[#allocation7 + $0xb38] sm:$0xff]
    %v1070 = vld [vmem:[#allocation7 + $0xb40] sm:$0xff]
    %v1071 = vld [vmem:[#allocation7 + $0xb48] sm:$0xff]
    %v1072 = vld [vmem:[#allocation7 + $0xb50] sm:$0xff]
    %v1073 = vld [vmem:[#allocation7 + $0xb58] sm:$0xff]
    %v1074 = vld [vmem:[#allocation7 + $0xb60] sm:$0xff]
    %v1075 = vld [vmem:[#allocation7 + $0xb68] sm:$0xff]
    %v1076 = vld [vmem:[#allocation7 + $0xb70] sm:$0xff]
    %v1077 = vld [vmem:[#allocation7 + $0xb78] sm:$0xff]
    %v1078 = vld [vmem:[#allocation7 + $0xb80] sm:$0xff]
    %v1079 = vld [vmem:[#allocation7 + $0xb88] sm:$0xff]
    %v1080 = vld [vmem:[#allocation7 + $0xb90] sm:$0xff]
    %v1081 = vld [vmem:[#allocation7 + $0xb98] sm:$0xff]
    %v1082 = vld [vmem:[#allocation7 + $0xba0] sm:$0xff]
    %v1083 = vld [vmem:[#allocation7 + $0xba8] sm:$0xff]
    %v1084 = vld [vmem:[#allocation7 + $0xbb0] sm:$0xff]
    %v1085 = vld [vmem:[#allocation7 + $0xbb8] sm:$0xff]
    %v1086 = vld [vmem:[#allocation7 + $0xbc0] sm:$0xff]
    %v1087 = vld [vmem:[#allocation7 + $0xbc8] sm:$0xff]
    %v1088 = vld [vmem:[#allocation7 + $0xbd0] sm:$0xff]
    %v1089 = vld [vmem:[#allocation7 + $0xbd8] sm:$0xff]
    %v1090 = vld [vmem:[#allocation7 + $0xbe0] sm:$0xff]
    %v1091 = vld [vmem:[#allocation7 + $0xbe8] sm:$0xff]
    %v1092 = vld [vmem:[#allocation7 + $0xbf0] sm:$0xff]
    %v1093 = vld [vmem:[#allocation7 + $0xbf8] sm:$0xff]
    %v1094 = vld [vmem:[#allocation7 + $0xc00] sm:$0xff]
    %v1095 = vld [vmem:[#allocation7 + $0xc08] sm:$0xff]
    %v1096 = vld [vmem:[#allocation7 + $0xc10] sm:$0xff]
    %v1097 = vld [vmem:[#allocation7 + $0xc18] sm:$0xff]
    %v1098 = vld [vmem:[#allocation7 + $0xc20] sm:$0xff]
    %v1099 = vld [vmem:[#allocation7 + $0xc28] sm:$0xff]
    %v1100 = vld [vmem:[#allocation7 + $0xc30] sm:$0xff]
    %v1101 = vld [vmem:[#allocation7 + $0xc38] sm:$0xff]
    %v1102 = vld [vmem:[#allocation7 + $0xc40] sm:$0xff]
    %v1103 = vld [vmem:[#allocation7 + $0xc48] sm:$0xff]
    %v1104 = vld [vmem:[#allocation7 + $0xc50] sm:$0xff]
    %v1105 = vld [vmem:[#allocation7 + $0xc58] sm:$0xff]
    %v1106 = vld [vmem:[#allocation7 + $0xc60] sm:$0xff]
    %v1107 = vld [vmem:[#allocation7 + $0xc68] sm:$0xff]
    %v1108 = vld [vmem:[#allocation7 + $0xc70] sm:$0xff]
    %v1109 = vld [vmem:[#allocation7 + $0xc78] sm:$0xff]
    %v1110 = vld [vmem:[#allocation7 + $0xc80] sm:$0xff]
    %v1111 = vld [vmem:[#allocation7 + $0xc88] sm:$0xff]
    %v1112 = vld [vmem:[#allocation7 + $0xc90] sm:$0xff]
    %v1113 = vld [vmem:[#allocation7 + $0xc98] sm:$0xff]
    %v1114 = vld [vmem:[#allocation7 + $0xca0] sm:$0xff]
    %v1115 = vld [vmem:[#allocation7 + $0xca8] sm:$0xff]
    %v1116 = vld [vmem:[#allocation7 + $0xcb0] sm:$0xff]
    %v1117 = vld [vmem:[#allocation7 + $0xcb8] sm:$0xff]
    %v1118 = vld [vmem:[#allocation7 + $0xcc0] sm:$0xff]
    %v1119 = vld [vmem:[#allocation7 + $0xcc8] sm:$0xff]
    %v1120 = vld [vmem:[#allocation7 + $0xcd0] sm:$0xff]
    %v1121 = vld [vmem:[#allocation7 + $0xcd8] sm:$0xff]
    %v1122 = vld [vmem:[#allocation7 + $0xce0] sm:$0xff]
    %v1123 = vld [vmem:[#allocation7 + $0xce8] sm:$0xff]
    %v1124 = vld [vmem:[#allocation7 + $0xcf0] sm:$0xff]
    %v1125 = vld [vmem:[#allocation7 + $0xcf8] sm:$0xff]
    %v1126 = vld [vmem:[#allocation7 + $0xd00] sm:$0xff]
    %v1127 = vld [vmem:[#allocation7 + $0xd08] sm:$0xff]
    %v1128 = vld [vmem:[#allocation7 + $0xd10] sm:$0xff]
    %v1129 = vld [vmem:[#allocation7 + $0xd18] sm:$0xff]
    %v1130 = vld [vmem:[#allocation7 + $0xd20] sm:$0xff]
    %v1131 = vld [vmem:[#allocation7 + $0xd28] sm:$0xff]
    %v1132 = vld [vmem:[#allocation7 + $0xd30] sm:$0xff]
    %v1133 = vld [vmem:[#allocation7 + $0xd38] sm:$0xff]
    %v1134 = vld [vmem:[#allocation7 + $0xd40] sm:$0xff]
    %v1135 = vld [vmem:[#allocation7 + $0xd48] sm:$0xff]
    %v1136 = vld [vmem:[#allocation7 + $0xd50] sm:$0xff]
    %v1137 = vld [vmem:[#allocation7 + $0xd58] sm:$0xff]
    %v1138 = vld [vmem:[#allocation7 + $0xd60] sm:$0xff]
    %v1139 = vld [vmem:[#allocation7 + $0xd68] sm:$0xff]
    %v1140 = vld [vmem:[#allocation7 + $0xd70] sm:$0xff]
    %v1141 = vld [vmem:[#allocation7 + $0xd78] sm:$0xff]
    %v1142 = vld [vmem:[#allocation7 + $0xd80] sm:$0xff]
    %v1143 = vld [vmem:[#allocation7 + $0xd88] sm:$0xff]
    %v1144 = vld [vmem:[#allocation7 + $0xd90] sm:$0xff]
    %v1145 = vld [vmem:[#allocation7 + $0xd98] sm:$0xff]
    %v1146 = vld [vmem:[#allocation7 + $0xda0] sm:$0xff]
    %v1147 = vld [vmem:[#allocation7 + $0xda8] sm:$0xff]
    %v1148 = vld [vmem:[#allocation7 + $0xdb0] sm:$0xff]
    %v1149 = vld [vmem:[#allocation7 + $0xdb8] sm:$0xff]
    %v1150 = vld [vmem:[#allocation7 + $0xdc0] sm:$0xff]
    %v1151 = vld [vmem:[#allocation7 + $0xdc8] sm:$0xff]
    %v1152 = vld [vmem:[#allocation7 + $0xdd0] sm:$0xff]
    %v1153 = vld [vmem:[#allocation7 + $0xdd8] sm:$0xff]
    %v1154 = vld [vmem:[#allocation7 + $0xde0] sm:$0xff]
    %v1155 = vld [vmem:[#allocation7 + $0xde8] sm:$0xff]
    %v1156 = vld [vmem:[#allocation7 + $0xdf0] sm:$0xff]
    %v1157 = vld [vmem:[#allocation7 + $0xdf8] sm:$0xff]
    %v1158 = vld [vmem:[#allocation7 + $0xe00] sm:$0xff]
    %v1159 = vld [vmem:[#allocation7 + $0xe08] sm:$0xff]
    %v1160 = vld [vmem:[#allocation7 + $0xe10] sm:$0xff]
    %v1161 = vld [vmem:[#allocation7 + $0xe18] sm:$0xff]
    %v1162 = vld [vmem:[#allocation7 + $0xe20] sm:$0xff]
    %v1163 = vld [vmem:[#allocation7 + $0xe28] sm:$0xff]
    %v1164 = vld [vmem:[#allocation7 + $0xe30] sm:$0xff]
    %v1165 = vld [vmem:[#allocation7 + $0xe38] sm:$0xff]
    %v1166 = vld [vmem:[#allocation7 + $0xe40] sm:$0xff]
    %v1167 = vld [vmem:[#allocation7 + $0xe48] sm:$0xff]
    %v1168 = vld [vmem:[#allocation7 + $0xe50] sm:$0xff]
    %v1169 = vld [vmem:[#allocation7 + $0xe58] sm:$0xff]
    %v1170 = vld [vmem:[#allocation7 + $0xe60] sm:$0xff]
    %v1171 = vld [vmem:[#allocation7 + $0xe68] sm:$0xff]
    %v1172 = vld [vmem:[#allocation7 + $0xe70] sm:$0xff]
    %v1173 = vld [vmem:[#allocation7 + $0xe78] sm:$0xff]
    %v1174 = vld [vmem:[#allocation7 + $0xe80] sm:$0xff]
    %v1175 = vld [vmem:[#allocation7 + $0xe88] sm:$0xff]
    %v1176 = vld [vmem:[#allocation7 + $0xe90] sm:$0xff]
    %v1177 = vld [vmem:[#allocation7 + $0xe98] sm:$0xff]
    %v1178 = vld [vmem:[#allocation7 + $0xea0] sm:$0xff]
    %v1179 = vld [vmem:[#allocation7 + $0xea8] sm:$0xff]
    %v1180 = vld [vmem:[#allocation7 + $0xeb0] sm:$0xff]
    %v1181 = vld [vmem:[#allocation7 + $0xeb8] sm:$0xff]
    %v1182 = vld [vmem:[#allocation7 + $0xec0] sm:$0xff]
    %v1183 = vld [vmem:[#allocation7 + $0xec8] sm:$0xff]
    %v1184 = vld [vmem:[#allocation7 + $0xed0] sm:$0xff]
    %v1185 = vld [vmem:[#allocation7 + $0xed8] sm:$0xff]
    %v1186 = vld [vmem:[#allocation7 + $0xee0] sm:$0xff]
    %v1187 = vld [vmem:[#allocation7 + $0xee8] sm:$0xff]
    %v1188 = vld [vmem:[#allocation7 + $0xef0] sm:$0xff]
    %v1189 = vld [vmem:[#allocation7 + $0xef8] sm:$0xff]
    %v1190 = vld [vmem:[#allocation8] sm:$0xf]
    %v1192 = vlaneseq
    %v1193 = vshrl.u32 %v1192, 7
    %v1194 = vsub.s32 0, %v1193
    %v1195 = vrot.slane %v1190, %v1194
    %v1196 = vlaneseq
    %v1197 = vshrl.u32 %v1196, 7
    %v1198 = vsub.s32 1, %v1197
    %v1199 = vrot.slane %v1190, %v1198
    %v1200 = vlaneseq
    %v1201 = vshrl.u32 %v1200, 7
    %v1202 = vsub.s32 2, %v1201
    %v1203 = vrot.slane %v1190, %v1202
    %v1204 = vlaneseq
    %v1205 = vshrl.u32 %v1204, 7
    %v1206 = vsub.s32 3, %v1205
    %v1207 = vrot.slane %v1190, %v1206
    %v1692 = vunpack.c.l.b16 %v710
    %v1693 = vunpack.c.h.b16 %v710
    %v1694 = vunpack.c.l.b16 %v711
    %v1695 = vunpack.c.h.b16 %v711
    %v1696 = vunpack.c.l.b16 %v712
    %v1697 = vunpack.c.h.b16 %v712
    %v1698 = vunpack.c.l.b16 %v713
    %v1699 = vunpack.c.h.b16 %v713
    %v1700 = vunpack.c.l.b16 %v714
    %v1701 = vunpack.c.h.b16 %v714
    %v1702 = vunpack.c.l.b16 %v715
    %v1703 = vunpack.c.h.b16 %v715
    %v1704 = vunpack.c.l.b16 %v716
    %v1705 = vunpack.c.h.b16 %v716
    %v1706 = vunpack.c.l.b16 %v717
    %v1707 = vunpack.c.h.b16 %v717
    %v1708 = vunpack.c.l.b16 %v718
    %v1709 = vunpack.c.h.b16 %v718
    %v1710 = vunpack.c.l.b16 %v719
    %v1711 = vunpack.c.h.b16 %v719
    %v1712 = vunpack.c.l.b16 %v720
    %v1713 = vunpack.c.h.b16 %v720
    %v1714 = vunpack.c.l.b16 %v721
    %v1715 = vunpack.c.h.b16 %v721
    %v1716 = vunpack.c.l.b16 %v722
    %v1717 = vunpack.c.h.b16 %v722
    %v1718 = vunpack.c.l.b16 %v723
    %v1719 = vunpack.c.h.b16 %v723
    %v1720 = vunpack.c.l.b16 %v724
    %v1721 = vunpack.c.h.b16 %v724
    %v1722 = vunpack.c.l.b16 %v725
    %v1723 = vunpack.c.h.b16 %v725
    %v1724 = vunpack.c.l.b16 %v726
    %v1725 = vunpack.c.h.b16 %v726
    %v1726 = vunpack.c.l.b16 %v727
    %v1727 = vunpack.c.h.b16 %v727
    %v1728 = vunpack.c.l.b16 %v728
    %v1729 = vunpack.c.h.b16 %v728
    %v1730 = vunpack.c.l.b16 %v729
    %v1731 = vunpack.c.h.b16 %v729
    %v1732 = vunpack.c.l.b16 %v730
    %v1733 = vunpack.c.h.b16 %v730
    %v1734 = vunpack.c.l.b16 %v731
    %v1735 = vunpack.c.h.b16 %v731
    %v1736 = vunpack.c.l.b16 %v732
    %v1737 = vunpack.c.h.b16 %v732
    %v1738 = vunpack.c.l.b16 %v733
    %v1739 = vunpack.c.h.b16 %v733
    %v1740 = vunpack.c.l.b16 %v734
    %v1741 = vunpack.c.h.b16 %v734
    %v1742 = vunpack.c.l.b16 %v735
    %v1743 = vunpack.c.h.b16 %v735
    %v1744 = vunpack.c.l.b16 %v736
    %v1745 = vunpack.c.h.b16 %v736
    %v1746 = vunpack.c.l.b16 %v737
    %v1747 = vunpack.c.h.b16 %v737
    %v1748 = vunpack.c.l.b16 %v738
    %v1749 = vunpack.c.h.b16 %v738
    %v1750 = vunpack.c.l.b16 %v739
    %v1751 = vunpack.c.h.b16 %v739
    %v1752 = vunpack.c.l.b16 %v740
    %v1753 = vunpack.c.h.b16 %v740
    %v1754 = vunpack.c.l.b16 %v741
    %v1755 = vunpack.c.h.b16 %v741
    %v1756 = vunpack.c.l.b16 %v742
    %v1757 = vunpack.c.h.b16 %v742
    %v1758 = vunpack.c.l.b16 %v743
    %v1759 = vunpack.c.h.b16 %v743
    %v1760 = vunpack.c.l.b16 %v744
    %v1761 = vunpack.c.h.b16 %v744
    %v1762 = vunpack.c.l.b16 %v745
    %v1763 = vunpack.c.h.b16 %v745
    %v1764 = vunpack.c.l.b16 %v746
    %v1765 = vunpack.c.h.b16 %v746
    %v1766 = vunpack.c.l.b16 %v747
    %v1767 = vunpack.c.h.b16 %v747
    %v1768 = vunpack.c.l.b16 %v748
    %v1769 = vunpack.c.h.b16 %v748
    %v1770 = vunpack.c.l.b16 %v749
    %v1771 = vunpack.c.h.b16 %v749
    %v1772 = vunpack.c.l.b16 %v750
    %v1773 = vunpack.c.h.b16 %v750
    %v1774 = vunpack.c.l.b16 %v751
    %v1775 = vunpack.c.h.b16 %v751
    %v1776 = vunpack.c.l.b16 %v752
    %v1777 = vunpack.c.h.b16 %v752
    %v1778 = vunpack.c.l.b16 %v753
    %v1779 = vunpack.c.h.b16 %v753
    %v1780 = vunpack.c.l.b16 %v754
    %v1781 = vunpack.c.h.b16 %v754
    %v1782 = vunpack.c.l.b16 %v755
    %v1783 = vunpack.c.h.b16 %v755
    %v1784 = vunpack.c.l.b16 %v756
    %v1785 = vunpack.c.h.b16 %v756
    %v1786 = vunpack.c.l.b16 %v757
    %v1787 = vunpack.c.h.b16 %v757
    %v1788 = vunpack.c.l.b16 %v758
    %v1789 = vunpack.c.h.b16 %v758
    %v1790 = vunpack.c.l.b16 %v759
    %v1791 = vunpack.c.h.b16 %v759
    %v1792 = vunpack.c.l.b16 %v760
    %v1793 = vunpack.c.h.b16 %v760
    %v1794 = vunpack.c.l.b16 %v761
    %v1795 = vunpack.c.h.b16 %v761
    %v1796 = vunpack.c.l.b16 %v762
    %v1797 = vunpack.c.h.b16 %v762
    %v1798 = vunpack.c.l.b16 %v763
    %v1799 = vunpack.c.h.b16 %v763
    %v1800 = vunpack.c.l.b16 %v764
    %v1801 = vunpack.c.h.b16 %v764
    %v1802 = vunpack.c.l.b16 %v765
    %v1803 = vunpack.c.h.b16 %v765
    %v1804 = vunpack.c.l.b16 %v766
    %v1805 = vunpack.c.h.b16 %v766
    %v1806 = vunpack.c.l.b16 %v767
    %v1807 = vunpack.c.h.b16 %v767
    %v1808 = vunpack.c.l.b16 %v768
    %v1809 = vunpack.c.h.b16 %v768
    %v1810 = vunpack.c.l.b16 %v769
    %v1811 = vunpack.c.h.b16 %v769
    %v1812 = vunpack.c.l.b16 %v770
    %v1813 = vunpack.c.h.b16 %v770
    %v1814 = vunpack.c.l.b16 %v771
    %v1815 = vunpack.c.h.b16 %v771
    %v1816 = vunpack.c.l.b16 %v772
    %v1817 = vunpack.c.h.b16 %v772
    %v1818 = vunpack.c.l.b16 %v773
    %v1819 = vunpack.c.h.b16 %v773
    %v1820 = vunpack.c.l.b16 %v774
    %v1821 = vunpack.c.h.b16 %v774
    %v1822 = vunpack.c.l.b16 %v775
    %v1823 = vunpack.c.h.b16 %v775
    %v1824 = vunpack.c.l.b16 %v776
    %v1825 = vunpack.c.h.b16 %v776
    %v1826 = vunpack.c.l.b16 %v777
    %v1827 = vunpack.c.h.b16 %v777
    %v1828 = vunpack.c.l.b16 %v778
    %v1829 = vunpack.c.h.b16 %v778
    %v1830 = vunpack.c.l.b16 %v779
    %v1831 = vunpack.c.h.b16 %v779
    %v1832 = vunpack.c.l.b16 %v780
    %v1833 = vunpack.c.h.b16 %v780
    %v1834 = vunpack.c.l.b16 %v781
    %v1835 = vunpack.c.h.b16 %v781
    %v1836 = vunpack.c.l.b16 %v782
    %v1837 = vunpack.c.h.b16 %v782
    %v1838 = vunpack.c.l.b16 %v783
    %v1839 = vunpack.c.h.b16 %v783
    %v1840 = vunpack.c.l.b16 %v784
    %v1841 = vunpack.c.h.b16 %v784
    %v1842 = vunpack.c.l.b16 %v785
    %v1843 = vunpack.c.h.b16 %v785
    %v1844 = vunpack.c.l.b16 %v786
    %v1845 = vunpack.c.h.b16 %v786
    %v1846 = vunpack.c.l.b16 %v787
    %v1847 = vunpack.c.h.b16 %v787
    %v1848 = vunpack.c.l.b16 %v788
    %v1849 = vunpack.c.h.b16 %v788
    %v1850 = vunpack.c.l.b16 %v789
    %v1851 = vunpack.c.h.b16 %v789
    %v1852 = vunpack.c.l.b16 %v790
    %v1853 = vunpack.c.h.b16 %v790
    %v1854 = vunpack.c.l.b16 %v791
    %v1855 = vunpack.c.h.b16 %v791
    %v1856 = vunpack.c.l.b16 %v792
    %v1857 = vunpack.c.h.b16 %v792
    %v1858 = vunpack.c.l.b16 %v793
    %v1859 = vunpack.c.h.b16 %v793
    %v1860 = vunpack.c.l.b16 %v794
    %v1861 = vunpack.c.h.b16 %v794
    %v1862 = vunpack.c.l.b16 %v795
    %v1863 = vunpack.c.h.b16 %v795
    %v1864 = vunpack.c.l.b16 %v796
    %v1865 = vunpack.c.h.b16 %v796
    %v1866 = vunpack.c.l.b16 %v797
    %v1867 = vunpack.c.h.b16 %v797
    %v1868 = vunpack.c.l.b16 %v798
    %v1869 = vunpack.c.h.b16 %v798
    %v1870 = vunpack.c.l.b16 %v799
    %v1871 = vunpack.c.h.b16 %v799
    %v1872 = vunpack.c.l.b16 %v800
    %v1873 = vunpack.c.h.b16 %v800
    %v1874 = vunpack.c.l.b16 %v801
    %v1875 = vunpack.c.h.b16 %v801
    %v1876 = vunpack.c.l.b16 %v802
    %v1877 = vunpack.c.h.b16 %v802
    %v1878 = vunpack.c.l.b16 %v803
    %v1879 = vunpack.c.h.b16 %v803
    %v1880 = vunpack.c.l.b16 %v804
    %v1881 = vunpack.c.h.b16 %v804
    %v1882 = vunpack.c.l.b16 %v805
    %v1883 = vunpack.c.h.b16 %v805
    %v1884 = vunpack.c.l.b16 %v806
    %v1885 = vunpack.c.h.b16 %v806
    %v1886 = vunpack.c.l.b16 %v807
    %v1887 = vunpack.c.h.b16 %v807
    %v1888 = vunpack.c.l.b16 %v808
    %v1889 = vunpack.c.h.b16 %v808
    %v1890 = vunpack.c.l.b16 %v809
    %v1891 = vunpack.c.h.b16 %v809
    %v1892 = vunpack.c.l.b16 %v810
    %v1893 = vunpack.c.h.b16 %v810
    %v1894 = vunpack.c.l.b16 %v811
    %v1895 = vunpack.c.h.b16 %v811
    %v1896 = vunpack.c.l.b16 %v812
    %v1897 = vunpack.c.h.b16 %v812
    %v1898 = vunpack.c.l.b16 %v813
    %v1899 = vunpack.c.h.b16 %v813
    %v1900 = vunpack.c.l.b16 %v814
    %v1901 = vunpack.c.h.b16 %v814
    %v1902 = vunpack.c.l.b16 %v815
    %v1903 = vunpack.c.h.b16 %v815
    %v1904 = vunpack.c.l.b16 %v816
    %v1905 = vunpack.c.h.b16 %v816
    %v1906 = vunpack.c.l.b16 %v817
    %v1907 = vunpack.c.h.b16 %v817
    %v1908 = vunpack.c.l.b16 %v818
    %v1909 = vunpack.c.h.b16 %v818
    %v1910 = vunpack.c.l.b16 %v819
    %v1911 = vunpack.c.h.b16 %v819
    %v1912 = vunpack.c.l.b16 %v820
    %v1913 = vunpack.c.h.b16 %v820
    %v1914 = vunpack.c.l.b16 %v821
    %v1915 = vunpack.c.h.b16 %v821
    %v1916 = vunpack.c.l.b16 %v822
    %v1917 = vunpack.c.h.b16 %v822
    %v1918 = vunpack.c.l.b16 %v823
    %v1919 = vunpack.c.h.b16 %v823
    %v1920 = vunpack.c.l.b16 %v824
    %v1921 = vunpack.c.h.b16 %v824
    %v1922 = vunpack.c.l.b16 %v825
    %v1923 = vunpack.c.h.b16 %v825
    %v1924 = vunpack.c.l.b16 %v826
    %v1925 = vunpack.c.h.b16 %v826
    %v1926 = vunpack.c.l.b16 %v827
    %v1927 = vunpack.c.h.b16 %v827
    %v1928 = vunpack.c.l.b16 %v828
    %v1929 = vunpack.c.h.b16 %v828
    %v1930 = vunpack.c.l.b16 %v829
    %v1931 = vunpack.c.h.b16 %v829
    %v1932 = vunpack.c.l.b16 %v830
    %v1933 = vunpack.c.h.b16 %v830
    %v1934 = vunpack.c.l.b16 %v831
    %v1935 = vunpack.c.h.b16 %v831
    %v1936 = vunpack.c.l.b16 %v832
    %v1937 = vunpack.c.h.b16 %v832
    %v1938 = vunpack.c.l.b16 %v833
    %v1939 = vunpack.c.h.b16 %v833
    %v1940 = vunpack.c.l.b16 %v834
    %v1941 = vunpack.c.h.b16 %v834
    %v1942 = vunpack.c.l.b16 %v835
    %v1943 = vunpack.c.h.b16 %v835
    %v1944 = vunpack.c.l.b16 %v836
    %v1945 = vunpack.c.h.b16 %v836
    %v1946 = vunpack.c.l.b16 %v837
    %v1947 = vunpack.c.h.b16 %v837
    %v1948 = vunpack.c.l.b16 %v838
    %v1949 = vunpack.c.h.b16 %v838
    %v1950 = vunpack.c.l.b16 %v839
    %v1951 = vunpack.c.h.b16 %v839
    %v1952 = vunpack.c.l.b16 %v840
    %v1953 = vunpack.c.h.b16 %v840
    %v1954 = vunpack.c.l.b16 %v841
    %v1955 = vunpack.c.h.b16 %v841
    %v1956 = vunpack.c.l.b16 %v842
    %v1957 = vunpack.c.h.b16 %v842
    %v1958 = vunpack.c.l.b16 %v843
    %v1959 = vunpack.c.h.b16 %v843
    %v1960 = vunpack.c.l.b16 %v844
    %v1961 = vunpack.c.h.b16 %v844
    %v1962 = vunpack.c.l.b16 %v845
    %v1963 = vunpack.c.h.b16 %v845
    %v1964 = vunpack.c.l.b16 %v846
    %v1965 = vunpack.c.h.b16 %v846
    %v1966 = vunpack.c.l.b16 %v847
    %v1967 = vunpack.c.h.b16 %v847
    %v1968 = vunpack.c.l.b16 %v848
    %v1969 = vunpack.c.h.b16 %v848
    %v1970 = vunpack.c.l.b16 %v849
    %v1971 = vunpack.c.h.b16 %v849
    %v1972 = vunpack.c.l.b16 %v850
    %v1973 = vunpack.c.h.b16 %v850
    %v1974 = vunpack.c.l.b16 %v851
    %v1975 = vunpack.c.h.b16 %v851
    %v1976 = vunpack.c.l.b16 %v852
    %v1977 = vunpack.c.h.b16 %v852
    %v1978 = vunpack.c.l.b16 %v853
    %v1979 = vunpack.c.h.b16 %v853
    %v1980 = vunpack.c.l.b16 %v854
    %v1981 = vunpack.c.h.b16 %v854
    %v1982 = vunpack.c.l.b16 %v855
    %v1983 = vunpack.c.h.b16 %v855
    %v1984 = vunpack.c.l.b16 %v856
    %v1985 = vunpack.c.h.b16 %v856
    %v1986 = vunpack.c.l.b16 %v857
    %v1987 = vunpack.c.h.b16 %v857
    %v1988 = vunpack.c.l.b16 %v858
    %v1989 = vunpack.c.h.b16 %v858
    %v1990 = vunpack.c.l.b16 %v859
    %v1991 = vunpack.c.h.b16 %v859
    %v1992 = vunpack.c.l.b16 %v860
    %v1993 = vunpack.c.h.b16 %v860
    %v1994 = vunpack.c.l.b16 %v861
    %v1995 = vunpack.c.h.b16 %v861
    %v1996 = vunpack.c.l.b16 %v862
    %v1997 = vunpack.c.h.b16 %v862
    %v1998 = vunpack.c.l.b16 %v863
    %v1999 = vunpack.c.h.b16 %v863
    %v2000 = vunpack.c.l.b16 %v864
    %v2001 = vunpack.c.h.b16 %v864
    %v2002 = vunpack.c.l.b16 %v865
    %v2003 = vunpack.c.h.b16 %v865
    %v2004 = vunpack.c.l.b16 %v866
    %v2005 = vunpack.c.h.b16 %v866
    %v2006 = vunpack.c.l.b16 %v867
    %v2007 = vunpack.c.h.b16 %v867
    %v2008 = vunpack.c.l.b16 %v868
    %v2009 = vunpack.c.h.b16 %v868
    %v2010 = vunpack.c.l.b16 %v869
    %v2011 = vunpack.c.h.b16 %v869
    %v2012 = vunpack.c.l.b16 %v870
    %v2013 = vunpack.c.h.b16 %v870
    %v2014 = vunpack.c.l.b16 %v871
    %v2015 = vunpack.c.h.b16 %v871
    %v2016 = vunpack.c.l.b16 %v872
    %v2017 = vunpack.c.h.b16 %v872
    %v2018 = vunpack.c.l.b16 %v873
    %v2019 = vunpack.c.h.b16 %v873
    %v2020 = vunpack.c.l.b16 %v874
    %v2021 = vunpack.c.h.b16 %v874
    %v2022 = vunpack.c.l.b16 %v875
    %v2023 = vunpack.c.h.b16 %v875
    %v2024 = vunpack.c.l.b16 %v876
    %v2025 = vunpack.c.h.b16 %v876
    %v2026 = vunpack.c.l.b16 %v877
    %v2027 = vunpack.c.h.b16 %v877
    %v2028 = vunpack.c.l.b16 %v878
    %v2029 = vunpack.c.h.b16 %v878
    %v2030 = vunpack.c.l.b16 %v879
    %v2031 = vunpack.c.h.b16 %v879
    %v2032 = vunpack.c.l.b16 %v880
    %v2033 = vunpack.c.h.b16 %v880
    %v2034 = vunpack.c.l.b16 %v881
    %v2035 = vunpack.c.h.b16 %v881
    %v2036 = vunpack.c.l.b16 %v882
    %v2037 = vunpack.c.h.b16 %v882
    %v2038 = vunpack.c.l.b16 %v883
    %v2039 = vunpack.c.h.b16 %v883
    %v2040 = vunpack.c.l.b16 %v884
    %v2041 = vunpack.c.h.b16 %v884
    %v2042 = vunpack.c.l.b16 %v885
    %v2043 = vunpack.c.h.b16 %v885
    %v2044 = vunpack.c.l.b16 %v886
    %v2045 = vunpack.c.h.b16 %v886
    %v2046 = vunpack.c.l.b16 %v887
    %v2047 = vunpack.c.h.b16 %v887
    %v2048 = vunpack.c.l.b16 %v888
    %v2049 = vunpack.c.h.b16 %v888
    %v2050 = vunpack.c.l.b16 %v889
    %v2051 = vunpack.c.h.b16 %v889
    %v2052 = vunpack.c.l.b16 %v890
    %v2053 = vunpack.c.h.b16 %v890
    %v2054 = vunpack.c.l.b16 %v891
    %v2055 = vunpack.c.h.b16 %v891
    %v2056 = vunpack.c.l.b16 %v892
    %v2057 = vunpack.c.h.b16 %v892
    %v2058 = vunpack.c.l.b16 %v893
    %v2059 = vunpack.c.h.b16 %v893
    %v2060 = vunpack.c.l.b16 %v894
    %v2061 = vunpack.c.h.b16 %v894
    %v2062 = vunpack.c.l.b16 %v895
    %v2063 = vunpack.c.h.b16 %v895
    %v2064 = vunpack.c.l.b16 %v896
    %v2065 = vunpack.c.h.b16 %v896
    %v2066 = vunpack.c.l.b16 %v897
    %v2067 = vunpack.c.h.b16 %v897
    %v2068 = vunpack.c.l.b16 %v898
    %v2069 = vunpack.c.h.b16 %v898
    %v2070 = vunpack.c.l.b16 %v899
    %v2071 = vunpack.c.h.b16 %v899
    %v2072 = vunpack.c.l.b16 %v900
    %v2073 = vunpack.c.h.b16 %v900
    %v2074 = vunpack.c.l.b16 %v901
    %v2075 = vunpack.c.h.b16 %v901
    %v2076 = vunpack.c.l.b16 %v902
    %v2077 = vunpack.c.h.b16 %v902
    %v2078 = vunpack.c.l.b16 %v903
    %v2079 = vunpack.c.h.b16 %v903
    %v2080 = vunpack.c.l.b16 %v904
    %v2081 = vunpack.c.h.b16 %v904
    %v2082 = vunpack.c.l.b16 %v905
    %v2083 = vunpack.c.h.b16 %v905
    %v2084 = vunpack.c.l.b16 %v906
    %v2085 = vunpack.c.h.b16 %v906
    %v2086 = vunpack.c.l.b16 %v907
    %v2087 = vunpack.c.h.b16 %v907
    %v2088 = vunpack.c.l.b16 %v908
    %v2089 = vunpack.c.h.b16 %v908
    %v2090 = vunpack.c.l.b16 %v909
    %v2091 = vunpack.c.h.b16 %v909
    %v2092 = vunpack.c.l.b16 %v910
    %v2093 = vunpack.c.h.b16 %v910
    %v2094 = vunpack.c.l.b16 %v911
    %v2095 = vunpack.c.h.b16 %v911
    %v2096 = vunpack.c.l.b16 %v912
    %v2097 = vunpack.c.h.b16 %v912
    %v2098 = vunpack.c.l.b16 %v913
    %v2099 = vunpack.c.h.b16 %v913
    %v2100 = vunpack.c.l.b16 %v914
    %v2101 = vunpack.c.h.b16 %v914
    %v2102 = vunpack.c.l.b16 %v915
    %v2103 = vunpack.c.h.b16 %v915
    %v2104 = vunpack.c.l.b16 %v916
    %v2105 = vunpack.c.h.b16 %v916
    %v2106 = vunpack.c.l.b16 %v917
    %v2107 = vunpack.c.h.b16 %v917
    %v2108 = vunpack.c.l.b16 %v918
    %v2109 = vunpack.c.h.b16 %v918
    %v2110 = vunpack.c.l.b16 %v919
    %v2111 = vunpack.c.h.b16 %v919
    %v2112 = vunpack.c.l.b16 %v920
    %v2113 = vunpack.c.h.b16 %v920
    %v2114 = vunpack.c.l.b16 %v921
    %v2115 = vunpack.c.h.b16 %v921
    %v2116 = vunpack.c.l.b16 %v922
    %v2117 = vunpack.c.h.b16 %v922
    %v2118 = vunpack.c.l.b16 %v923
    %v2119 = vunpack.c.h.b16 %v923
    %v2120 = vunpack.c.l.b16 %v924
    %v2121 = vunpack.c.h.b16 %v924
    %v2122 = vunpack.c.l.b16 %v925
    %v2123 = vunpack.c.h.b16 %v925
    %v2124 = vunpack.c.l.b16 %v926
    %v2125 = vunpack.c.h.b16 %v926
    %v2126 = vunpack.c.l.b16 %v927
    %v2127 = vunpack.c.h.b16 %v927
    %v2128 = vunpack.c.l.b16 %v928
    %v2129 = vunpack.c.h.b16 %v928
    %v2130 = vunpack.c.l.b16 %v929
    %v2131 = vunpack.c.h.b16 %v929
    %v2132 = vunpack.c.l.b16 %v930
    %v2133 = vunpack.c.h.b16 %v930
    %v2134 = vunpack.c.l.b16 %v931
    %v2135 = vunpack.c.h.b16 %v931
    %v2136 = vunpack.c.l.b16 %v932
    %v2137 = vunpack.c.h.b16 %v932
    %v2138 = vunpack.c.l.b16 %v933
    %v2139 = vunpack.c.h.b16 %v933
    %v2140 = vunpack.c.l.b16 %v934
    %v2141 = vunpack.c.h.b16 %v934
    %v2142 = vunpack.c.l.b16 %v935
    %v2143 = vunpack.c.h.b16 %v935
    %v2144 = vunpack.c.l.b16 %v936
    %v2145 = vunpack.c.h.b16 %v936
    %v2146 = vunpack.c.l.b16 %v937
    %v2147 = vunpack.c.h.b16 %v937
    %v2148 = vunpack.c.l.b16 %v938
    %v2149 = vunpack.c.h.b16 %v938
    %v2150 = vunpack.c.l.b16 %v939
    %v2151 = vunpack.c.h.b16 %v939
    %v2152 = vunpack.c.l.b16 %v940
    %v2153 = vunpack.c.h.b16 %v940
    %v2154 = vunpack.c.l.b16 %v941
    %v2155 = vunpack.c.h.b16 %v941
    %v2156 = vunpack.c.l.b16 %v942
    %v2157 = vunpack.c.h.b16 %v942
    %v2158 = vunpack.c.l.b16 %v943
    %v2159 = vunpack.c.h.b16 %v943
    %v2160 = vunpack.c.l.b16 %v944
    %v2161 = vunpack.c.h.b16 %v944
    %v2162 = vunpack.c.l.b16 %v945
    %v2163 = vunpack.c.h.b16 %v945
    %v2164 = vunpack.c.l.b16 %v946
    %v2165 = vunpack.c.h.b16 %v946
    %v2166 = vunpack.c.l.b16 %v947
    %v2167 = vunpack.c.h.b16 %v947
    %v2168 = vunpack.c.l.b16 %v948
    %v2169 = vunpack.c.h.b16 %v948
    %v2170 = vunpack.c.l.b16 %v949
    %v2171 = vunpack.c.h.b16 %v949
    %v2172 = vunpack.c.l.b16 %v950
    %v2173 = vunpack.c.h.b16 %v950
    %v2174 = vunpack.c.l.b16 %v951
    %v2175 = vunpack.c.h.b16 %v951
    %v2176 = vunpack.c.l.b16 %v952
    %v2177 = vunpack.c.h.b16 %v952
    %v2178 = vunpack.c.l.b16 %v953
    %v2179 = vunpack.c.h.b16 %v953
    %v2180 = vunpack.c.l.b16 %v954
    %v2181 = vunpack.c.h.b16 %v954
    %v2182 = vunpack.c.l.b16 %v955
    %v2183 = vunpack.c.h.b16 %v955
    %v2184 = vunpack.c.l.b16 %v956
    %v2185 = vunpack.c.h.b16 %v956
    %v2186 = vunpack.c.l.b16 %v957
    %v2187 = vunpack.c.h.b16 %v957
    %v2188 = vunpack.c.l.b16 %v958
    %v2189 = vunpack.c.h.b16 %v958
    %v2190 = vunpack.c.l.b16 %v959
    %v2191 = vunpack.c.h.b16 %v959
    %v2192 = vunpack.c.l.b16 %v960
    %v2193 = vunpack.c.h.b16 %v960
    %v2194 = vunpack.c.l.b16 %v961
    %v2195 = vunpack.c.h.b16 %v961
    %v2196 = vunpack.c.l.b16 %v962
    %v2197 = vunpack.c.h.b16 %v962
    %v2198 = vunpack.c.l.b16 %v963
    %v2199 = vunpack.c.h.b16 %v963
    %v2200 = vunpack.c.l.b16 %v964
    %v2201 = vunpack.c.h.b16 %v964
    %v2202 = vunpack.c.l.b16 %v965
    %v2203 = vunpack.c.h.b16 %v965
    %v2204 = vunpack.c.l.b16 %v966
    %v2205 = vunpack.c.h.b16 %v966
    %v2206 = vunpack.c.l.b16 %v967
    %v2207 = vunpack.c.h.b16 %v967
    %v2208 = vunpack.c.l.b16 %v968
    %v2209 = vunpack.c.h.b16 %v968
    %v2210 = vunpack.c.l.b16 %v969
    %v2211 = vunpack.c.h.b16 %v969
    %v2212 = vunpack.c.l.b16 %v970
    %v2213 = vunpack.c.h.b16 %v970
    %v2214 = vunpack.c.l.b16 %v971
    %v2215 = vunpack.c.h.b16 %v971
    %v2216 = vunpack.c.l.b16 %v972
    %v2217 = vunpack.c.h.b16 %v972
    %v2218 = vunpack.c.l.b16 %v973
    %v2219 = vunpack.c.h.b16 %v973
    %v2220 = vunpack.c.l.b16 %v974
    %v2221 = vunpack.c.h.b16 %v974
    %v2222 = vunpack.c.l.b16 %v975
    %v2223 = vunpack.c.h.b16 %v975
    %v2224 = vunpack.c.l.b16 %v976
    %v2225 = vunpack.c.h.b16 %v976
    %v2226 = vunpack.c.l.b16 %v977
    %v2227 = vunpack.c.h.b16 %v977
    %v2228 = vunpack.c.l.b16 %v978
    %v2229 = vunpack.c.h.b16 %v978
    %v2230 = vunpack.c.l.b16 %v979
    %v2231 = vunpack.c.h.b16 %v979
    %v2232 = vunpack.c.l.b16 %v980
    %v2233 = vunpack.c.h.b16 %v980
    %v2234 = vunpack.c.l.b16 %v981
    %v2235 = vunpack.c.h.b16 %v981
    %v2236 = vunpack.c.l.b16 %v982
    %v2237 = vunpack.c.h.b16 %v982
    %v2238 = vunpack.c.l.b16 %v983
    %v2239 = vunpack.c.h.b16 %v983
    %v2240 = vunpack.c.l.b16 %v984
    %v2241 = vunpack.c.h.b16 %v984
    %v2242 = vunpack.c.l.b16 %v985
    %v2243 = vunpack.c.h.b16 %v985
    %v2244 = vunpack.c.l.b16 %v986
    %v2245 = vunpack.c.h.b16 %v986
    %v2246 = vunpack.c.l.b16 %v987
    %v2247 = vunpack.c.h.b16 %v987
    %v2248 = vunpack.c.l.b16 %v988
    %v2249 = vunpack.c.h.b16 %v988
    %v2250 = vunpack.c.l.b16 %v989
    %v2251 = vunpack.c.h.b16 %v989
    %v2252 = vunpack.c.l.b16 %v990
    %v2253 = vunpack.c.h.b16 %v990
    %v2254 = vunpack.c.l.b16 %v991
    %v2255 = vunpack.c.h.b16 %v991
    %v2256 = vunpack.c.l.b16 %v992
    %v2257 = vunpack.c.h.b16 %v992
    %v2258 = vunpack.c.l.b16 %v993
    %v2259 = vunpack.c.h.b16 %v993
    %v2260 = vunpack.c.l.b16 %v994
    %v2261 = vunpack.c.h.b16 %v994
    %v2262 = vunpack.c.l.b16 %v995
    %v2263 = vunpack.c.h.b16 %v995
    %v2264 = vunpack.c.l.b16 %v996
    %v2265 = vunpack.c.h.b16 %v996
    %v2266 = vunpack.c.l.b16 %v997
    %v2267 = vunpack.c.h.b16 %v997
    %v2268 = vunpack.c.l.b16 %v998
    %v2269 = vunpack.c.h.b16 %v998
    %v2270 = vunpack.c.l.b16 %v999
    %v2271 = vunpack.c.h.b16 %v999
    %v2272 = vunpack.c.l.b16 %v1000
    %v2273 = vunpack.c.h.b16 %v1000
    %v2274 = vunpack.c.l.b16 %v1001
    %v2275 = vunpack.c.h.b16 %v1001
    %v2276 = vunpack.c.l.b16 %v1002
    %v2277 = vunpack.c.h.b16 %v1002
    %v2278 = vunpack.c.l.b16 %v1003
    %v2279 = vunpack.c.h.b16 %v1003
    %v2280 = vunpack.c.l.b16 %v1004
    %v2281 = vunpack.c.h.b16 %v1004
    %v2282 = vunpack.c.l.b16 %v1005
    %v2283 = vunpack.c.h.b16 %v1005
    %v2284 = vunpack.c.l.b16 %v1006
    %v2285 = vunpack.c.h.b16 %v1006
    %v2286 = vunpack.c.l.b16 %v1007
    %v2287 = vunpack.c.h.b16 %v1007
    %v2288 = vunpack.c.l.b16 %v1008
    %v2289 = vunpack.c.h.b16 %v1008
    %v2290 = vunpack.c.l.b16 %v1009
    %v2291 = vunpack.c.h.b16 %v1009
    %v2292 = vunpack.c.l.b16 %v1010
    %v2293 = vunpack.c.h.b16 %v1010
    %v2294 = vunpack.c.l.b16 %v1011
    %v2295 = vunpack.c.h.b16 %v1011
    %v2296 = vunpack.c.l.b16 %v1012
    %v2297 = vunpack.c.h.b16 %v1012
    %v2298 = vunpack.c.l.b16 %v1013
    %v2299 = vunpack.c.h.b16 %v1013
    %v2300 = vunpack.c.l.b16 %v1014
    %v2301 = vunpack.c.h.b16 %v1014
    %v2302 = vunpack.c.l.b16 %v1015
    %v2303 = vunpack.c.h.b16 %v1015
    %v2304 = vunpack.c.l.b16 %v1016
    %v2305 = vunpack.c.h.b16 %v1016
    %v2306 = vunpack.c.l.b16 %v1017
    %v2307 = vunpack.c.h.b16 %v1017
    %v2308 = vunpack.c.l.b16 %v1018
    %v2309 = vunpack.c.h.b16 %v1018
    %v2310 = vunpack.c.l.b16 %v1019
    %v2311 = vunpack.c.h.b16 %v1019
    %v2312 = vunpack.c.l.b16 %v1020
    %v2313 = vunpack.c.h.b16 %v1020
    %v2314 = vunpack.c.l.b16 %v1021
    %v2315 = vunpack.c.h.b16 %v1021
    %v2316 = vunpack.c.l.b16 %v1022
    %v2317 = vunpack.c.h.b16 %v1022
    %v2318 = vunpack.c.l.b16 %v1023
    %v2319 = vunpack.c.h.b16 %v1023
    %v2320 = vunpack.c.l.b16 %v1024
    %v2321 = vunpack.c.h.b16 %v1024
    %v2322 = vunpack.c.l.b16 %v1025
    %v2323 = vunpack.c.h.b16 %v1025
    %v2324 = vunpack.c.l.b16 %v1026
    %v2325 = vunpack.c.h.b16 %v1026
    %v2326 = vunpack.c.l.b16 %v1027
    %v2327 = vunpack.c.h.b16 %v1027
    %v2328 = vunpack.c.l.b16 %v1028
    %v2329 = vunpack.c.h.b16 %v1028
    %v2330 = vunpack.c.l.b16 %v1029
    %v2331 = vunpack.c.h.b16 %v1029
    %v2332 = vunpack.c.l.b16 %v1030
    %v2333 = vunpack.c.h.b16 %v1030
    %v2334 = vunpack.c.l.b16 %v1031
    %v2335 = vunpack.c.h.b16 %v1031
    %v2336 = vunpack.c.l.b16 %v1032
    %v2337 = vunpack.c.h.b16 %v1032
    %v2338 = vunpack.c.l.b16 %v1033
    %v2339 = vunpack.c.h.b16 %v1033
    %v2340 = vunpack.c.l.b16 %v1034
    %v2341 = vunpack.c.h.b16 %v1034
    %v2342 = vunpack.c.l.b16 %v1035
    %v2343 = vunpack.c.h.b16 %v1035
    %v2344 = vunpack.c.l.b16 %v1036
    %v2345 = vunpack.c.h.b16 %v1036
    %v2346 = vunpack.c.l.b16 %v1037
    %v2347 = vunpack.c.h.b16 %v1037
    %v2348 = vunpack.c.l.b16 %v1038
    %v2349 = vunpack.c.h.b16 %v1038
    %v2350 = vunpack.c.l.b16 %v1039
    %v2351 = vunpack.c.h.b16 %v1039
    %v2352 = vunpack.c.l.b16 %v1040
    %v2353 = vunpack.c.h.b16 %v1040
    %v2354 = vunpack.c.l.b16 %v1041
    %v2355 = vunpack.c.h.b16 %v1041
    %v2356 = vunpack.c.l.b16 %v1042
    %v2357 = vunpack.c.h.b16 %v1042
    %v2358 = vunpack.c.l.b16 %v1043
    %v2359 = vunpack.c.h.b16 %v1043
    %v2360 = vunpack.c.l.b16 %v1044
    %v2361 = vunpack.c.h.b16 %v1044
    %v2362 = vunpack.c.l.b16 %v1045
    %v2363 = vunpack.c.h.b16 %v1045
    %v2364 = vunpack.c.l.b16 %v1046
    %v2365 = vunpack.c.h.b16 %v1046
    %v2366 = vunpack.c.l.b16 %v1047
    %v2367 = vunpack.c.h.b16 %v1047
    %v2368 = vunpack.c.l.b16 %v1048
    %v2369 = vunpack.c.h.b16 %v1048
    %v2370 = vunpack.c.l.b16 %v1049
    %v2371 = vunpack.c.h.b16 %v1049
    %v2372 = vunpack.c.l.b16 %v1050
    %v2373 = vunpack.c.h.b16 %v1050
    %v2374 = vunpack.c.l.b16 %v1051
    %v2375 = vunpack.c.h.b16 %v1051
    %v2376 = vunpack.c.l.b16 %v1052
    %v2377 = vunpack.c.h.b16 %v1052
    %v2378 = vunpack.c.l.b16 %v1053
    %v2379 = vunpack.c.h.b16 %v1053
    %v2380 = vunpack.c.l.b16 %v1054
    %v2381 = vunpack.c.h.b16 %v1054
    %v2382 = vunpack.c.l.b16 %v1055
    %v2383 = vunpack.c.h.b16 %v1055
    %v2384 = vunpack.c.l.b16 %v1056
    %v2385 = vunpack.c.h.b16 %v1056
    %v2386 = vunpack.c.l.b16 %v1057
    %v2387 = vunpack.c.h.b16 %v1057
    %v2388 = vunpack.c.l.b16 %v1058
    %v2389 = vunpack.c.h.b16 %v1058
    %v2390 = vunpack.c.l.b16 %v1059
    %v2391 = vunpack.c.h.b16 %v1059
    %v2392 = vunpack.c.l.b16 %v1060
    %v2393 = vunpack.c.h.b16 %v1060
    %v2394 = vunpack.c.l.b16 %v1061
    %v2395 = vunpack.c.h.b16 %v1061
    %v2396 = vunpack.c.l.b16 %v1062
    %v2397 = vunpack.c.h.b16 %v1062
    %v2398 = vunpack.c.l.b16 %v1063
    %v2399 = vunpack.c.h.b16 %v1063
    %v2400 = vunpack.c.l.b16 %v1064
    %v2401 = vunpack.c.h.b16 %v1064
    %v2402 = vunpack.c.l.b16 %v1065
    %v2403 = vunpack.c.h.b16 %v1065
    %v2404 = vunpack.c.l.b16 %v1066
    %v2405 = vunpack.c.h.b16 %v1066
    %v2406 = vunpack.c.l.b16 %v1067
    %v2407 = vunpack.c.h.b16 %v1067
    %v2408 = vunpack.c.l.b16 %v1068
    %v2409 = vunpack.c.h.b16 %v1068
    %v2410 = vunpack.c.l.b16 %v1069
    %v2411 = vunpack.c.h.b16 %v1069
    %v2412 = vunpack.c.l.b16 %v1070
    %v2413 = vunpack.c.h.b16 %v1070
    %v2414 = vunpack.c.l.b16 %v1071
    %v2415 = vunpack.c.h.b16 %v1071
    %v2416 = vunpack.c.l.b16 %v1072
    %v2417 = vunpack.c.h.b16 %v1072
    %v2418 = vunpack.c.l.b16 %v1073
    %v2419 = vunpack.c.h.b16 %v1073
    %v2420 = vunpack.c.l.b16 %v1074
    %v2421 = vunpack.c.h.b16 %v1074
    %v2422 = vunpack.c.l.b16 %v1075
    %v2423 = vunpack.c.h.b16 %v1075
    %v2424 = vunpack.c.l.b16 %v1076
    %v2425 = vunpack.c.h.b16 %v1076
    %v2426 = vunpack.c.l.b16 %v1077
    %v2427 = vunpack.c.h.b16 %v1077
    %v2428 = vunpack.c.l.b16 %v1078
    %v2429 = vunpack.c.h.b16 %v1078
    %v2430 = vunpack.c.l.b16 %v1079
    %v2431 = vunpack.c.h.b16 %v1079
    %v2432 = vunpack.c.l.b16 %v1080
    %v2433 = vunpack.c.h.b16 %v1080
    %v2434 = vunpack.c.l.b16 %v1081
    %v2435 = vunpack.c.h.b16 %v1081
    %v2436 = vunpack.c.l.b16 %v1082
    %v2437 = vunpack.c.h.b16 %v1082
    %v2438 = vunpack.c.l.b16 %v1083
    %v2439 = vunpack.c.h.b16 %v1083
    %v2440 = vunpack.c.l.b16 %v1084
    %v2441 = vunpack.c.h.b16 %v1084
    %v2442 = vunpack.c.l.b16 %v1085
    %v2443 = vunpack.c.h.b16 %v1085
    %v2444 = vunpack.c.l.b16 %v1086
    %v2445 = vunpack.c.h.b16 %v1086
    %v2446 = vunpack.c.l.b16 %v1087
    %v2447 = vunpack.c.h.b16 %v1087
    %v2448 = vunpack.c.l.b16 %v1088
    %v2449 = vunpack.c.h.b16 %v1088
    %v2450 = vunpack.c.l.b16 %v1089
    %v2451 = vunpack.c.h.b16 %v1089
    %v2452 = vunpack.c.l.b16 %v1090
    %v2453 = vunpack.c.h.b16 %v1090
    %v2454 = vunpack.c.l.b16 %v1091
    %v2455 = vunpack.c.h.b16 %v1091
    %v2456 = vunpack.c.l.b16 %v1092
    %v2457 = vunpack.c.h.b16 %v1092
    %v2458 = vunpack.c.l.b16 %v1093
    %v2459 = vunpack.c.h.b16 %v1093
    %v2460 = vunpack.c.l.b16 %v1094
    %v2461 = vunpack.c.h.b16 %v1094
    %v2462 = vunpack.c.l.b16 %v1095
    %v2463 = vunpack.c.h.b16 %v1095
    %v2464 = vunpack.c.l.b16 %v1096
    %v2465 = vunpack.c.h.b16 %v1096
    %v2466 = vunpack.c.l.b16 %v1097
    %v2467 = vunpack.c.h.b16 %v1097
    %v2468 = vunpack.c.l.b16 %v1098
    %v2469 = vunpack.c.h.b16 %v1098
    %v2470 = vunpack.c.l.b16 %v1099
    %v2471 = vunpack.c.h.b16 %v1099
    %v2472 = vunpack.c.l.b16 %v1100
    %v2473 = vunpack.c.h.b16 %v1100
    %v2474 = vunpack.c.l.b16 %v1101
    %v2475 = vunpack.c.h.b16 %v1101
    %v2476 = vunpack.c.l.b16 %v1102
    %v2477 = vunpack.c.h.b16 %v1102
    %v2478 = vunpack.c.l.b16 %v1103
    %v2479 = vunpack.c.h.b16 %v1103
    %v2480 = vunpack.c.l.b16 %v1104
    %v2481 = vunpack.c.h.b16 %v1104
    %v2482 = vunpack.c.l.b16 %v1105
    %v2483 = vunpack.c.h.b16 %v1105
    %v2484 = vunpack.c.l.b16 %v1106
    %v2485 = vunpack.c.h.b16 %v1106
    %v2486 = vunpack.c.l.b16 %v1107
    %v2487 = vunpack.c.h.b16 %v1107
    %v2488 = vunpack.c.l.b16 %v1108
    %v2489 = vunpack.c.h.b16 %v1108
    %v2490 = vunpack.c.l.b16 %v1109
    %v2491 = vunpack.c.h.b16 %v1109
    %v2492 = vunpack.c.l.b16 %v1110
    %v2493 = vunpack.c.h.b16 %v1110
    %v2494 = vunpack.c.l.b16 %v1111
    %v2495 = vunpack.c.h.b16 %v1111
    %v2496 = vunpack.c.l.b16 %v1112
    %v2497 = vunpack.c.h.b16 %v1112
    %v2498 = vunpack.c.l.b16 %v1113
    %v2499 = vunpack.c.h.b16 %v1113
    %v2500 = vunpack.c.l.b16 %v1114
    %v2501 = vunpack.c.h.b16 %v1114
    %v2502 = vunpack.c.l.b16 %v1115
    %v2503 = vunpack.c.h.b16 %v1115
    %v2504 = vunpack.c.l.b16 %v1116
    %v2505 = vunpack.c.h.b16 %v1116
    %v2506 = vunpack.c.l.b16 %v1117
    %v2507 = vunpack.c.h.b16 %v1117
    %v2508 = vunpack.c.l.b16 %v1118
    %v2509 = vunpack.c.h.b16 %v1118
    %v2510 = vunpack.c.l.b16 %v1119
    %v2511 = vunpack.c.h.b16 %v1119
    %v2512 = vunpack.c.l.b16 %v1120
    %v2513 = vunpack.c.h.b16 %v1120
    %v2514 = vunpack.c.l.b16 %v1121
    %v2515 = vunpack.c.h.b16 %v1121
    %v2516 = vunpack.c.l.b16 %v1122
    %v2517 = vunpack.c.h.b16 %v1122
    %v2518 = vunpack.c.l.b16 %v1123
    %v2519 = vunpack.c.h.b16 %v1123
    %v2520 = vunpack.c.l.b16 %v1124
    %v2521 = vunpack.c.h.b16 %v1124
    %v2522 = vunpack.c.l.b16 %v1125
    %v2523 = vunpack.c.h.b16 %v1125
    %v2524 = vunpack.c.l.b16 %v1126
    %v2525 = vunpack.c.h.b16 %v1126
    %v2526 = vunpack.c.l.b16 %v1127
    %v2527 = vunpack.c.h.b16 %v1127
    %v2528 = vunpack.c.l.b16 %v1128
    %v2529 = vunpack.c.h.b16 %v1128
    %v2530 = vunpack.c.l.b16 %v1129
    %v2531 = vunpack.c.h.b16 %v1129
    %v2532 = vunpack.c.l.b16 %v1130
    %v2533 = vunpack.c.h.b16 %v1130
    %v2534 = vunpack.c.l.b16 %v1131
    %v2535 = vunpack.c.h.b16 %v1131
    %v2536 = vunpack.c.l.b16 %v1132
    %v2537 = vunpack.c.h.b16 %v1132
    %v2538 = vunpack.c.l.b16 %v1133
    %v2539 = vunpack.c.h.b16 %v1133
    %v2540 = vunpack.c.l.b16 %v1134
    %v2541 = vunpack.c.h.b16 %v1134
    %v2542 = vunpack.c.l.b16 %v1135
    %v2543 = vunpack.c.h.b16 %v1135
    %v2544 = vunpack.c.l.b16 %v1136
    %v2545 = vunpack.c.h.b16 %v1136
    %v2546 = vunpack.c.l.b16 %v1137
    %v2547 = vunpack.c.h.b16 %v1137
    %v2548 = vunpack.c.l.b16 %v1138
    %v2549 = vunpack.c.h.b16 %v1138
    %v2550 = vunpack.c.l.b16 %v1139
    %v2551 = vunpack.c.h.b16 %v1139
    %v2552 = vunpack.c.l.b16 %v1140
    %v2553 = vunpack.c.h.b16 %v1140
    %v2554 = vunpack.c.l.b16 %v1141
    %v2555 = vunpack.c.h.b16 %v1141
    %v2556 = vunpack.c.l.b16 %v1142
    %v2557 = vunpack.c.h.b16 %v1142
    %v2558 = vunpack.c.l.b16 %v1143
    %v2559 = vunpack.c.h.b16 %v1143
    %v2560 = vunpack.c.l.b16 %v1144
    %v2561 = vunpack.c.h.b16 %v1144
    %v2562 = vunpack.c.l.b16 %v1145
    %v2563 = vunpack.c.h.b16 %v1145
    %v2564 = vunpack.c.l.b16 %v1146
    %v2565 = vunpack.c.h.b16 %v1146
    %v2566 = vunpack.c.l.b16 %v1147
    %v2567 = vunpack.c.h.b16 %v1147
    %v2568 = vunpack.c.l.b16 %v1148
    %v2569 = vunpack.c.h.b16 %v1148
    %v2570 = vunpack.c.l.b16 %v1149
    %v2571 = vunpack.c.h.b16 %v1149
    %v2572 = vunpack.c.l.b16 %v1150
    %v2573 = vunpack.c.h.b16 %v1150
    %v2574 = vunpack.c.l.b16 %v1151
    %v2575 = vunpack.c.h.b16 %v1151
    %v2576 = vunpack.c.l.b16 %v1152
    %v2577 = vunpack.c.h.b16 %v1152
    %v2578 = vunpack.c.l.b16 %v1153
    %v2579 = vunpack.c.h.b16 %v1153
    %v2580 = vunpack.c.l.b16 %v1154
    %v2581 = vunpack.c.h.b16 %v1154
    %v2582 = vunpack.c.l.b16 %v1155
    %v2583 = vunpack.c.h.b16 %v1155
    %v2584 = vunpack.c.l.b16 %v1156
    %v2585 = vunpack.c.h.b16 %v1156
    %v2586 = vunpack.c.l.b16 %v1157
    %v2587 = vunpack.c.h.b16 %v1157
    %v2588 = vunpack.c.l.b16 %v1158
    %v2589 = vunpack.c.h.b16 %v1158
    %v2590 = vunpack.c.l.b16 %v1159
    %v2591 = vunpack.c.h.b16 %v1159
    %v2592 = vunpack.c.l.b16 %v1160
    %v2593 = vunpack.c.h.b16 %v1160
    %v2594 = vunpack.c.l.b16 %v1161
    %v2595 = vunpack.c.h.b16 %v1161
    %v2596 = vunpack.c.l.b16 %v1162
    %v2597 = vunpack.c.h.b16 %v1162
    %v2598 = vunpack.c.l.b16 %v1163
    %v2599 = vunpack.c.h.b16 %v1163
    %v2600 = vunpack.c.l.b16 %v1164
    %v2601 = vunpack.c.h.b16 %v1164
    %v2602 = vunpack.c.l.b16 %v1165
    %v2603 = vunpack.c.h.b16 %v1165
    %v2604 = vunpack.c.l.b16 %v1166
    %v2605 = vunpack.c.h.b16 %v1166
    %v2606 = vunpack.c.l.b16 %v1167
    %v2607 = vunpack.c.h.b16 %v1167
    %v2608 = vunpack.c.l.b16 %v1168
    %v2609 = vunpack.c.h.b16 %v1168
    %v2610 = vunpack.c.l.b16 %v1169
    %v2611 = vunpack.c.h.b16 %v1169
    %v2612 = vunpack.c.l.b16 %v1170
    %v2613 = vunpack.c.h.b16 %v1170
    %v2614 = vunpack.c.l.b16 %v1171
    %v2615 = vunpack.c.h.b16 %v1171
    %v2616 = vunpack.c.l.b16 %v1172
    %v2617 = vunpack.c.h.b16 %v1172
    %v2618 = vunpack.c.l.b16 %v1173
    %v2619 = vunpack.c.h.b16 %v1173
    %v2620 = vunpack.c.l.b16 %v1174
    %v2621 = vunpack.c.h.b16 %v1174
    %v2622 = vunpack.c.l.b16 %v1175
    %v2623 = vunpack.c.h.b16 %v1175
    %v2624 = vunpack.c.l.b16 %v1176
    %v2625 = vunpack.c.h.b16 %v1176
    %v2626 = vunpack.c.l.b16 %v1177
    %v2627 = vunpack.c.h.b16 %v1177
    %v2628 = vunpack.c.l.b16 %v1178
    %v2629 = vunpack.c.h.b16 %v1178
    %v2630 = vunpack.c.l.b16 %v1179
    %v2631 = vunpack.c.h.b16 %v1179
    %v2632 = vunpack.c.l.b16 %v1180
    %v2633 = vunpack.c.h.b16 %v1180
    %v2634 = vunpack.c.l.b16 %v1181
    %v2635 = vunpack.c.h.b16 %v1181
    %v2636 = vunpack.c.l.b16 %v1182
    %v2637 = vunpack.c.h.b16 %v1182
    %v2638 = vunpack.c.l.b16 %v1183
    %v2639 = vunpack.c.h.b16 %v1183
    %v2640 = vunpack.c.l.b16 %v1184
    %v2641 = vunpack.c.h.b16 %v1184
    %v2642 = vunpack.c.l.b16 %v1185
    %v2643 = vunpack.c.h.b16 %v1185
    %v2644 = vunpack.c.l.b16 %v1186
    %v2645 = vunpack.c.h.b16 %v1186
    %v2646 = vunpack.c.l.b16 %v1187
    %v2647 = vunpack.c.h.b16 %v1187
    %v2648 = vunpack.c.l.b16 %v1188
    %v2649 = vunpack.c.h.b16 %v1188
    %v2650 = vunpack.c.l.b16 %v1189
    %v2651 = vunpack.c.h.b16 %v1189
    %v2652 = vpack.c.b16 %v1696, %v1692
    %v2653 = vpack.c.b16 %v1697, %v1693
    %v2654 = vpack.c.b16 %v1698, %v1694
    %v2655 = vpack.c.b16 %v1699, %v1695
    %v2656 = vpack.c.b16 %v1704, %v1700
    %v2657 = vpack.c.b16 %v1705, %v1701
    %v2658 = vpack.c.b16 %v1706, %v1702
    %v2659 = vpack.c.b16 %v1707, %v1703
    %v2660 = vpack.c.b16 %v1712, %v1708
    %v2661 = vpack.c.b16 %v1713, %v1709
    %v2662 = vpack.c.b16 %v1714, %v1710
    %v2663 = vpack.c.b16 %v1715, %v1711
    %v2664 = vpack.c.b16 %v1720, %v1716
    %v2665 = vpack.c.b16 %v1721, %v1717
    %v2666 = vpack.c.b16 %v1722, %v1718
    %v2667 = vpack.c.b16 %v1723, %v1719
    %v2668 = vpack.c.b16 %v1728, %v1724
    %v2669 = vpack.c.b16 %v1729, %v1725
    %v2670 = vpack.c.b16 %v1730, %v1726
    %v2671 = vpack.c.b16 %v1731, %v1727
    %v2672 = vpack.c.b16 %v1736, %v1732
    %v2673 = vpack.c.b16 %v1737, %v1733
    %v2674 = vpack.c.b16 %v1738, %v1734
    %v2675 = vpack.c.b16 %v1739, %v1735
    %v2676 = vpack.c.b16 %v1744, %v1740
    %v2677 = vpack.c.b16 %v1745, %v1741
    %v2678 = vpack.c.b16 %v1746, %v1742
    %v2679 = vpack.c.b16 %v1747, %v1743
    %v2680 = vpack.c.b16 %v1752, %v1748
    %v2681 = vpack.c.b16 %v1753, %v1749
    %v2682 = vpack.c.b16 %v1754, %v1750
    %v2683 = vpack.c.b16 %v1755, %v1751
    %v2684 = vpack.c.b16 %v1760, %v1756
    %v2685 = vpack.c.b16 %v1761, %v1757
    %v2686 = vpack.c.b16 %v1762, %v1758
    %v2687 = vpack.c.b16 %v1763, %v1759
    %v2688 = vpack.c.b16 %v1768, %v1764
    %v2689 = vpack.c.b16 %v1769, %v1765
    %v2690 = vpack.c.b16 %v1770, %v1766
    %v2691 = vpack.c.b16 %v1771, %v1767
    %v2692 = vpack.c.b16 %v1776, %v1772
    %v2693 = vpack.c.b16 %v1777, %v1773
    %v2694 = vpack.c.b16 %v1778, %v1774
    %v2695 = vpack.c.b16 %v1779, %v1775
    %v2696 = vpack.c.b16 %v1784, %v1780
    %v2697 = vpack.c.b16 %v1785, %v1781
    %v2698 = vpack.c.b16 %v1786, %v1782
    %v2699 = vpack.c.b16 %v1787, %v1783
    %v2700 = vpack.c.b16 %v1792, %v1788
    %v2701 = vpack.c.b16 %v1793, %v1789
    %v2702 = vpack.c.b16 %v1794, %v1790
    %v2703 = vpack.c.b16 %v1795, %v1791
    %v2704 = vpack.c.b16 %v1800, %v1796
    %v2705 = vpack.c.b16 %v1801, %v1797
    %v2706 = vpack.c.b16 %v1802, %v1798
    %v2707 = vpack.c.b16 %v1803, %v1799
    %v2708 = vpack.c.b16 %v1808, %v1804
    %v2709 = vpack.c.b16 %v1809, %v1805
    %v2710 = vpack.c.b16 %v1810, %v1806
    %v2711 = vpack.c.b16 %v1811, %v1807
    %v2712 = vpack.c.b16 %v1816, %v1812
    %v2713 = vpack.c.b16 %v1817, %v1813
    %v2714 = vpack.c.b16 %v1818, %v1814
    %v2715 = vpack.c.b16 %v1819, %v1815
    %v2716 = vpack.c.b16 %v1824, %v1820
    %v2717 = vpack.c.b16 %v1825, %v1821
    %v2718 = vpack.c.b16 %v1826, %v1822
    %v2719 = vpack.c.b16 %v1827, %v1823
    %v2720 = vpack.c.b16 %v1832, %v1828
    %v2721 = vpack.c.b16 %v1833, %v1829
    %v2722 = vpack.c.b16 %v1834, %v1830
    %v2723 = vpack.c.b16 %v1835, %v1831
    %v2724 = vpack.c.b16 %v1840, %v1836
    %v2725 = vpack.c.b16 %v1841, %v1837
    %v2726 = vpack.c.b16 %v1842, %v1838
    %v2727 = vpack.c.b16 %v1843, %v1839
    %v2728 = vpack.c.b16 %v1848, %v1844
    %v2729 = vpack.c.b16 %v1849, %v1845
    %v2730 = vpack.c.b16 %v1850, %v1846
    %v2731 = vpack.c.b16 %v1851, %v1847
    %v2732 = vpack.c.b16 %v1856, %v1852
    %v2733 = vpack.c.b16 %v1857, %v1853
    %v2734 = vpack.c.b16 %v1858, %v1854
    %v2735 = vpack.c.b16 %v1859, %v1855
    %v2736 = vpack.c.b16 %v1864, %v1860
    %v2737 = vpack.c.b16 %v1865, %v1861
    %v2738 = vpack.c.b16 %v1866, %v1862
    %v2739 = vpack.c.b16 %v1867, %v1863
    %v2740 = vpack.c.b16 %v1872, %v1868
    %v2741 = vpack.c.b16 %v1873, %v1869
    %v2742 = vpack.c.b16 %v1874, %v1870
    %v2743 = vpack.c.b16 %v1875, %v1871
    %v2744 = vpack.c.b16 %v1880, %v1876
    %v2745 = vpack.c.b16 %v1881, %v1877
    %v2746 = vpack.c.b16 %v1882, %v1878
    %v2747 = vpack.c.b16 %v1883, %v1879
    %v2748 = vpack.c.b16 %v1888, %v1884
    %v2749 = vpack.c.b16 %v1889, %v1885
    %v2750 = vpack.c.b16 %v1890, %v1886
    %v2751 = vpack.c.b16 %v1891, %v1887
    %v2752 = vpack.c.b16 %v1896, %v1892
    %v2753 = vpack.c.b16 %v1897, %v1893
    %v2754 = vpack.c.b16 %v1898, %v1894
    %v2755 = vpack.c.b16 %v1899, %v1895
    %v2756 = vpack.c.b16 %v1904, %v1900
    %v2757 = vpack.c.b16 %v1905, %v1901
    %v2758 = vpack.c.b16 %v1906, %v1902
    %v2759 = vpack.c.b16 %v1907, %v1903
    %v2760 = vpack.c.b16 %v1912, %v1908
    %v2761 = vpack.c.b16 %v1913, %v1909
    %v2762 = vpack.c.b16 %v1914, %v1910
    %v2763 = vpack.c.b16 %v1915, %v1911
    %v2764 = vpack.c.b16 %v1920, %v1916
    %v2765 = vpack.c.b16 %v1921, %v1917
    %v2766 = vpack.c.b16 %v1922, %v1918
    %v2767 = vpack.c.b16 %v1923, %v1919
    %v2768 = vpack.c.b16 %v1928, %v1924
    %v2769 = vpack.c.b16 %v1929, %v1925
    %v2770 = vpack.c.b16 %v1930, %v1926
    %v2771 = vpack.c.b16 %v1931, %v1927
    %v2772 = vpack.c.b16 %v1936, %v1932
    %v2773 = vpack.c.b16 %v1937, %v1933
    %v2774 = vpack.c.b16 %v1938, %v1934
    %v2775 = vpack.c.b16 %v1939, %v1935
    %v2776 = vpack.c.b16 %v1944, %v1940
    %v2777 = vpack.c.b16 %v1945, %v1941
    %v2778 = vpack.c.b16 %v1946, %v1942
    %v2779 = vpack.c.b16 %v1947, %v1943
    %v2780 = vpack.c.b16 %v1952, %v1948
    %v2781 = vpack.c.b16 %v1953, %v1949
    %v2782 = vpack.c.b16 %v1954, %v1950
    %v2783 = vpack.c.b16 %v1955, %v1951
    %v2784 = vpack.c.b16 %v1960, %v1956
    %v2785 = vpack.c.b16 %v1961, %v1957
    %v2786 = vpack.c.b16 %v1962, %v1958
    %v2787 = vpack.c.b16 %v1963, %v1959
    %v2788 = vpack.c.b16 %v1968, %v1964
    %v2789 = vpack.c.b16 %v1969, %v1965
    %v2790 = vpack.c.b16 %v1970, %v1966
    %v2791 = vpack.c.b16 %v1971, %v1967
    %v2792 = vpack.c.b16 %v1976, %v1972
    %v2793 = vpack.c.b16 %v1977, %v1973
    %v2794 = vpack.c.b16 %v1978, %v1974
    %v2795 = vpack.c.b16 %v1979, %v1975
    %v2796 = vpack.c.b16 %v1984, %v1980
    %v2797 = vpack.c.b16 %v1985, %v1981
    %v2798 = vpack.c.b16 %v1986, %v1982
    %v2799 = vpack.c.b16 %v1987, %v1983
    %v2800 = vpack.c.b16 %v1992, %v1988
    %v2801 = vpack.c.b16 %v1993, %v1989
    %v2802 = vpack.c.b16 %v1994, %v1990
    %v2803 = vpack.c.b16 %v1995, %v1991
    %v2804 = vpack.c.b16 %v2000, %v1996
    %v2805 = vpack.c.b16 %v2001, %v1997
    %v2806 = vpack.c.b16 %v2002, %v1998
    %v2807 = vpack.c.b16 %v2003, %v1999
    %v2808 = vpack.c.b16 %v2008, %v2004
    %v2809 = vpack.c.b16 %v2009, %v2005
    %v2810 = vpack.c.b16 %v2010, %v2006
    %v2811 = vpack.c.b16 %v2011, %v2007
    %v2812 = vpack.c.b16 %v2016, %v2012
    %v2813 = vpack.c.b16 %v2017, %v2013
    %v2814 = vpack.c.b16 %v2018, %v2014
    %v2815 = vpack.c.b16 %v2019, %v2015
    %v2816 = vpack.c.b16 %v2024, %v2020
    %v2817 = vpack.c.b16 %v2025, %v2021
    %v2818 = vpack.c.b16 %v2026, %v2022
    %v2819 = vpack.c.b16 %v2027, %v2023
    %v2820 = vpack.c.b16 %v2032, %v2028
    %v2821 = vpack.c.b16 %v2033, %v2029
    %v2822 = vpack.c.b16 %v2034, %v2030
    %v2823 = vpack.c.b16 %v2035, %v2031
    %v2824 = vpack.c.b16 %v2040, %v2036
    %v2825 = vpack.c.b16 %v2041, %v2037
    %v2826 = vpack.c.b16 %v2042, %v2038
    %v2827 = vpack.c.b16 %v2043, %v2039
    %v2828 = vpack.c.b16 %v2048, %v2044
    %v2829 = vpack.c.b16 %v2049, %v2045
    %v2830 = vpack.c.b16 %v2050, %v2046
    %v2831 = vpack.c.b16 %v2051, %v2047
    %v2832 = vpack.c.b16 %v2056, %v2052
    %v2833 = vpack.c.b16 %v2057, %v2053
    %v2834 = vpack.c.b16 %v2058, %v2054
    %v2835 = vpack.c.b16 %v2059, %v2055
    %v2836 = vpack.c.b16 %v2064, %v2060
    %v2837 = vpack.c.b16 %v2065, %v2061
    %v2838 = vpack.c.b16 %v2066, %v2062
    %v2839 = vpack.c.b16 %v2067, %v2063
    %v2840 = vpack.c.b16 %v2072, %v2068
    %v2841 = vpack.c.b16 %v2073, %v2069
    %v2842 = vpack.c.b16 %v2074, %v2070
    %v2843 = vpack.c.b16 %v2075, %v2071
    %v2844 = vpack.c.b16 %v2080, %v2076
    %v2845 = vpack.c.b16 %v2081, %v2077
    %v2846 = vpack.c.b16 %v2082, %v2078
    %v2847 = vpack.c.b16 %v2083, %v2079
    %v2848 = vpack.c.b16 %v2088, %v2084
    %v2849 = vpack.c.b16 %v2089, %v2085
    %v2850 = vpack.c.b16 %v2090, %v2086
    %v2851 = vpack.c.b16 %v2091, %v2087
    %v2852 = vpack.c.b16 %v2096, %v2092
    %v2853 = vpack.c.b16 %v2097, %v2093
    %v2854 = vpack.c.b16 %v2098, %v2094
    %v2855 = vpack.c.b16 %v2099, %v2095
    %v2856 = vpack.c.b16 %v2104, %v2100
    %v2857 = vpack.c.b16 %v2105, %v2101
    %v2858 = vpack.c.b16 %v2106, %v2102
    %v2859 = vpack.c.b16 %v2107, %v2103
    %v2860 = vpack.c.b16 %v2112, %v2108
    %v2861 = vpack.c.b16 %v2113, %v2109
    %v2862 = vpack.c.b16 %v2114, %v2110
    %v2863 = vpack.c.b16 %v2115, %v2111
    %v2864 = vpack.c.b16 %v2120, %v2116
    %v2865 = vpack.c.b16 %v2121, %v2117
    %v2866 = vpack.c.b16 %v2122, %v2118
    %v2867 = vpack.c.b16 %v2123, %v2119
    %v2868 = vpack.c.b16 %v2128, %v2124
    %v2869 = vpack.c.b16 %v2129, %v2125
    %v2870 = vpack.c.b16 %v2130, %v2126
    %v2871 = vpack.c.b16 %v2131, %v2127
    %v2872 = vpack.c.b16 %v2136, %v2132
    %v2873 = vpack.c.b16 %v2137, %v2133
    %v2874 = vpack.c.b16 %v2138, %v2134
    %v2875 = vpack.c.b16 %v2139, %v2135
    %v2876 = vpack.c.b16 %v2144, %v2140
    %v2877 = vpack.c.b16 %v2145, %v2141
    %v2878 = vpack.c.b16 %v2146, %v2142
    %v2879 = vpack.c.b16 %v2147, %v2143
    %v2880 = vpack.c.b16 %v2152, %v2148
    %v2881 = vpack.c.b16 %v2153, %v2149
    %v2882 = vpack.c.b16 %v2154, %v2150
    %v2883 = vpack.c.b16 %v2155, %v2151
    %v2884 = vpack.c.b16 %v2160, %v2156
    %v2885 = vpack.c.b16 %v2161, %v2157
    %v2886 = vpack.c.b16 %v2162, %v2158
    %v2887 = vpack.c.b16 %v2163, %v2159
    %v2888 = vpack.c.b16 %v2168, %v2164
    %v2889 = vpack.c.b16 %v2169, %v2165
    %v2890 = vpack.c.b16 %v2170, %v2166
    %v2891 = vpack.c.b16 %v2171, %v2167
    %v2892 = vpack.c.b16 %v2176, %v2172
    %v2893 = vpack.c.b16 %v2177, %v2173
    %v2894 = vpack.c.b16 %v2178, %v2174
    %v2895 = vpack.c.b16 %v2179, %v2175
    %v2896 = vpack.c.b16 %v2184, %v2180
    %v2897 = vpack.c.b16 %v2185, %v2181
    %v2898 = vpack.c.b16 %v2186, %v2182
    %v2899 = vpack.c.b16 %v2187, %v2183
    %v2900 = vpack.c.b16 %v2192, %v2188
    %v2901 = vpack.c.b16 %v2193, %v2189
    %v2902 = vpack.c.b16 %v2194, %v2190
    %v2903 = vpack.c.b16 %v2195, %v2191
    %v2904 = vpack.c.b16 %v2200, %v2196
    %v2905 = vpack.c.b16 %v2201, %v2197
    %v2906 = vpack.c.b16 %v2202, %v2198
    %v2907 = vpack.c.b16 %v2203, %v2199
    %v2908 = vpack.c.b16 %v2208, %v2204
    %v2909 = vpack.c.b16 %v2209, %v2205
    %v2910 = vpack.c.b16 %v2210, %v2206
    %v2911 = vpack.c.b16 %v2211, %v2207
    %v2912 = vpack.c.b16 %v2216, %v2212
    %v2913 = vpack.c.b16 %v2217, %v2213
    %v2914 = vpack.c.b16 %v2218, %v2214
    %v2915 = vpack.c.b16 %v2219, %v2215
    %v2916 = vpack.c.b16 %v2224, %v2220
    %v2917 = vpack.c.b16 %v2225, %v2221
    %v2918 = vpack.c.b16 %v2226, %v2222
    %v2919 = vpack.c.b16 %v2227, %v2223
    %v2920 = vpack.c.b16 %v2232, %v2228
    %v2921 = vpack.c.b16 %v2233, %v2229
    %v2922 = vpack.c.b16 %v2234, %v2230
    %v2923 = vpack.c.b16 %v2235, %v2231
    %v2924 = vpack.c.b16 %v2240, %v2236
    %v2925 = vpack.c.b16 %v2241, %v2237
    %v2926 = vpack.c.b16 %v2242, %v2238
    %v2927 = vpack.c.b16 %v2243, %v2239
    %v2928 = vpack.c.b16 %v2248, %v2244
    %v2929 = vpack.c.b16 %v2249, %v2245
    %v2930 = vpack.c.b16 %v2250, %v2246
    %v2931 = vpack.c.b16 %v2251, %v2247
    %v2932 = vpack.c.b16 %v2256, %v2252
    %v2933 = vpack.c.b16 %v2257, %v2253
    %v2934 = vpack.c.b16 %v2258, %v2254
    %v2935 = vpack.c.b16 %v2259, %v2255
    %v2936 = vpack.c.b16 %v2264, %v2260
    %v2937 = vpack.c.b16 %v2265, %v2261
    %v2938 = vpack.c.b16 %v2266, %v2262
    %v2939 = vpack.c.b16 %v2267, %v2263
    %v2940 = vpack.c.b16 %v2272, %v2268
    %v2941 = vpack.c.b16 %v2273, %v2269
    %v2942 = vpack.c.b16 %v2274, %v2270
    %v2943 = vpack.c.b16 %v2275, %v2271
    %v2944 = vpack.c.b16 %v2280, %v2276
    %v2945 = vpack.c.b16 %v2281, %v2277
    %v2946 = vpack.c.b16 %v2282, %v2278
    %v2947 = vpack.c.b16 %v2283, %v2279
    %v2948 = vpack.c.b16 %v2288, %v2284
    %v2949 = vpack.c.b16 %v2289, %v2285
    %v2950 = vpack.c.b16 %v2290, %v2286
    %v2951 = vpack.c.b16 %v2291, %v2287
    %v2952 = vpack.c.b16 %v2296, %v2292
    %v2953 = vpack.c.b16 %v2297, %v2293
    %v2954 = vpack.c.b16 %v2298, %v2294
    %v2955 = vpack.c.b16 %v2299, %v2295
    %v2956 = vpack.c.b16 %v2304, %v2300
    %v2957 = vpack.c.b16 %v2305, %v2301
    %v2958 = vpack.c.b16 %v2306, %v2302
    %v2959 = vpack.c.b16 %v2307, %v2303
    %v2960 = vpack.c.b16 %v2312, %v2308
    %v2961 = vpack.c.b16 %v2313, %v2309
    %v2962 = vpack.c.b16 %v2314, %v2310
    %v2963 = vpack.c.b16 %v2315, %v2311
    %v2964 = vpack.c.b16 %v2320, %v2316
    %v2965 = vpack.c.b16 %v2321, %v2317
    %v2966 = vpack.c.b16 %v2322, %v2318
    %v2967 = vpack.c.b16 %v2323, %v2319
    %v2968 = vpack.c.b16 %v2328, %v2324
    %v2969 = vpack.c.b16 %v2329, %v2325
    %v2970 = vpack.c.b16 %v2330, %v2326
    %v2971 = vpack.c.b16 %v2331, %v2327
    %v2972 = vpack.c.b16 %v2336, %v2332
    %v2973 = vpack.c.b16 %v2337, %v2333
    %v2974 = vpack.c.b16 %v2338, %v2334
    %v2975 = vpack.c.b16 %v2339, %v2335
    %v2976 = vpack.c.b16 %v2344, %v2340
    %v2977 = vpack.c.b16 %v2345, %v2341
    %v2978 = vpack.c.b16 %v2346, %v2342
    %v2979 = vpack.c.b16 %v2347, %v2343
    %v2980 = vpack.c.b16 %v2352, %v2348
    %v2981 = vpack.c.b16 %v2353, %v2349
    %v2982 = vpack.c.b16 %v2354, %v2350
    %v2983 = vpack.c.b16 %v2355, %v2351
    %v2984 = vpack.c.b16 %v2360, %v2356
    %v2985 = vpack.c.b16 %v2361, %v2357
    %v2986 = vpack.c.b16 %v2362, %v2358
    %v2987 = vpack.c.b16 %v2363, %v2359
    %v2988 = vpack.c.b16 %v2368, %v2364
    %v2989 = vpack.c.b16 %v2369, %v2365
    %v2990 = vpack.c.b16 %v2370, %v2366
    %v2991 = vpack.c.b16 %v2371, %v2367
    %v2992 = vpack.c.b16 %v2376, %v2372
    %v2993 = vpack.c.b16 %v2377, %v2373
    %v2994 = vpack.c.b16 %v2378, %v2374
    %v2995 = vpack.c.b16 %v2379, %v2375
    %v2996 = vpack.c.b16 %v2384, %v2380
    %v2997 = vpack.c.b16 %v2385, %v2381
    %v2998 = vpack.c.b16 %v2386, %v2382
    %v2999 = vpack.c.b16 %v2387, %v2383
    %v3000 = vpack.c.b16 %v2392, %v2388
    %v3001 = vpack.c.b16 %v2393, %v2389
    %v3002 = vpack.c.b16 %v2394, %v2390
    %v3003 = vpack.c.b16 %v2395, %v2391
    %v3004 = vpack.c.b16 %v2400, %v2396
    %v3005 = vpack.c.b16 %v2401, %v2397
    %v3006 = vpack.c.b16 %v2402, %v2398
    %v3007 = vpack.c.b16 %v2403, %v2399
    %v3008 = vpack.c.b16 %v2408, %v2404
    %v3009 = vpack.c.b16 %v2409, %v2405
    %v3010 = vpack.c.b16 %v2410, %v2406
    %v3011 = vpack.c.b16 %v2411, %v2407
    %v3012 = vpack.c.b16 %v2416, %v2412
    %v3013 = vpack.c.b16 %v2417, %v2413
    %v3014 = vpack.c.b16 %v2418, %v2414
    %v3015 = vpack.c.b16 %v2419, %v2415
    %v3016 = vpack.c.b16 %v2424, %v2420
    %v3017 = vpack.c.b16 %v2425, %v2421
    %v3018 = vpack.c.b16 %v2426, %v2422
    %v3019 = vpack.c.b16 %v2427, %v2423
    %v3020 = vpack.c.b16 %v2432, %v2428
    %v3021 = vpack.c.b16 %v2433, %v2429
    %v3022 = vpack.c.b16 %v2434, %v2430
    %v3023 = vpack.c.b16 %v2435, %v2431
    %v3024 = vpack.c.b16 %v2440, %v2436
    %v3025 = vpack.c.b16 %v2441, %v2437
    %v3026 = vpack.c.b16 %v2442, %v2438
    %v3027 = vpack.c.b16 %v2443, %v2439
    %v3028 = vpack.c.b16 %v2448, %v2444
    %v3029 = vpack.c.b16 %v2449, %v2445
    %v3030 = vpack.c.b16 %v2450, %v2446
    %v3031 = vpack.c.b16 %v2451, %v2447
    %v3032 = vpack.c.b16 %v2456, %v2452
    %v3033 = vpack.c.b16 %v2457, %v2453
    %v3034 = vpack.c.b16 %v2458, %v2454
    %v3035 = vpack.c.b16 %v2459, %v2455
    %v3036 = vpack.c.b16 %v2464, %v2460
    %v3037 = vpack.c.b16 %v2465, %v2461
    %v3038 = vpack.c.b16 %v2466, %v2462
    %v3039 = vpack.c.b16 %v2467, %v2463
    %v3040 = vpack.c.b16 %v2472, %v2468
    %v3041 = vpack.c.b16 %v2473, %v2469
    %v3042 = vpack.c.b16 %v2474, %v2470
    %v3043 = vpack.c.b16 %v2475, %v2471
    %v3044 = vpack.c.b16 %v2480, %v2476
    %v3045 = vpack.c.b16 %v2481, %v2477
    %v3046 = vpack.c.b16 %v2482, %v2478
    %v3047 = vpack.c.b16 %v2483, %v2479
    %v3048 = vpack.c.b16 %v2488, %v2484
    %v3049 = vpack.c.b16 %v2489, %v2485
    %v3050 = vpack.c.b16 %v2490, %v2486
    %v3051 = vpack.c.b16 %v2491, %v2487
    %v3052 = vpack.c.b16 %v2496, %v2492
    %v3053 = vpack.c.b16 %v2497, %v2493
    %v3054 = vpack.c.b16 %v2498, %v2494
    %v3055 = vpack.c.b16 %v2499, %v2495
    %v3056 = vpack.c.b16 %v2504, %v2500
    %v3057 = vpack.c.b16 %v2505, %v2501
    %v3058 = vpack.c.b16 %v2506, %v2502
    %v3059 = vpack.c.b16 %v2507, %v2503
    %v3060 = vpack.c.b16 %v2512, %v2508
    %v3061 = vpack.c.b16 %v2513, %v2509
    %v3062 = vpack.c.b16 %v2514, %v2510
    %v3063 = vpack.c.b16 %v2515, %v2511
    %v3064 = vpack.c.b16 %v2520, %v2516
    %v3065 = vpack.c.b16 %v2521, %v2517
    %v3066 = vpack.c.b16 %v2522, %v2518
    %v3067 = vpack.c.b16 %v2523, %v2519
    %v3068 = vpack.c.b16 %v2528, %v2524
    %v3069 = vpack.c.b16 %v2529, %v2525
    %v3070 = vpack.c.b16 %v2530, %v2526
    %v3071 = vpack.c.b16 %v2531, %v2527
    %v3072 = vpack.c.b16 %v2536, %v2532
    %v3073 = vpack.c.b16 %v2537, %v2533
    %v3074 = vpack.c.b16 %v2538, %v2534
    %v3075 = vpack.c.b16 %v2539, %v2535
    %v3076 = vpack.c.b16 %v2544, %v2540
    %v3077 = vpack.c.b16 %v2545, %v2541
    %v3078 = vpack.c.b16 %v2546, %v2542
    %v3079 = vpack.c.b16 %v2547, %v2543
    %v3080 = vpack.c.b16 %v2552, %v2548
    %v3081 = vpack.c.b16 %v2553, %v2549
    %v3082 = vpack.c.b16 %v2554, %v2550
    %v3083 = vpack.c.b16 %v2555, %v2551
    %v3084 = vpack.c.b16 %v2560, %v2556
    %v3085 = vpack.c.b16 %v2561, %v2557
    %v3086 = vpack.c.b16 %v2562, %v2558
    %v3087 = vpack.c.b16 %v2563, %v2559
    %v3088 = vpack.c.b16 %v2568, %v2564
    %v3089 = vpack.c.b16 %v2569, %v2565
    %v3090 = vpack.c.b16 %v2570, %v2566
    %v3091 = vpack.c.b16 %v2571, %v2567
    %v3092 = vpack.c.b16 %v2576, %v2572
    %v3093 = vpack.c.b16 %v2577, %v2573
    %v3094 = vpack.c.b16 %v2578, %v2574
    %v3095 = vpack.c.b16 %v2579, %v2575
    %v3096 = vpack.c.b16 %v2584, %v2580
    %v3097 = vpack.c.b16 %v2585, %v2581
    %v3098 = vpack.c.b16 %v2586, %v2582
    %v3099 = vpack.c.b16 %v2587, %v2583
    %v3100 = vpack.c.b16 %v2592, %v2588
    %v3101 = vpack.c.b16 %v2593, %v2589
    %v3102 = vpack.c.b16 %v2594, %v2590
    %v3103 = vpack.c.b16 %v2595, %v2591
    %v3104 = vpack.c.b16 %v2600, %v2596
    %v3105 = vpack.c.b16 %v2601, %v2597
    %v3106 = vpack.c.b16 %v2602, %v2598
    %v3107 = vpack.c.b16 %v2603, %v2599
    %v3108 = vpack.c.b16 %v2608, %v2604
    %v3109 = vpack.c.b16 %v2609, %v2605
    %v3110 = vpack.c.b16 %v2610, %v2606
    %v3111 = vpack.c.b16 %v2611, %v2607
    %v3112 = vpack.c.b16 %v2616, %v2612
    %v3113 = vpack.c.b16 %v2617, %v2613
    %v3114 = vpack.c.b16 %v2618, %v2614
    %v3115 = vpack.c.b16 %v2619, %v2615
    %v3116 = vpack.c.b16 %v2624, %v2620
    %v3117 = vpack.c.b16 %v2625, %v2621
    %v3118 = vpack.c.b16 %v2626, %v2622
    %v3119 = vpack.c.b16 %v2627, %v2623
    %v3120 = vpack.c.b16 %v2632, %v2628
    %v3121 = vpack.c.b16 %v2633, %v2629
    %v3122 = vpack.c.b16 %v2634, %v2630
    %v3123 = vpack.c.b16 %v2635, %v2631
    %v3124 = vpack.c.b16 %v2640, %v2636
    %v3125 = vpack.c.b16 %v2641, %v2637
    %v3126 = vpack.c.b16 %v2642, %v2638
    %v3127 = vpack.c.b16 %v2643, %v2639
    %v3128 = vpack.c.b16 %v2648, %v2644
    %v3129 = vpack.c.b16 %v2649, %v2645
    %v3130 = vpack.c.b16 %v2650, %v2646
    %v3131 = vpack.c.b16 %v2651, %v2647
    %3612 = vmatprep.subr.bf16.mxu0 %v2681
    %3613 = vmatpush1.bf16.msra.mxu0 %v2680
    %3614 = vmatprep.subr.bf16.mxu0 %v2677
    %3615 = vmatpush1.bf16.msra.mxu0 %v2676
    %3616 = vmatprep.subr.bf16.mxu0 %v2673
    %3617 = vmatpush1.bf16.msra.mxu0 %v2672
    %3618 = vmatprep.subr.bf16.mxu0 %v2669
    %3619 = vmatpush1.bf16.msra.mxu0 %v2668
    %3620 = vmatprep.subr.bf16.mxu0 %v2665
    %3621 = vmatpush1.bf16.msra.mxu0 %v2664
    %3622 = vmatprep.subr.bf16.mxu0 %v2661
    %3623 = vmatpush1.bf16.msra.mxu0 %v2660
    %3624 = vmatprep.subr.bf16.mxu0 %v2657
    %3625 = vmatpush1.bf16.msra.mxu0 %v2656
    %3626 = vmatprep.subr.bf16.mxu0 %v2653
    %3627 = vmatpush1.bf16.msra.mxu0 %v2652
    %3628 = vmatprep.subr.bf16.mxu0 %v2713
    %3629 = vmatpush2.bf16.msra.mxu0 %v2712
    %3630 = vmatprep.subr.bf16.mxu0 %v2709
    %3631 = vmatpush2.bf16.msra.mxu0 %v2708
    %3632 = vmatprep.subr.bf16.mxu0 %v2705
    %3633 = vmatpush2.bf16.msra.mxu0 %v2704
    %3634 = vmatprep.subr.bf16.mxu0 %v2701
    %3635 = vmatpush2.bf16.msra.mxu0 %v2700
    %3636 = vmatprep.subr.bf16.mxu0 %v2697
    %3637 = vmatpush2.bf16.msra.mxu0 %v2696
    %3638 = vmatprep.subr.bf16.mxu0 %v2693
    %3639 = vmatpush2.bf16.msra.mxu0 %v2692
    %3640 = vmatprep.subr.bf16.mxu0 %v2689
    %3641 = vmatpush2.bf16.msra.mxu0 %v2688
    %3642 = vmatprep.subr.bf16.mxu0 %v2685
    %3643 = vmatpush2.bf16.msra.mxu0 %v2684
    %3644 = vmatprep.mubr.bf16.mxu0 %v696
    %3645 = vmatmul.mubr.bf16.gmra.mxu0 %v695
    %v3646 = vpop.f32.mrf.mxu0
    %v3647 = vadd.f32 %v1195, %v3646
    %v3648 = vpop.f32.mrf.mxu0
    %v3649 = vadd.f32 %v1199, %v3648
    %v3650 = vpop.f32.mrf.mxu0
    %v3651 = vpop.f32.mrf.mxu0
    %3652 = vdwg.mxu0
    %3653 = vmatprep.subr.bf16.mxu0 %v2745
    %3654 = vmatpush1.bf16.msra.mxu0 %v2744
    %3655 = vmatprep.subr.bf16.mxu0 %v2741
    %3656 = vmatpush1.bf16.msra.mxu0 %v2740
    %3657 = vmatprep.subr.bf16.mxu0 %v2737
    %3658 = vmatpush1.bf16.msra.mxu0 %v2736
    %3659 = vmatprep.subr.bf16.mxu0 %v2733
    %3660 = vmatpush1.bf16.msra.mxu0 %v2732
    %3661 = vmatprep.subr.bf16.mxu0 %v2729
    %3662 = vmatpush1.bf16.msra.mxu0 %v2728
    %3663 = vmatprep.subr.bf16.mxu0 %v2725
    %3664 = vmatpush1.bf16.msra.mxu0 %v2724
    %3665 = vmatprep.subr.bf16.mxu0 %v2721
    %3666 = vmatpush1.bf16.msra.mxu0 %v2720
    %3667 = vmatprep.subr.bf16.mxu0 %v2717
    %3668 = vmatpush1.bf16.msra.mxu0 %v2716
    %3669 = vmatprep.subr.bf16.mxu0 %v2777
    %3670 = vmatpush2.bf16.msra.mxu0 %v2776
    %3671 = vmatprep.subr.bf16.mxu0 %v2773
    %3672 = vmatpush2.bf16.msra.mxu0 %v2772
    %3673 = vmatprep.subr.bf16.mxu0 %v2769
    %3674 = vmatpush2.bf16.msra.mxu0 %v2768
    %3675 = vmatprep.subr.bf16.mxu0 %v2765
    %3676 = vmatpush2.bf16.msra.mxu0 %v2764
    %3677 = vmatprep.subr.bf16.mxu0 %v2761
    %3678 = vmatpush2.bf16.msra.mxu0 %v2760
    %3679 = vmatprep.subr.bf16.mxu0 %v2757
    %3680 = vmatpush2.bf16.msra.mxu0 %v2756
    %3681 = vmatprep.subr.bf16.mxu0 %v2753
    %3682 = vmatpush2.bf16.msra.mxu0 %v2752
    %3683 = vmatprep.subr.bf16.mxu0 %v2749
    %3684 = vmatpush2.bf16.msra.mxu0 %v2748
    %3685 = vmatprep.mubr.bf16.mxu0 %v698
    %3686 = vmatmul.mubr.bf16.gmra.mxu0 %v697
    %v3687 = vpop.f32.mrf.mxu0
    %v3688 = vadd.f32 %v3647, %v3687
    %v3689 = vpop.f32.mrf.mxu0
    %v3690 = vadd.f32 %v3649, %v3689
    %v3691 = vpop.f32.mrf.mxu0
    %v3692 = vpop.f32.mrf.mxu0
    %3693 = vdwg.mxu0
    %3694 = vmatprep.subr.bf16.mxu0 %v2809
    %3695 = vmatpush1.bf16.msra.mxu0 %v2808
    %3696 = vmatprep.subr.bf16.mxu0 %v2805
    %3697 = vmatpush1.bf16.msra.mxu0 %v2804
    %3698 = vmatprep.subr.bf16.mxu0 %v2801
    %3699 = vmatpush1.bf16.msra.mxu0 %v2800
    %3700 = vmatprep.subr.bf16.mxu0 %v2797
    %3701 = vmatpush1.bf16.msra.mxu0 %v2796
    %3702 = vmatprep.subr.bf16.mxu0 %v2793
    %3703 = vmatpush1.bf16.msra.mxu0 %v2792
    %3704 = vmatprep.subr.bf16.mxu0 %v2789
    %3705 = vmatpush1.bf16.msra.mxu0 %v2788
    %3706 = vmatprep.subr.bf16.mxu0 %v2785
    %3707 = vmatpush1.bf16.msra.mxu0 %v2784
    %3708 = vmatprep.subr.bf16.mxu0 %v2781
    %3709 = vmatpush1.bf16.msra.mxu0 %v2780
    %3710 = vmatprep.subr.bf16.mxu0 %v2841
    %3711 = vmatpush2.bf16.msra.mxu0 %v2840
    %3712 = vmatprep.subr.bf16.mxu0 %v2837
    %3713 = vmatpush2.bf16.msra.mxu0 %v2836
    %3714 = vmatprep.subr.bf16.mxu0 %v2833
    %3715 = vmatpush2.bf16.msra.mxu0 %v2832
    %3716 = vmatprep.subr.bf16.mxu0 %v2829
    %3717 = vmatpush2.bf16.msra.mxu0 %v2828
    %3718 = vmatprep.subr.bf16.mxu0 %v2825
    %3719 = vmatpush2.bf16.msra.mxu0 %v2824
    %3720 = vmatprep.subr.bf16.mxu0 %v2821
    %3721 = vmatpush2.bf16.msra.mxu0 %v2820
    %3722 = vmatprep.subr.bf16.mxu0 %v2817
    %3723 = vmatpush2.bf16.msra.mxu0 %v2816
    %3724 = vmatprep.subr.bf16.mxu0 %v2813
    %3725 = vmatpush2.bf16.msra.mxu0 %v2812
    %3726 = vmatprep.mubr.bf16.mxu0 %v700
    %3727 = vmatmul.mubr.bf16.gmra.mxu0 %v699
    %v3728 = vpop.f32.mrf.mxu0
    %v3729 = vadd.f32 %v3688, %v3728
    %v3730 = vpop.f32.mrf.mxu0
    %v3731 = vadd.f32 %v3690, %v3730
    %v3732 = vpop.f32.mrf.mxu0
    %v3733 = vpop.f32.mrf.mxu0
    %3734 = vdwg.mxu0
    %3735 = vmatprep.subr.bf16.mxu0 %v2873
    %3736 = vmatpush1.bf16.msra.mxu0 %v2872
    %3737 = vmatprep.subr.bf16.mxu0 %v2869
    %3738 = vmatpush1.bf16.msra.mxu0 %v2868
    %3739 = vmatprep.subr.bf16.mxu0 %v2865
    %3740 = vmatpush1.bf16.msra.mxu0 %v2864
    %3741 = vmatprep.subr.bf16.mxu0 %v2861
    %3742 = vmatpush1.bf16.msra.mxu0 %v2860
    %3743 = vmatprep.subr.bf16.mxu0 %v2857
    %3744 = vmatpush1.bf16.msra.mxu0 %v2856
    %3745 = vmatprep.subr.bf16.mxu0 %v2853
    %3746 = vmatpush1.bf16.msra.mxu0 %v2852
    %3747 = vmatprep.subr.bf16.mxu0 %v2849
    %3748 = vmatpush1.bf16.msra.mxu0 %v2848
    %3749 = vmatprep.subr.bf16.mxu0 %v2845
    %3750 = vmatpush1.bf16.msra.mxu0 %v2844
    %3751 = vmatprep.subr.bf16.mxu0 %v2905
    %3752 = vmatpush2.bf16.msra.mxu0 %v2904
    %3753 = vmatprep.subr.bf16.mxu0 %v2901
    %3754 = vmatpush2.bf16.msra.mxu0 %v2900
    %3755 = vmatprep.subr.bf16.mxu0 %v2897
    %3756 = vmatpush2.bf16.msra.mxu0 %v2896
    %3757 = vmatprep.subr.bf16.mxu0 %v2893
    %3758 = vmatpush2.bf16.msra.mxu0 %v2892
    %3759 = vmatprep.subr.bf16.mxu0 %v2889
    %3760 = vmatpush2.bf16.msra.mxu0 %v2888
    %3761 = vmatprep.subr.bf16.mxu0 %v2885
    %3762 = vmatpush2.bf16.msra.mxu0 %v2884
    %3763 = vmatprep.subr.bf16.mxu0 %v2881
    %3764 = vmatpush2.bf16.msra.mxu0 %v2880
    %3765 = vmatprep.subr.bf16.mxu0 %v2877
    %3766 = vmatpush2.bf16.msra.mxu0 %v2876
    %3767 = vmatprep.mubr.bf16.mxu0 %v702
    %3768 = vmatmul.mubr.bf16.gmra.mxu0 %v701
    %v3769 = vpop.f32.mrf.mxu0
    %v3770 = vadd.f32 %v3729, %v3769
    %v3771 = vpop.f32.mrf.mxu0
    %v3772 = vadd.f32 %v3731, %v3771
    %v3773 = vpop.f32.mrf.mxu0
    %v3774 = vpop.f32.mrf.mxu0
    %3775 = vdwg.mxu0
    %3776 = vmatprep.subr.bf16.mxu0 %v2937
    %3777 = vmatpush1.bf16.msra.mxu0 %v2936
    %3778 = vmatprep.subr.bf16.mxu0 %v2933
    %3779 = vmatpush1.bf16.msra.mxu0 %v2932
    %3780 = vmatprep.subr.bf16.mxu0 %v2929
    %3781 = vmatpush1.bf16.msra.mxu0 %v2928
    %3782 = vmatprep.subr.bf16.mxu0 %v2925
    %3783 = vmatpush1.bf16.msra.mxu0 %v2924
    %3784 = vmatprep.subr.bf16.mxu0 %v2921
    %3785 = vmatpush1.bf16.msra.mxu0 %v2920
    %3786 = vmatprep.subr.bf16.mxu0 %v2917
    %3787 = vmatpush1.bf16.msra.mxu0 %v2916
    %3788 = vmatprep.subr.bf16.mxu0 %v2913
    %3789 = vmatpush1.bf16.msra.mxu0 %v2912
    %3790 = vmatprep.subr.bf16.mxu0 %v2909
    %3791 = vmatpush1.bf16.msra.mxu0 %v2908
    %3792 = vmatprep.subr.bf16.mxu0 %v2969
    %3793 = vmatpush2.bf16.msra.mxu0 %v2968
    %3794 = vmatprep.subr.bf16.mxu0 %v2965
    %3795 = vmatpush2.bf16.msra.mxu0 %v2964
    %3796 = vmatprep.subr.bf16.mxu0 %v2961
    %3797 = vmatpush2.bf16.msra.mxu0 %v2960
    %3798 = vmatprep.subr.bf16.mxu0 %v2957
    %3799 = vmatpush2.bf16.msra.mxu0 %v2956
    %3800 = vmatprep.subr.bf16.mxu0 %v2953
    %3801 = vmatpush2.bf16.msra.mxu0 %v2952
    %3802 = vmatprep.subr.bf16.mxu0 %v2949
    %3803 = vmatpush2.bf16.msra.mxu0 %v2948
    %3804 = vmatprep.subr.bf16.mxu0 %v2945
    %3805 = vmatpush2.bf16.msra.mxu0 %v2944
    %3806 = vmatprep.subr.bf16.mxu0 %v2941
    %3807 = vmatpush2.bf16.msra.mxu0 %v2940
    %3808 = vmatprep.mubr.bf16.mxu0 %v704
    %3809 = vmatmul.mubr.bf16.gmra.mxu0 %v703
    %v3810 = vpop.f32.mrf.mxu0
    %v3811 = vadd.f32 %v3770, %v3810
    %v3812 = vpop.f32.mrf.mxu0
    %v3813 = vadd.f32 %v3772, %v3812
    %v3814 = vpop.f32.mrf.mxu0
    %v3815 = vpop.f32.mrf.mxu0
    %3816 = vdwg.mxu0
    %3817 = vmatprep.subr.bf16.mxu0 %v3001
    %3818 = vmatpush1.bf16.msra.mxu0 %v3000
    %3819 = vmatprep.subr.bf16.mxu0 %v2997
    %3820 = vmatpush1.bf16.msra.mxu0 %v2996
    %3821 = vmatprep.subr.bf16.mxu0 %v2993
    %3822 = vmatpush1.bf16.msra.mxu0 %v2992
    %3823 = vmatprep.subr.bf16.mxu0 %v2989
    %3824 = vmatpush1.bf16.msra.mxu0 %v2988
    %3825 = vmatprep.subr.bf16.mxu0 %v2985
    %3826 = vmatpush1.bf16.msra.mxu0 %v2984
    %3827 = vmatprep.subr.bf16.mxu0 %v2981
    %3828 = vmatpush1.bf16.msra.mxu0 %v2980
    %3829 = vmatprep.subr.bf16.mxu0 %v2977
    %3830 = vmatpush1.bf16.msra.mxu0 %v2976
    %3831 = vmatprep.subr.bf16.mxu0 %v2973
    %3832 = vmatpush1.bf16.msra.mxu0 %v2972
    %3833 = vmatprep.subr.bf16.mxu0 %v3033
    %3834 = vmatpush2.bf16.msra.mxu0 %v3032
    %3835 = vmatprep.subr.bf16.mxu0 %v3029
    %3836 = vmatpush2.bf16.msra.mxu0 %v3028
    %3837 = vmatprep.subr.bf16.mxu0 %v3025
    %3838 = vmatpush2.bf16.msra.mxu0 %v3024
    %3839 = vmatprep.subr.bf16.mxu0 %v3021
    %3840 = vmatpush2.bf16.msra.mxu0 %v3020
    %3841 = vmatprep.subr.bf16.mxu0 %v3017
    %3842 = vmatpush2.bf16.msra.mxu0 %v3016
    %3843 = vmatprep.subr.bf16.mxu0 %v3013
    %3844 = vmatpush2.bf16.msra.mxu0 %v3012
    %3845 = vmatprep.subr.bf16.mxu0 %v3009
    %3846 = vmatpush2.bf16.msra.mxu0 %v3008
    %3847 = vmatprep.subr.bf16.mxu0 %v3005
    %3848 = vmatpush2.bf16.msra.mxu0 %v3004
    %3849 = vmatprep.mubr.bf16.mxu0 %v706
    %3850 = vmatmul.mubr.bf16.gmra.mxu0 %v705
    %v3851 = vpop.f32.mrf.mxu0
    %v3852 = vadd.f32 %v3811, %v3851
    %v3853 = vpop.f32.mrf.mxu0
    %v3854 = vadd.f32 %v3813, %v3853
    %v3855 = vpop.f32.mrf.mxu0
    %v3856 = vpop.f32.mrf.mxu0
    %3857 = vdwg.mxu0
    %3858 = vmatprep.subr.bf16.mxu0 %v3065
    %3859 = vmatpush1.bf16.msra.mxu0 %v3064
    %3860 = vmatprep.subr.bf16.mxu0 %v3061
    %3861 = vmatpush1.bf16.msra.mxu0 %v3060
    %3862 = vmatprep.subr.bf16.mxu0 %v3057
    %3863 = vmatpush1.bf16.msra.mxu0 %v3056
    %3864 = vmatprep.subr.bf16.mxu0 %v3053
    %3865 = vmatpush1.bf16.msra.mxu0 %v3052
    %3866 = vmatprep.subr.bf16.mxu0 %v3049
    %3867 = vmatpush1.bf16.msra.mxu0 %v3048
    %3868 = vmatprep.subr.bf16.mxu0 %v3045
    %3869 = vmatpush1.bf16.msra.mxu0 %v3044
    %3870 = vmatprep.subr.bf16.mxu0 %v3041
    %3871 = vmatpush1.bf16.msra.mxu0 %v3040
    %3872 = vmatprep.subr.bf16.mxu0 %v3037
    %3873 = vmatpush1.bf16.msra.mxu0 %v3036
    %3874 = vmatprep.subr.bf16.mxu0 %v3097
    %3875 = vmatpush2.bf16.msra.mxu0 %v3096
    %3876 = vmatprep.subr.bf16.mxu0 %v3093
    %3877 = vmatpush2.bf16.msra.mxu0 %v3092
    %3878 = vmatprep.subr.bf16.mxu0 %v3089
    %3879 = vmatpush2.bf16.msra.mxu0 %v3088
    %3880 = vmatprep.subr.bf16.mxu0 %v3085
    %3881 = vmatpush2.bf16.msra.mxu0 %v3084
    %3882 = vmatprep.subr.bf16.mxu0 %v3081
    %3883 = vmatpush2.bf16.msra.mxu0 %v3080
    %3884 = vmatprep.subr.bf16.mxu0 %v3077
    %3885 = vmatpush2.bf16.msra.mxu0 %v3076
    %3886 = vmatprep.subr.bf16.mxu0 %v3073
    %3887 = vmatpush2.bf16.msra.mxu0 %v3072
    %3888 = vmatprep.subr.bf16.mxu0 %v3069
    %3889 = vmatpush2.bf16.msra.mxu0 %v3068
    %3890 = vmatprep.mubr.bf16.mxu0 %v708
    %3891 = vmatmul.mubr.bf16.gmra.mxu0 %v707
    %v3892 = vpop.f32.mrf.mxu0
    %v3893 = vadd.f32 %v3852, %v3892
    %v3894 = vpop.f32.mrf.mxu0
    %v3895 = vadd.f32 %v3854, %v3894
    %v3896 = vpop.f32.mrf.mxu0
    %v3897 = vpop.f32.mrf.mxu0
    %3898 = vdwg.mxu0
    %3899 = vmatprep.subr.bf16.mxu0 %v3129
    %3900 = vmatpush1.bf16.msra.mxu0 %v3128
    %3901 = vmatprep.subr.bf16.mxu0 %v3125
    %3902 = vmatpush1.bf16.msra.mxu0 %v3124
    %3903 = vmatprep.subr.bf16.mxu0 %v3121
    %3904 = vmatpush1.bf16.msra.mxu0 %v3120
    %3905 = vmatprep.subr.bf16.mxu0 %v3117
    %3906 = vmatpush1.bf16.msra.mxu0 %v3116
    %3907 = vmatprep.subr.bf16.mxu0 %v3113
    %3908 = vmatpush1.bf16.msra.mxu0 %v3112
    %3909 = vmatprep.subr.bf16.mxu0 %v3109
    %3910 = vmatpush1.bf16.msra.mxu0 %v3108
    %3911 = vmatprep.subr.bf16.mxu0 %v3105
    %3912 = vmatpush1.bf16.msra.mxu0 %v3104
    %3913 = vmatprep.subr.bf16.mxu0 %v3101
    %3914 = vmatpush1.bf16.msra.mxu0 %v3100
    %3915 = vmatprep.subr.bf16.mxu0 0
    %3916 = vmatpush2.bf16.msra.mxu0 0
    %3917 = vmatprep.subr.bf16.mxu0 0
    %3918 = vmatpush2.bf16.msra.mxu0 0
    %3919 = vmatprep.subr.bf16.mxu0 0
    %3920 = vmatpush2.bf16.msra.mxu0 0
    %3921 = vmatprep.subr.bf16.mxu0 0
    %3922 = vmatpush2.bf16.msra.mxu0 0
    %3923 = vmatprep.subr.bf16.mxu0 0
    %3924 = vmatpush2.bf16.msra.mxu0 0
    %3925 = vmatprep.subr.bf16.mxu0 0
    %3926 = vmatpush2.bf16.msra.mxu0 0
    %3927 = vmatprep.subr.bf16.mxu0 0
    %3928 = vmatpush2.bf16.msra.mxu0 0
    %3929 = vmatprep.subr.bf16.mxu0 0
    %3930 = vmatpush2.bf16.msra.mxu0 0
    %3931 = vmatprep.mubr.bf16.mxu0 0
    %3932 = vmatmul.mubr.bf16.gmra.mxu0 %v709
    %v3933 = vpop.f32.mrf.mxu0
    %v3934 = vadd.f32 %v3893, %v3933
    %v3935 = vpop.f32.mrf.mxu0
    %v3936 = vadd.f32 %v3895, %v3935
    %v3937 = vpop.f32.mrf.mxu0
    %v3938 = vpop.f32.mrf.mxu0
    %3939 = vdwg.mxu0
    %3940 = vmatprep.subr.bf16.mxu0 %v2683
    %3941 = vmatpush1.bf16.msra.mxu0 %v2682
    %3942 = vmatprep.subr.bf16.mxu0 %v2679
    %3943 = vmatpush1.bf16.msra.mxu0 %v2678
    %3944 = vmatprep.subr.bf16.mxu0 %v2675
    %3945 = vmatpush1.bf16.msra.mxu0 %v2674
    %3946 = vmatprep.subr.bf16.mxu0 %v2671
    %3947 = vmatpush1.bf16.msra.mxu0 %v2670
    %3948 = vmatprep.subr.bf16.mxu0 %v2667
    %3949 = vmatpush1.bf16.msra.mxu0 %v2666
    %3950 = vmatprep.subr.bf16.mxu0 %v2663
    %3951 = vmatpush1.bf16.msra.mxu0 %v2662
    %3952 = vmatprep.subr.bf16.mxu0 %v2659
    %3953 = vmatpush1.bf16.msra.mxu0 %v2658
    %3954 = vmatprep.subr.bf16.mxu0 %v2655
    %3955 = vmatpush1.bf16.msra.mxu0 %v2654
    %3956 = vmatprep.subr.bf16.mxu0 %v2715
    %3957 = vmatpush2.bf16.msra.mxu0 %v2714
    %3958 = vmatprep.subr.bf16.mxu0 %v2711
    %3959 = vmatpush2.bf16.msra.mxu0 %v2710
    %3960 = vmatprep.subr.bf16.mxu0 %v2707
    %3961 = vmatpush2.bf16.msra.mxu0 %v2706
    %3962 = vmatprep.subr.bf16.mxu0 %v2703
    %3963 = vmatpush2.bf16.msra.mxu0 %v2702
    %3964 = vmatprep.subr.bf16.mxu0 %v2699
    %3965 = vmatpush2.bf16.msra.mxu0 %v2698
    %3966 = vmatprep.subr.bf16.mxu0 %v2695
    %3967 = vmatpush2.bf16.msra.mxu0 %v2694
    %3968 = vmatprep.subr.bf16.mxu0 %v2691
    %3969 = vmatpush2.bf16.msra.mxu0 %v2690
    %3970 = vmatprep.subr.bf16.mxu0 %v2687
    %3971 = vmatpush2.bf16.msra.mxu0 %v2686
    %3972 = vmatprep.mubr.bf16.mxu0 %v696
    %3973 = vmatmul.mubr.bf16.gmra.mxu0 %v695
    %v3974 = vpop.f32.mrf.mxu0
    %v3975 = vadd.f32 %v1203, %v3974
    %v3976 = vpop.f32.mrf.mxu0
    %v3977 = vadd.f32 %v1207, %v3976
    %v3978 = vpop.f32.mrf.mxu0
    %v3979 = vpop.f32.mrf.mxu0
    %3980 = vdwg.mxu0
    %3981 = vmatprep.subr.bf16.mxu0 %v2747
    %3982 = vmatpush1.bf16.msra.mxu0 %v2746
    %3983 = vmatprep.subr.bf16.mxu0 %v2743
    %3984 = vmatpush1.bf16.msra.mxu0 %v2742
    %3985 = vmatprep.subr.bf16.mxu0 %v2739
    %3986 = vmatpush1.bf16.msra.mxu0 %v2738
    %3987 = vmatprep.subr.bf16.mxu0 %v2735
    %3988 = vmatpush1.bf16.msra.mxu0 %v2734
    %3989 = vmatprep.subr.bf16.mxu0 %v2731
    %3990 = vmatpush1.bf16.msra.mxu0 %v2730
    %3991 = vmatprep.subr.bf16.mxu0 %v2727
    %3992 = vmatpush1.bf16.msra.mxu0 %v2726
    %3993 = vmatprep.subr.bf16.mxu0 %v2723
    %3994 = vmatpush1.bf16.msra.mxu0 %v2722
    %3995 = vmatprep.subr.bf16.mxu0 %v2719
    %3996 = vmatpush1.bf16.msra.mxu0 %v2718
    %3997 = vmatprep.subr.bf16.mxu0 %v2779
    %3998 = vmatpush2.bf16.msra.mxu0 %v2778
    %3999 = vmatprep.subr.bf16.mxu0 %v2775
    %4000 = vmatpush2.bf16.msra.mxu0 %v2774
    %4001 = vmatprep.subr.bf16.mxu0 %v2771
    %4002 = vmatpush2.bf16.msra.mxu0 %v2770
    %4003 = vmatprep.subr.bf16.mxu0 %v2767
    %4004 = vmatpush2.bf16.msra.mxu0 %v2766
    %4005 = vmatprep.subr.bf16.mxu0 %v2763
    %4006 = vmatpush2.bf16.msra.mxu0 %v2762
    %4007 = vmatprep.subr.bf16.mxu0 %v2759
    %4008 = vmatpush2.bf16.msra.mxu0 %v2758
    %4009 = vmatprep.subr.bf16.mxu0 %v2755
    %4010 = vmatpush2.bf16.msra.mxu0 %v2754
    %4011 = vmatprep.subr.bf16.mxu0 %v2751
    %4012 = vmatpush2.bf16.msra.mxu0 %v2750
    %4013 = vmatprep.mubr.bf16.mxu0 %v698
    %4014 = vmatmul.mubr.bf16.gmra.mxu0 %v697
    %v4015 = vpop.f32.mrf.mxu0
    %v4016 = vadd.f32 %v3975, %v4015
    %v4017 = vpop.f32.mrf.mxu0
    %v4018 = vadd.f32 %v3977, %v4017
    %v4019 = vpop.f32.mrf.mxu0
    %v4020 = vpop.f32.mrf.mxu0
    %4021 = vdwg.mxu0
    %4022 = vmatprep.subr.bf16.mxu0 %v2811
    %4023 = vmatpush1.bf16.msra.mxu0 %v2810
    %4024 = vmatprep.subr.bf16.mxu0 %v2807
    %4025 = vmatpush1.bf16.msra.mxu0 %v2806
    %4026 = vmatprep.subr.bf16.mxu0 %v2803
    %4027 = vmatpush1.bf16.msra.mxu0 %v2802
    %4028 = vmatprep.subr.bf16.mxu0 %v2799
    %4029 = vmatpush1.bf16.msra.mxu0 %v2798
    %4030 = vmatprep.subr.bf16.mxu0 %v2795
    %4031 = vmatpush1.bf16.msra.mxu0 %v2794
    %4032 = vmatprep.subr.bf16.mxu0 %v2791
    %4033 = vmatpush1.bf16.msra.mxu0 %v2790
    %4034 = vmatprep.subr.bf16.mxu0 %v2787
    %4035 = vmatpush1.bf16.msra.mxu0 %v2786
    %4036 = vmatprep.subr.bf16.mxu0 %v2783
    %4037 = vmatpush1.bf16.msra.mxu0 %v2782
    %4038 = vmatprep.subr.bf16.mxu0 %v2843
    %4039 = vmatpush2.bf16.msra.mxu0 %v2842
    %4040 = vmatprep.subr.bf16.mxu0 %v2839
    %4041 = vmatpush2.bf16.msra.mxu0 %v2838
    %4042 = vmatprep.subr.bf16.mxu0 %v2835
    %4043 = vmatpush2.bf16.msra.mxu0 %v2834
    %4044 = vmatprep.subr.bf16.mxu0 %v2831
    %4045 = vmatpush2.bf16.msra.mxu0 %v2830
    %4046 = vmatprep.subr.bf16.mxu0 %v2827
    %4047 = vmatpush2.bf16.msra.mxu0 %v2826
    %4048 = vmatprep.subr.bf16.mxu0 %v2823
    %4049 = vmatpush2.bf16.msra.mxu0 %v2822
    %4050 = vmatprep.subr.bf16.mxu0 %v2819
    %4051 = vmatpush2.bf16.msra.mxu0 %v2818
    %4052 = vmatprep.subr.bf16.mxu0 %v2815
    %4053 = vmatpush2.bf16.msra.mxu0 %v2814
    %4054 = vmatprep.mubr.bf16.mxu0 %v700
    %4055 = vmatmul.mubr.bf16.gmra.mxu0 %v699
    %v4056 = vpop.f32.mrf.mxu0
    %v4057 = vadd.f32 %v4016, %v4056
    %v4058 = vpop.f32.mrf.mxu0
    %v4059 = vadd.f32 %v4018, %v4058
    %v4060 = vpop.f32.mrf.mxu0
    %v4061 = vpop.f32.mrf.mxu0
    %4062 = vdwg.mxu0
    %4063 = vmatprep.subr.bf16.mxu0 %v2875
    %4064 = vmatpush1.bf16.msra.mxu0 %v2874
    %4065 = vmatprep.subr.bf16.mxu0 %v2871
    %4066 = vmatpush1.bf16.msra.mxu0 %v2870
    %4067 = vmatprep.subr.bf16.mxu0 %v2867
    %4068 = vmatpush1.bf16.msra.mxu0 %v2866
    %4069 = vmatprep.subr.bf16.mxu0 %v2863
    %4070 = vmatpush1.bf16.msra.mxu0 %v2862
    %4071 = vmatprep.subr.bf16.mxu0 %v2859
    %4072 = vmatpush1.bf16.msra.mxu0 %v2858
    %4073 = vmatprep.subr.bf16.mxu0 %v2855
    %4074 = vmatpush1.bf16.msra.mxu0 %v2854
    %4075 = vmatprep.subr.bf16.mxu0 %v2851
    %4076 = vmatpush1.bf16.msra.mxu0 %v2850
    %4077 = vmatprep.subr.bf16.mxu0 %v2847
    %4078 = vmatpush1.bf16.msra.mxu0 %v2846
    %4079 = vmatprep.subr.bf16.mxu0 %v2907
    %4080 = vmatpush2.bf16.msra.mxu0 %v2906
    %4081 = vmatprep.subr.bf16.mxu0 %v2903
    %4082 = vmatpush2.bf16.msra.mxu0 %v2902
    %4083 = vmatprep.subr.bf16.mxu0 %v2899
    %4084 = vmatpush2.bf16.msra.mxu0 %v2898
    %4085 = vmatprep.subr.bf16.mxu0 %v2895
    %4086 = vmatpush2.bf16.msra.mxu0 %v2894
    %4087 = vmatprep.subr.bf16.mxu0 %v2891
    %4088 = vmatpush2.bf16.msra.mxu0 %v2890
    %4089 = vmatprep.subr.bf16.mxu0 %v2887
    %4090 = vmatpush2.bf16.msra.mxu0 %v2886
    %4091 = vmatprep.subr.bf16.mxu0 %v2883
    %4092 = vmatpush2.bf16.msra.mxu0 %v2882
    %4093 = vmatprep.subr.bf16.mxu0 %v2879
    %4094 = vmatpush2.bf16.msra.mxu0 %v2878
    %4095 = vmatprep.mubr.bf16.mxu0 %v702
    %4096 = vmatmul.mubr.bf16.gmra.mxu0 %v701
    %v4097 = vpop.f32.mrf.mxu0
    %v4098 = vadd.f32 %v4057, %v4097
    %v4099 = vpop.f32.mrf.mxu0
    %v4100 = vadd.f32 %v4059, %v4099
    %v4101 = vpop.f32.mrf.mxu0
    %v4102 = vpop.f32.mrf.mxu0
    %4103 = vdwg.mxu0
    %4104 = vmatprep.subr.bf16.mxu0 %v2939
    %4105 = vmatpush1.bf16.msra.mxu0 %v2938
    %4106 = vmatprep.subr.bf16.mxu0 %v2935
    %4107 = vmatpush1.bf16.msra.mxu0 %v2934
    %4108 = vmatprep.subr.bf16.mxu0 %v2931
    %4109 = vmatpush1.bf16.msra.mxu0 %v2930
    %4110 = vmatprep.subr.bf16.mxu0 %v2927
    %4111 = vmatpush1.bf16.msra.mxu0 %v2926
    %4112 = vmatprep.subr.bf16.mxu0 %v2923
    %4113 = vmatpush1.bf16.msra.mxu0 %v2922
    %4114 = vmatprep.subr.bf16.mxu0 %v2919
    %4115 = vmatpush1.bf16.msra.mxu0 %v2918
    %4116 = vmatprep.subr.bf16.mxu0 %v2915
    %4117 = vmatpush1.bf16.msra.mxu0 %v2914
    %4118 = vmatprep.subr.bf16.mxu0 %v2911
    %4119 = vmatpush1.bf16.msra.mxu0 %v2910
    %4120 = vmatprep.subr.bf16.mxu0 %v2971
    %4121 = vmatpush2.bf16.msra.mxu0 %v2970
    %4122 = vmatprep.subr.bf16.mxu0 %v2967
    %4123 = vmatpush2.bf16.msra.mxu0 %v2966
    %4124 = vmatprep.subr.bf16.mxu0 %v2963
    %4125 = vmatpush2.bf16.msra.mxu0 %v2962
    %4126 = vmatprep.subr.bf16.mxu0 %v2959
    %4127 = vmatpush2.bf16.msra.mxu0 %v2958
    %4128 = vmatprep.subr.bf16.mxu0 %v2955
    %4129 = vmatpush2.bf16.msra.mxu0 %v2954
    %4130 = vmatprep.subr.bf16.mxu0 %v2951
    %4131 = vmatpush2.bf16.msra.mxu0 %v2950
    %4132 = vmatprep.subr.bf16.mxu0 %v2947
    %4133 = vmatpush2.bf16.msra.mxu0 %v2946
    %4134 = vmatprep.subr.bf16.mxu0 %v2943
    %4135 = vmatpush2.bf16.msra.mxu0 %v2942
    %4136 = vmatprep.mubr.bf16.mxu0 %v704
    %4137 = vmatmul.mubr.bf16.gmra.mxu0 %v703
    %v4138 = vpop.f32.mrf.mxu0
    %v4139 = vadd.f32 %v4098, %v4138
    %v4140 = vpop.f32.mrf.mxu0
    %v4141 = vadd.f32 %v4100, %v4140
    %v4142 = vpop.f32.mrf.mxu0
    %v4143 = vpop.f32.mrf.mxu0
    %4144 = vdwg.mxu0
    %4145 = vmatprep.subr.bf16.mxu0 %v3003
    %4146 = vmatpush1.bf16.msra.mxu0 %v3002
    %4147 = vmatprep.subr.bf16.mxu0 %v2999
    %4148 = vmatpush1.bf16.msra.mxu0 %v2998
    %4149 = vmatprep.subr.bf16.mxu0 %v2995
    %4150 = vmatpush1.bf16.msra.mxu0 %v2994
    %4151 = vmatprep.subr.bf16.mxu0 %v2991
    %4152 = vmatpush1.bf16.msra.mxu0 %v2990
    %4153 = vmatprep.subr.bf16.mxu0 %v2987
    %4154 = vmatpush1.bf16.msra.mxu0 %v2986
    %4155 = vmatprep.subr.bf16.mxu0 %v2983
    %4156 = vmatpush1.bf16.msra.mxu0 %v2982
    %4157 = vmatprep.subr.bf16.mxu0 %v2979
    %4158 = vmatpush1.bf16.msra.mxu0 %v2978
    %4159 = vmatprep.subr.bf16.mxu0 %v2975
    %4160 = vmatpush1.bf16.msra.mxu0 %v2974
    %4161 = vmatprep.subr.bf16.mxu0 %v3035
    %4162 = vmatpush2.bf16.msra.mxu0 %v3034
    %4163 = vmatprep.subr.bf16.mxu0 %v3031
    %4164 = vmatpush2.bf16.msra.mxu0 %v3030
    %4165 = vmatprep.subr.bf16.mxu0 %v3027
    %4166 = vmatpush2.bf16.msra.mxu0 %v3026
    %4167 = vmatprep.subr.bf16.mxu0 %v3023
    %4168 = vmatpush2.bf16.msra.mxu0 %v3022
    %4169 = vmatprep.subr.bf16.mxu0 %v3019
    %4170 = vmatpush2.bf16.msra.mxu0 %v3018
    %4171 = vmatprep.subr.bf16.mxu0 %v3015
    %4172 = vmatpush2.bf16.msra.mxu0 %v3014
    %4173 = vmatprep.subr.bf16.mxu0 %v3011
    %4174 = vmatpush2.bf16.msra.mxu0 %v3010
    %4175 = vmatprep.subr.bf16.mxu0 %v3007
    %4176 = vmatpush2.bf16.msra.mxu0 %v3006
    %4177 = vmatprep.mubr.bf16.mxu0 %v706
    %4178 = vmatmul.mubr.bf16.gmra.mxu0 %v705
    %v4179 = vpop.f32.mrf.mxu0
    %v4180 = vadd.f32 %v4139, %v4179
    %v4181 = vpop.f32.mrf.mxu0
    %v4182 = vadd.f32 %v4141, %v4181
    %v4183 = vpop.f32.mrf.mxu0
    %v4184 = vpop.f32.mrf.mxu0
    %4185 = vdwg.mxu0
    %4186 = vmatprep.subr.bf16.mxu0 %v3067
    %4187 = vmatpush1.bf16.msra.mxu0 %v3066
    %4188 = vmatprep.subr.bf16.mxu0 %v3063
    %4189 = vmatpush1.bf16.msra.mxu0 %v3062
    %4190 = vmatprep.subr.bf16.mxu0 %v3059
    %4191 = vmatpush1.bf16.msra.mxu0 %v3058
    %4192 = vmatprep.subr.bf16.mxu0 %v3055
    %4193 = vmatpush1.bf16.msra.mxu0 %v3054
    %4194 = vmatprep.subr.bf16.mxu0 %v3051
    %4195 = vmatpush1.bf16.msra.mxu0 %v3050
    %4196 = vmatprep.subr.bf16.mxu0 %v3047
    %4197 = vmatpush1.bf16.msra.mxu0 %v3046
    %4198 = vmatprep.subr.bf16.mxu0 %v3043
    %4199 = vmatpush1.bf16.msra.mxu0 %v3042
    %4200 = vmatprep.subr.bf16.mxu0 %v3039
    %4201 = vmatpush1.bf16.msra.mxu0 %v3038
    %4202 = vmatprep.subr.bf16.mxu0 %v3099
    %4203 = vmatpush2.bf16.msra.mxu0 %v3098
    %4204 = vmatprep.subr.bf16.mxu0 %v3095
    %4205 = vmatpush2.bf16.msra.mxu0 %v3094
    %4206 = vmatprep.subr.bf16.mxu0 %v3091
    %4207 = vmatpush2.bf16.msra.mxu0 %v3090
    %4208 = vmatprep.subr.bf16.mxu0 %v3087
    %4209 = vmatpush2.bf16.msra.mxu0 %v3086
    %4210 = vmatprep.subr.bf16.mxu0 %v3083
    %4211 = vmatpush2.bf16.msra.mxu0 %v3082
    %4212 = vmatprep.subr.bf16.mxu0 %v3079
    %4213 = vmatpush2.bf16.msra.mxu0 %v3078
    %4214 = vmatprep.subr.bf16.mxu0 %v3075
    %4215 = vmatpush2.bf16.msra.mxu0 %v3074
    %4216 = vmatprep.subr.bf16.mxu0 %v3071
    %4217 = vmatpush2.bf16.msra.mxu0 %v3070
    %4218 = vmatprep.mubr.bf16.mxu0 %v708
    %4219 = vmatmul.mubr.bf16.gmra.mxu0 %v707
    %v4220 = vpop.f32.mrf.mxu0
    %v4221 = vadd.f32 %v4180, %v4220
    %v4222 = vpop.f32.mrf.mxu0
    %v4223 = vadd.f32 %v4182, %v4222
    %v4224 = vpop.f32.mrf.mxu0
    %v4225 = vpop.f32.mrf.mxu0
    %4226 = vdwg.mxu0
    %4227 = vmatprep.subr.bf16.mxu0 %v3131
    %4228 = vmatpush1.bf16.msra.mxu0 %v3130
    %4229 = vmatprep.subr.bf16.mxu0 %v3127
    %4230 = vmatpush1.bf16.msra.mxu0 %v3126
    %4231 = vmatprep.subr.bf16.mxu0 %v3123
    %4232 = vmatpush1.bf16.msra.mxu0 %v3122
    %4233 = vmatprep.subr.bf16.mxu0 %v3119
    %4234 = vmatpush1.bf16.msra.mxu0 %v3118
    %4235 = vmatprep.subr.bf16.mxu0 %v3115
    %4236 = vmatpush1.bf16.msra.mxu0 %v3114
    %4237 = vmatprep.subr.bf16.mxu0 %v3111
    %4238 = vmatpush1.bf16.msra.mxu0 %v3110
    %4239 = vmatprep.subr.bf16.mxu0 %v3107
    %4240 = vmatpush1.bf16.msra.mxu0 %v3106
    %4241 = vmatprep.subr.bf16.mxu0 %v3103
    %4242 = vmatpush1.bf16.msra.mxu0 %v3102
    %4243 = vmatprep.subr.bf16.mxu0 0
    %4244 = vmatpush2.bf16.msra.mxu0 0
    %4245 = vmatprep.subr.bf16.mxu0 0
    %4246 = vmatpush2.bf16.msra.mxu0 0
    %4247 = vmatprep.subr.bf16.mxu0 0
    %4248 = vmatpush2.bf16.msra.mxu0 0
    %4249 = vmatprep.subr.bf16.mxu0 0
    %4250 = vmatpush2.bf16.msra.mxu0 0
    %4251 = vmatprep.subr.bf16.mxu0 0
    %4252 = vmatpush2.bf16.msra.mxu0 0
    %4253 = vmatprep.subr.bf16.mxu0 0
    %4254 = vmatpush2.bf16.msra.mxu0 0
    %4255 = vmatprep.subr.bf16.mxu0 0
    %4256 = vmatpush2.bf16.msra.mxu0 0
    %4257 = vmatprep.subr.bf16.mxu0 0
    %4258 = vmatpush2.bf16.msra.mxu0 0
    %4259 = vmatprep.mubr.bf16.mxu0 0
    %4260 = vmatmul.mubr.bf16.gmra.mxu0 %v709
    %v4261 = vpop.f32.mrf.mxu0
    %v4262 = vadd.f32 %v4221, %v4261
    %v4263 = vpop.f32.mrf.mxu0
    %v4264 = vadd.f32 %v4223, %v4263
    %v4265 = vpop.f32.mrf.mxu0
    %v4266 = vpop.f32.mrf.mxu0
    %4267 = vdwg.mxu0
    %v4268 = vmax.f32 %v3934, 0.0
    %v4269 = vmax.f32 %v3936, 0.0
    %v4270 = vmax.f32 %v4262, 0.0
    %v4271 = vmax.f32 %v4264, 0.0
    %v4272 = vpack.c.bf16 %v4268, %v4268
    %v4273 = vpack.c.bf16 %v4269, %v4269
    %v4274 = vpack.c.bf16 %v4270, %v4270
    %v4275 = vpack.c.bf16 %v4271, %v4271
    %v4276 = vld [vmem:[#allocation10] sm:$0xff]
    %v4277 = vld [vmem:[#allocation10 + $0x8] sm:$0xff]
    %v4278 = vld [vmem:[#allocation10 + $0x10] sm:$0xff]
    %v4279 = vld [vmem:[#allocation10 + $0x18] sm:$0xff]
    %v4280 = vld [vmem:[#allocation10 + $0x20] sm:$0xff]
    %v4281 = vld [vmem:[#allocation10 + $0x28] sm:$0xff]
    %v4282 = vld [vmem:[#allocation10 + $0x30] sm:$0xff]
    %v4283 = vld [vmem:[#allocation10 + $0x38] sm:$0xff]
    %v4284 = vld [vmem:[#allocation10 + $0x40] sm:$0xff]
    %v4285 = vld [vmem:[#allocation10 + $0x48] sm:$0xff]
    %v4286 = vld [vmem:[#allocation10 + $0x50] sm:$0xff]
    %v4287 = vld [vmem:[#allocation10 + $0x58] sm:$0xff]
    %v4288 = vld [vmem:[#allocation10 + $0x60] sm:$0xff]
    %v4289 = vld [vmem:[#allocation10 + $0x68] sm:$0xff]
    %v4290 = vld [vmem:[#allocation10 + $0x70] sm:$0xff]
    %v4291 = vld [vmem:[#allocation10 + $0x78] sm:$0xff]
    %v4292 = vld [vmem:[#allocation10 + $0x80] sm:$0xff]
    %v4293 = vld [vmem:[#allocation10 + $0x88] sm:$0xff]
    %v4294 = vld [vmem:[#allocation10 + $0x90] sm:$0xff]
    %v4295 = vld [vmem:[#allocation10 + $0x98] sm:$0xff]
    %v4296 = vld [vmem:[#allocation10 + $0xa0] sm:$0xff]
    %v4297 = vld [vmem:[#allocation10 + $0xa8] sm:$0xff]
    %v4298 = vld [vmem:[#allocation10 + $0xb0] sm:$0xff]
    %v4299 = vld [vmem:[#allocation10 + $0xb8] sm:$0xff]
    %v4300 = vld [vmem:[#allocation10 + $0xc0] sm:$0xff]
    %v4301 = vld [vmem:[#allocation10 + $0xc8] sm:$0xff]
    %v4302 = vld [vmem:[#allocation10 + $0xd0] sm:$0xff]
    %v4303 = vld [vmem:[#allocation10 + $0xd8] sm:$0xff]
    %v4304 = vld [vmem:[#allocation10 + $0xe0] sm:$0xff]
    %v4305 = vld [vmem:[#allocation10 + $0xe8] sm:$0xff]
    %v4306 = vld [vmem:[#allocation10 + $0xf0] sm:$0xff]
    %v4307 = vld [vmem:[#allocation10 + $0xf8] sm:$0xff]
    %v4308 = vld [vmem:[#allocation10 + $0x100] sm:$0xff]
    %v4309 = vld [vmem:[#allocation10 + $0x108] sm:$0xff]
    %v4310 = vld [vmem:[#allocation10 + $0x110] sm:$0xff]
    %v4311 = vld [vmem:[#allocation10 + $0x118] sm:$0xff]
    %v4312 = vld [vmem:[#allocation10 + $0x120] sm:$0xff]
    %v4313 = vld [vmem:[#allocation10 + $0x128] sm:$0xff]
    %v4314 = vld [vmem:[#allocation10 + $0x130] sm:$0xff]
    %v4315 = vld [vmem:[#allocation10 + $0x138] sm:$0xff]
    %v4316 = vld [vmem:[#allocation10 + $0x140] sm:$0xff]
    %v4317 = vld [vmem:[#allocation10 + $0x148] sm:$0xff]
    %v4318 = vld [vmem:[#allocation10 + $0x150] sm:$0xff]
    %v4319 = vld [vmem:[#allocation10 + $0x158] sm:$0xff]
    %v4320 = vld [vmem:[#allocation10 + $0x160] sm:$0xff]
    %v4321 = vld [vmem:[#allocation10 + $0x168] sm:$0xff]
    %v4322 = vld [vmem:[#allocation10 + $0x170] sm:$0xff]
    %v4323 = vld [vmem:[#allocation10 + $0x178] sm:$0xff]
    %v4324 = vld [vmem:[#allocation10 + $0x180] sm:$0xff]
    %v4325 = vld [vmem:[#allocation10 + $0x188] sm:$0xff]
    %v4326 = vld [vmem:[#allocation10 + $0x190] sm:$0xff]
    %v4327 = vld [vmem:[#allocation10 + $0x198] sm:$0xff]
    %v4328 = vld [vmem:[#allocation10 + $0x1a0] sm:$0xff]
    %v4329 = vld [vmem:[#allocation10 + $0x1a8] sm:$0xff]
    %v4330 = vld [vmem:[#allocation10 + $0x1b0] sm:$0xff]
    %v4331 = vld [vmem:[#allocation10 + $0x1b8] sm:$0xff]
    %v4332 = vld [vmem:[#allocation10 + $0x1c0] sm:$0xff]
    %v4333 = vld [vmem:[#allocation10 + $0x1c8] sm:$0xff]
    %v4334 = vld [vmem:[#allocation10 + $0x1d0] sm:$0xff]
    %v4335 = vld [vmem:[#allocation10 + $0x1d8] sm:$0xff]
    %v4336 = vld [vmem:[#allocation10 + $0x1e0] sm:$0xff]
    %v4337 = vld [vmem:[#allocation10 + $0x1e8] sm:$0xff]
    %v4338 = vld [vmem:[#allocation10 + $0x1f0] sm:$0xff]
    %v4339 = vld [vmem:[#allocation10 + $0x1f8] sm:$0xff]
    %v4340 = vld [vmem:[#allocation11] sm:$0x3]
    %v4342 = vlaneseq
    %v4343 = vshrl.u32 %v4342, 7
    %v4344 = vsub.s32 0, %v4343
    %v4345 = vrot.slane %v4340, %v4344
    %v4346 = vlaneseq
    %v4347 = vshrl.u32 %v4346, 7
    %v4348 = vsub.s32 1, %v4347
    %v4349 = vrot.slane %v4340, %v4348
    %v4416 = vunpack.c.l.b16 %v4276
    %v4417 = vunpack.c.h.b16 %v4276
    %v4418 = vunpack.c.l.b16 %v4277
    %v4419 = vunpack.c.h.b16 %v4277
    %v4420 = vunpack.c.l.b16 %v4278
    %v4421 = vunpack.c.h.b16 %v4278
    %v4422 = vunpack.c.l.b16 %v4279
    %v4423 = vunpack.c.h.b16 %v4279
    %v4424 = vunpack.c.l.b16 %v4280
    %v4425 = vunpack.c.h.b16 %v4280
    %v4426 = vunpack.c.l.b16 %v4281
    %v4427 = vunpack.c.h.b16 %v4281
    %v4428 = vunpack.c.l.b16 %v4282
    %v4429 = vunpack.c.h.b16 %v4282
    %v4430 = vunpack.c.l.b16 %v4283
    %v4431 = vunpack.c.h.b16 %v4283
    %v4432 = vunpack.c.l.b16 %v4284
    %v4433 = vunpack.c.h.b16 %v4284
    %v4434 = vunpack.c.l.b16 %v4285
    %v4435 = vunpack.c.h.b16 %v4285
    %v4436 = vunpack.c.l.b16 %v4286
    %v4437 = vunpack.c.h.b16 %v4286
    %v4438 = vunpack.c.l.b16 %v4287
    %v4439 = vunpack.c.h.b16 %v4287
    %v4440 = vunpack.c.l.b16 %v4288
    %v4441 = vunpack.c.h.b16 %v4288
    %v4442 = vunpack.c.l.b16 %v4289
    %v4443 = vunpack.c.h.b16 %v4289
    %v4444 = vunpack.c.l.b16 %v4290
    %v4445 = vunpack.c.h.b16 %v4290
    %v4446 = vunpack.c.l.b16 %v4291
    %v4447 = vunpack.c.h.b16 %v4291
    %v4448 = vunpack.c.l.b16 %v4292
    %v4449 = vunpack.c.h.b16 %v4292
    %v4450 = vunpack.c.l.b16 %v4293
    %v4451 = vunpack.c.h.b16 %v4293
    %v4452 = vunpack.c.l.b16 %v4294
    %v4453 = vunpack.c.h.b16 %v4294
    %v4454 = vunpack.c.l.b16 %v4295
    %v4455 = vunpack.c.h.b16 %v4295
    %v4456 = vunpack.c.l.b16 %v4296
    %v4457 = vunpack.c.h.b16 %v4296
    %v4458 = vunpack.c.l.b16 %v4297
    %v4459 = vunpack.c.h.b16 %v4297
    %v4460 = vunpack.c.l.b16 %v4298
    %v4461 = vunpack.c.h.b16 %v4298
    %v4462 = vunpack.c.l.b16 %v4299
    %v4463 = vunpack.c.h.b16 %v4299
    %v4464 = vunpack.c.l.b16 %v4300
    %v4465 = vunpack.c.h.b16 %v4300
    %v4466 = vunpack.c.l.b16 %v4301
    %v4467 = vunpack.c.h.b16 %v4301
    %v4468 = vunpack.c.l.b16 %v4302
    %v4469 = vunpack.c.h.b16 %v4302
    %v4470 = vunpack.c.l.b16 %v4303
    %v4471 = vunpack.c.h.b16 %v4303
    %v4472 = vunpack.c.l.b16 %v4304
    %v4473 = vunpack.c.h.b16 %v4304
    %v4474 = vunpack.c.l.b16 %v4305
    %v4475 = vunpack.c.h.b16 %v4305
    %v4476 = vunpack.c.l.b16 %v4306
    %v4477 = vunpack.c.h.b16 %v4306
    %v4478 = vunpack.c.l.b16 %v4307
    %v4479 = vunpack.c.h.b16 %v4307
    %v4480 = vunpack.c.l.b16 %v4308
    %v4481 = vunpack.c.h.b16 %v4308
    %v4482 = vunpack.c.l.b16 %v4309
    %v4483 = vunpack.c.h.b16 %v4309
    %v4484 = vunpack.c.l.b16 %v4310
    %v4485 = vunpack.c.h.b16 %v4310
    %v4486 = vunpack.c.l.b16 %v4311
    %v4487 = vunpack.c.h.b16 %v4311
    %v4488 = vunpack.c.l.b16 %v4312
    %v4489 = vunpack.c.h.b16 %v4312
    %v4490 = vunpack.c.l.b16 %v4313
    %v4491 = vunpack.c.h.b16 %v4313
    %v4492 = vunpack.c.l.b16 %v4314
    %v4493 = vunpack.c.h.b16 %v4314
    %v4494 = vunpack.c.l.b16 %v4315
    %v4495 = vunpack.c.h.b16 %v4315
    %v4496 = vunpack.c.l.b16 %v4316
    %v4497 = vunpack.c.h.b16 %v4316
    %v4498 = vunpack.c.l.b16 %v4317
    %v4499 = vunpack.c.h.b16 %v4317
    %v4500 = vunpack.c.l.b16 %v4318
    %v4501 = vunpack.c.h.b16 %v4318
    %v4502 = vunpack.c.l.b16 %v4319
    %v4503 = vunpack.c.h.b16 %v4319
    %v4504 = vunpack.c.l.b16 %v4320
    %v4505 = vunpack.c.h.b16 %v4320
    %v4506 = vunpack.c.l.b16 %v4321
    %v4507 = vunpack.c.h.b16 %v4321
    %v4508 = vunpack.c.l.b16 %v4322
    %v4509 = vunpack.c.h.b16 %v4322
    %v4510 = vunpack.c.l.b16 %v4323
    %v4511 = vunpack.c.h.b16 %v4323
    %v4512 = vunpack.c.l.b16 %v4324
    %v4513 = vunpack.c.h.b16 %v4324
    %v4514 = vunpack.c.l.b16 %v4325
    %v4515 = vunpack.c.h.b16 %v4325
    %v4516 = vunpack.c.l.b16 %v4326
    %v4517 = vunpack.c.h.b16 %v4326
    %v4518 = vunpack.c.l.b16 %v4327
    %v4519 = vunpack.c.h.b16 %v4327
    %v4520 = vunpack.c.l.b16 %v4328
    %v4521 = vunpack.c.h.b16 %v4328
    %v4522 = vunpack.c.l.b16 %v4329
    %v4523 = vunpack.c.h.b16 %v4329
    %v4524 = vunpack.c.l.b16 %v4330
    %v4525 = vunpack.c.h.b16 %v4330
    %v4526 = vunpack.c.l.b16 %v4331
    %v4527 = vunpack.c.h.b16 %v4331
    %v4528 = vunpack.c.l.b16 %v4332
    %v4529 = vunpack.c.h.b16 %v4332
    %v4530 = vunpack.c.l.b16 %v4333
    %v4531 = vunpack.c.h.b16 %v4333
    %v4532 = vunpack.c.l.b16 %v4334
    %v4533 = vunpack.c.h.b16 %v4334
    %v4534 = vunpack.c.l.b16 %v4335
    %v4535 = vunpack.c.h.b16 %v4335
    %v4536 = vunpack.c.l.b16 %v4336
    %v4537 = vunpack.c.h.b16 %v4336
    %v4538 = vunpack.c.l.b16 %v4337
    %v4539 = vunpack.c.h.b16 %v4337
    %v4540 = vunpack.c.l.b16 %v4338
    %v4541 = vunpack.c.h.b16 %v4338
    %v4542 = vunpack.c.l.b16 %v4339
    %v4543 = vunpack.c.h.b16 %v4339
    %v4544 = vpack.c.b16 %v4418, %v4416
    %v4545 = vpack.c.b16 %v4419, %v4417
    %v4546 = vpack.c.b16 %v4422, %v4420
    %v4547 = vpack.c.b16 %v4423, %v4421
    %v4548 = vpack.c.b16 %v4426, %v4424
    %v4549 = vpack.c.b16 %v4427, %v4425
    %v4550 = vpack.c.b16 %v4430, %v4428
    %v4551 = vpack.c.b16 %v4431, %v4429
    %v4552 = vpack.c.b16 %v4434, %v4432
    %v4553 = vpack.c.b16 %v4435, %v4433
    %v4554 = vpack.c.b16 %v4438, %v4436
    %v4555 = vpack.c.b16 %v4439, %v4437
    %v4556 = vpack.c.b16 %v4442, %v4440
    %v4557 = vpack.c.b16 %v4443, %v4441
    %v4558 = vpack.c.b16 %v4446, %v4444
    %v4559 = vpack.c.b16 %v4447, %v4445
    %v4560 = vpack.c.b16 %v4450, %v4448
    %v4561 = vpack.c.b16 %v4451, %v4449
    %v4562 = vpack.c.b16 %v4454, %v4452
    %v4563 = vpack.c.b16 %v4455, %v4453
    %v4564 = vpack.c.b16 %v4458, %v4456
    %v4565 = vpack.c.b16 %v4459, %v4457
    %v4566 = vpack.c.b16 %v4462, %v4460
    %v4567 = vpack.c.b16 %v4463, %v4461
    %v4568 = vpack.c.b16 %v4466, %v4464
    %v4569 = vpack.c.b16 %v4467, %v4465
    %v4570 = vpack.c.b16 %v4470, %v4468
    %v4571 = vpack.c.b16 %v4471, %v4469
    %v4572 = vpack.c.b16 %v4474, %v4472
    %v4573 = vpack.c.b16 %v4475, %v4473
    %v4574 = vpack.c.b16 %v4478, %v4476
    %v4575 = vpack.c.b16 %v4479, %v4477
    %v4576 = vpack.c.b16 %v4482, %v4480
    %v4577 = vpack.c.b16 %v4483, %v4481
    %v4578 = vpack.c.b16 %v4486, %v4484
    %v4579 = vpack.c.b16 %v4487, %v4485
    %v4580 = vpack.c.b16 %v4490, %v4488
    %v4581 = vpack.c.b16 %v4491, %v4489
    %v4582 = vpack.c.b16 %v4494, %v4492
    %v4583 = vpack.c.b16 %v4495, %v4493
    %v4584 = vpack.c.b16 %v4498, %v4496
    %v4585 = vpack.c.b16 %v4499, %v4497
    %v4586 = vpack.c.b16 %v4502, %v4500
    %v4587 = vpack.c.b16 %v4503, %v4501
    %v4588 = vpack.c.b16 %v4506, %v4504
    %v4589 = vpack.c.b16 %v4507, %v4505
    %v4590 = vpack.c.b16 %v4510, %v4508
    %v4591 = vpack.c.b16 %v4511, %v4509
    %v4592 = vpack.c.b16 %v4514, %v4512
    %v4593 = vpack.c.b16 %v4515, %v4513
    %v4594 = vpack.c.b16 %v4518, %v4516
    %v4595 = vpack.c.b16 %v4519, %v4517
    %v4596 = vpack.c.b16 %v4522, %v4520
    %v4597 = vpack.c.b16 %v4523, %v4521
    %v4598 = vpack.c.b16 %v4526, %v4524
    %v4599 = vpack.c.b16 %v4527, %v4525
    %v4600 = vpack.c.b16 %v4530, %v4528
    %v4601 = vpack.c.b16 %v4531, %v4529
    %v4602 = vpack.c.b16 %v4534, %v4532
    %v4603 = vpack.c.b16 %v4535, %v4533
    %v4604 = vpack.c.b16 %v4538, %v4536
    %v4605 = vpack.c.b16 %v4539, %v4537
    %v4606 = vpack.c.b16 %v4542, %v4540
    %v4607 = vpack.c.b16 %v4543, %v4541
    %4672 = vmatprep.subr.bf16.mxu0 %v4559
    %4673 = vmatpush1.bf16.msra.mxu0 %v4558
    %4674 = vmatprep.subr.bf16.mxu0 %v4557
    %4675 = vmatpush1.bf16.msra.mxu0 %v4556
    %4676 = vmatprep.subr.bf16.mxu0 %v4555
    %4677 = vmatpush1.bf16.msra.mxu0 %v4554
    %4678 = vmatprep.subr.bf16.mxu0 %v4553
    %4679 = vmatpush1.bf16.msra.mxu0 %v4552
    %4680 = vmatprep.subr.bf16.mxu0 %v4551
    %4681 = vmatpush1.bf16.msra.mxu0 %v4550
    %4682 = vmatprep.subr.bf16.mxu0 %v4549
    %4683 = vmatpush1.bf16.msra.mxu0 %v4548
    %4684 = vmatprep.subr.bf16.mxu0 %v4547
    %4685 = vmatpush1.bf16.msra.mxu0 %v4546
    %4686 = vmatprep.subr.bf16.mxu0 %v4545
    %4687 = vmatpush1.bf16.msra.mxu0 %v4544
    %4688 = vmatprep.subr.bf16.mxu0 %v4575
    %4689 = vmatpush2.bf16.msra.mxu0 %v4574
    %4690 = vmatprep.subr.bf16.mxu0 %v4573
    %4691 = vmatpush2.bf16.msra.mxu0 %v4572
    %4692 = vmatprep.subr.bf16.mxu0 %v4571
    %4693 = vmatpush2.bf16.msra.mxu0 %v4570
    %4694 = vmatprep.subr.bf16.mxu0 %v4569
    %4695 = vmatpush2.bf16.msra.mxu0 %v4568
    %4696 = vmatprep.subr.bf16.mxu0 %v4567
    %4697 = vmatpush2.bf16.msra.mxu0 %v4566
    %4698 = vmatprep.subr.bf16.mxu0 %v4565
    %4699 = vmatpush2.bf16.msra.mxu0 %v4564
    %4700 = vmatprep.subr.bf16.mxu0 %v4563
    %4701 = vmatpush2.bf16.msra.mxu0 %v4562
    %4702 = vmatprep.subr.bf16.mxu0 %v4561
    %4703 = vmatpush2.bf16.msra.mxu0 %v4560
    %4704 = vmatprep.mubr.bf16.mxu0 %v4273
    %4705 = vmatmul.mubr.bf16.gmra.mxu0 %v4272
    %v4706 = vpop.f32.mrf.mxu0
    %v4707 = vadd.f32 %v4345, %v4706
    %v4708 = vpop.f32.mrf.mxu0
    %v4709 = vadd.f32 %v4349, %v4708
    %v4710 = vpop.f32.mrf.mxu0
    %v4711 = vpop.f32.mrf.mxu0
    %4712 = vdwg.mxu0
    %4713 = vmatprep.subr.bf16.mxu0 %v4591
    %4714 = vmatpush1.bf16.msra.mxu0 %v4590
    %4715 = vmatprep.subr.bf16.mxu0 %v4589
    %4716 = vmatpush1.bf16.msra.mxu0 %v4588
    %4717 = vmatprep.subr.bf16.mxu0 %v4587
    %4718 = vmatpush1.bf16.msra.mxu0 %v4586
    %4719 = vmatprep.subr.bf16.mxu0 %v4585
    %4720 = vmatpush1.bf16.msra.mxu0 %v4584
    %4721 = vmatprep.subr.bf16.mxu0 %v4583
    %4722 = vmatpush1.bf16.msra.mxu0 %v4582
    %4723 = vmatprep.subr.bf16.mxu0 %v4581
    %4724 = vmatpush1.bf16.msra.mxu0 %v4580
    %4725 = vmatprep.subr.bf16.mxu0 %v4579
    %4726 = vmatpush1.bf16.msra.mxu0 %v4578
    %4727 = vmatprep.subr.bf16.mxu0 %v4577
    %4728 = vmatpush1.bf16.msra.mxu0 %v4576
    %4729 = vmatprep.subr.bf16.mxu0 %v4607
    %4730 = vmatpush2.bf16.msra.mxu0 %v4606
    %4731 = vmatprep.subr.bf16.mxu0 %v4605
    %4732 = vmatpush2.bf16.msra.mxu0 %v4604
    %4733 = vmatprep.subr.bf16.mxu0 %v4603
    %4734 = vmatpush2.bf16.msra.mxu0 %v4602
    %4735 = vmatprep.subr.bf16.mxu0 %v4601
    %4736 = vmatpush2.bf16.msra.mxu0 %v4600
    %4737 = vmatprep.subr.bf16.mxu0 %v4599
    %4738 = vmatpush2.bf16.msra.mxu0 %v4598
    %4739 = vmatprep.subr.bf16.mxu0 %v4597
    %4740 = vmatpush2.bf16.msra.mxu0 %v4596
    %4741 = vmatprep.subr.bf16.mxu0 %v4595
    %4742 = vmatpush2.bf16.msra.mxu0 %v4594
    %4743 = vmatprep.subr.bf16.mxu0 %v4593
    %4744 = vmatpush2.bf16.msra.mxu0 %v4592
    %4745 = vmatprep.mubr.bf16.mxu0 %v4275
    %4746 = vmatmul.mubr.bf16.gmra.mxu0 %v4274
    %v4747 = vpop.f32.mrf.mxu0
    %v4748 = vadd.f32 %v4707, %v4747
    %v4749 = vpop.f32.mrf.mxu0
    %v4750 = vadd.f32 %v4709, %v4749
    %v4751 = vpop.f32.mrf.mxu0
    %v4752 = vpop.f32.mrf.mxu0
    %4753 = vdwg.mxu0
    %v4754 = vmax.f32 %v4748, 0.0
    %v4755 = vmax.f32 %v4750, 0.0
    %v4756 = vpack.c.bf16 %v4754, %v4754
    %v4757 = vpack.c.bf16 %v4755, %v4755
    %v4758 = vld [vmem:[#allocation13] sm:$0xf]
    %v4759 = vld [vmem:[#allocation13 + $0x4] sm:$0xf]
    %v4760 = vld [vmem:[#allocation13 + $0x8] sm:$0xf]
    %v4761 = vld [vmem:[#allocation13 + $0xc] sm:$0xf]
    %v4762 = vld [vmem:[#allocation13 + $0x10] sm:$0xf]
    %v4763 = vld [vmem:[#allocation13 + $0x14] sm:$0xf]
    %v4764 = vld [vmem:[#allocation13 + $0x18] sm:$0xf]
    %v4765 = vld [vmem:[#allocation13 + $0x1c] sm:$0xf]
    %v4766 = vld [vmem:[#allocation13 + $0x20] sm:$0xf]
    %v4767 = vld [vmem:[#allocation13 + $0x24] sm:$0xf]
    %v4768 = vld [vmem:[#allocation13 + $0x28] sm:$0xf]
    %v4769 = vld [vmem:[#allocation13 + $0x2c] sm:$0xf]
    %v4770 = vld [vmem:[#allocation13 + $0x30] sm:$0xf]
    %v4771 = vld [vmem:[#allocation13 + $0x34] sm:$0xf]
    %v4772 = vld [vmem:[#allocation13 + $0x38] sm:$0xf]
    %v4773 = vld [vmem:[#allocation13 + $0x3c] sm:$0xf]
    %v4774 = vld [vmem:[#allocation13 + $0x40] sm:$0xf]
    %v4775 = vld [vmem:[#allocation13 + $0x44] sm:$0xf]
    %v4776 = vld [vmem:[#allocation13 + $0x48] sm:$0xf]
    %v4777 = vld [vmem:[#allocation13 + $0x4c] sm:$0xf]
    %v4778 = vld [vmem:[#allocation13 + $0x50] sm:$0xf]
    %v4779 = vld [vmem:[#allocation13 + $0x54] sm:$0xf]
    %v4780 = vld [vmem:[#allocation13 + $0x58] sm:$0xf]
    %v4781 = vld [vmem:[#allocation13 + $0x5c] sm:$0xf]
    %v4782 = vld [vmem:[#allocation13 + $0x60] sm:$0xf]
    %v4783 = vld [vmem:[#allocation13 + $0x64] sm:$0xf]
    %v4784 = vld [vmem:[#allocation13 + $0x68] sm:$0xf]
    %v4785 = vld [vmem:[#allocation13 + $0x6c] sm:$0xf]
    %v4786 = vld [vmem:[#allocation13 + $0x70] sm:$0xf]
    %v4787 = vld [vmem:[#allocation13 + $0x74] sm:$0xf]
    %v4788 = vld [vmem:[#allocation13 + $0x78] sm:$0xf]
    %v4789 = vld [vmem:[#allocation13 + $0x7c] sm:$0xf]
    %v4790 = vld [vmem:[#allocation14] sm:$0x1]
    %v4792 = vlaneseq
    %v4793 = vshrl.u32 %v4792, 7
    %v4794 = vsub.s32 0, %v4793
    %v4795 = vrot.slane %v4790, %v4794
    %v4829 = vunpack.c.l.b16 %v4758
    %v4830 = vunpack.c.l.b16 %v4759
    %v4831 = vunpack.c.l.b16 %v4760
    %v4832 = vunpack.c.l.b16 %v4761
    %v4833 = vunpack.c.l.b16 %v4762
    %v4834 = vunpack.c.l.b16 %v4763
    %v4835 = vunpack.c.l.b16 %v4764
    %v4836 = vunpack.c.l.b16 %v4765
    %v4837 = vunpack.c.l.b16 %v4766
    %v4838 = vunpack.c.l.b16 %v4767
    %v4839 = vunpack.c.l.b16 %v4768
    %v4840 = vunpack.c.l.b16 %v4769
    %v4841 = vunpack.c.l.b16 %v4770
    %v4842 = vunpack.c.l.b16 %v4771
    %v4843 = vunpack.c.l.b16 %v4772
    %v4844 = vunpack.c.l.b16 %v4773
    %v4845 = vunpack.c.l.b16 %v4774
    %v4846 = vunpack.c.l.b16 %v4775
    %v4847 = vunpack.c.l.b16 %v4776
    %v4848 = vunpack.c.l.b16 %v4777
    %v4849 = vunpack.c.l.b16 %v4778
    %v4850 = vunpack.c.l.b16 %v4779
    %v4851 = vunpack.c.l.b16 %v4780
    %v4852 = vunpack.c.l.b16 %v4781
    %v4853 = vunpack.c.l.b16 %v4782
    %v4854 = vunpack.c.l.b16 %v4783
    %v4855 = vunpack.c.l.b16 %v4784
    %v4856 = vunpack.c.l.b16 %v4785
    %v4857 = vunpack.c.l.b16 %v4786
    %v4858 = vunpack.c.l.b16 %v4787
    %v4859 = vunpack.c.l.b16 %v4788
    %v4860 = vunpack.c.l.b16 %v4789
    %v4861 = vpack.c.b16 %v4830, %v4829
    %v4862 = vpack.c.b16 %v4832, %v4831
    %v4863 = vpack.c.b16 %v4834, %v4833
    %v4864 = vpack.c.b16 %v4836, %v4835
    %v4865 = vpack.c.b16 %v4838, %v4837
    %v4866 = vpack.c.b16 %v4840, %v4839
    %v4867 = vpack.c.b16 %v4842, %v4841
    %v4868 = vpack.c.b16 %v4844, %v4843
    %v4869 = vpack.c.b16 %v4846, %v4845
    %v4870 = vpack.c.b16 %v4848, %v4847
    %v4871 = vpack.c.b16 %v4850, %v4849
    %v4872 = vpack.c.b16 %v4852, %v4851
    %v4873 = vpack.c.b16 %v4854, %v4853
    %v4874 = vpack.c.b16 %v4856, %v4855
    %v4875 = vpack.c.b16 %v4858, %v4857
    %v4876 = vpack.c.b16 %v4860, %v4859
    %4893 = vmatprep.subr.bf16.mxu0 0
    %4894 = vmatpush1.bf16.msra.mxu0 %v4868
    %4895 = vmatprep.subr.bf16.mxu0 0
    %4896 = vmatpush1.bf16.msra.mxu0 %v4867
    %4897 = vmatprep.subr.bf16.mxu0 0
    %4898 = vmatpush1.bf16.msra.mxu0 %v4866
    %4899 = vmatprep.subr.bf16.mxu0 0
    %4900 = vmatpush1.bf16.msra.mxu0 %v4865
    %4901 = vmatprep.subr.bf16.mxu0 0
    %4902 = vmatpush1.bf16.msra.mxu0 %v4864
    %4903 = vmatprep.subr.bf16.mxu0 0
    %4904 = vmatpush1.bf16.msra.mxu0 %v4863
    %4905 = vmatprep.subr.bf16.mxu0 0
    %4906 = vmatpush1.bf16.msra.mxu0 %v4862
    %4907 = vmatprep.subr.bf16.mxu0 0
    %4908 = vmatpush1.bf16.msra.mxu0 %v4861
    %4909 = vmatprep.subr.bf16.mxu0 0
    %4910 = vmatpush2.bf16.msra.mxu0 %v4876
    %4911 = vmatprep.subr.bf16.mxu0 0
    %4912 = vmatpush2.bf16.msra.mxu0 %v4875
    %4913 = vmatprep.subr.bf16.mxu0 0
    %4914 = vmatpush2.bf16.msra.mxu0 %v4874
    %4915 = vmatprep.subr.bf16.mxu0 0
    %4916 = vmatpush2.bf16.msra.mxu0 %v4873
    %4917 = vmatprep.subr.bf16.mxu0 0
    %4918 = vmatpush2.bf16.msra.mxu0 %v4872
    %4919 = vmatprep.subr.bf16.mxu0 0
    %4920 = vmatpush2.bf16.msra.mxu0 %v4871
    %4921 = vmatprep.subr.bf16.mxu0 0
    %4922 = vmatpush2.bf16.msra.mxu0 %v4870
    %4923 = vmatprep.subr.bf16.mxu0 0
    %4924 = vmatpush2.bf16.msra.mxu0 %v4869
    %4925 = vmatprep.mubr.bf16.mxu0 %v4757
    %4926 = vmatmul.mubr.bf16.gmra.mxu0 %v4756
    %v4927 = vpop.f32.mrf.mxu0
    %v4928 = vadd.f32 %v4795, %v4927
    %v4929 = vpop.f32.mrf.mxu0
    %v4930 = vpop.f32.mrf.mxu0
    %v4931 = vpop.f32.mrf.mxu0
    %4932 = vdwg.mxu0
    %4933 = vst [vmem:[#allocation16] sm:$0x3] %v4928
    // Predicated region
    $region66: #{tpu_custom_call.1} parent=1 // pred_check
      _
    $region67: #{tpu_custom_call.1} parent=1 // pred_check_branch
      %4935 = sbr.rel (0) target = $region69
    $region68: #{tpu_custom_call.1} parent=1 // pred_region
      %s4937 = ssub.s32 32, 32
      %4938 = vsyncadd [#allocation4], %s4937
      %s4940 = sshll.u32 [#allocation16], 4
      %s4941 = int_to_ptr.vmem [resolvable:$true] %s4940
      %4943 = dma.vmem_to_hbm [thread:$0]  %s4941, 32, %s8, [#allocation4]
    $region69: #{tpu_custom_call.1} parent=1 // pred_fallthru
      _
    // Predicated region
    $region70: #{tpu_custom_call.1} parent=1 // pred_check
      _
    $region71: #{tpu_custom_call.1} parent=1 // pred_check_branch
      %4945 = sbr.rel (0) target = $region73
    $region72: #{tpu_custom_call.1} parent=1 // pred_region
      %4946 = dma.done [#allocation4], 32
    $region73: #{tpu_custom_call.1} parent=1 // pred_fallthru
      _
    %4947 = vsyncpa [#allocation3], 1
    %4948 = vsyncpa [#allocation6], 1
    %4949 = vsyncpa [#allocation9], 1
    %4950 = vsyncpa [#allocation12], 1
    %4951 = vsyncpa [#allocation15], 1
    %4952 = vsyncpa [#allocation4], 1

</llo_original>
